<compile_context>
chip_gen: v7x
topology: tpu7x:2x2x1
jax: 0.10.0
libtpu: 0.0.40
codegen_flags: <defaults>
</compile_context>

<pallas_src>
import functools

import numpy as np
import jax
import jax.numpy as jnp
from jax import lax
from jax.experimental import pallas as pl
from jax.experimental.pallas import tpu as pltpu  # noqa: F401  (no TPU-specific params needed for a single-block launch)

_NT = (((1,), (1,)), ((), ()))  # contract the last dim of both operands (A @ B^T)


# ----------------------------------------------------------------------------
# Fused Pallas kernel: conv1 -> conv2 -> cdist -> similarity -> pooling ->
# last layer -> bilinear upsample.  Single block, no grid.
# ----------------------------------------------------------------------------
def _ppnet_fused_kernel(xcols_ref, w1blk_ref, b1_ref, w2blk_ref, b2_ref,
                        sel2_ref, pneg2_ref, onesb_ref, p2_ref, wlastT_ref,
                        interp_ref,
                        mind_ref, logits_ref, ups_ref,
                        *, epsilon, conv1_w):
    f32 = jnp.float32
    n_taps = w1blk_ref.shape[0]          # 9
    L1 = sel2_ref.shape[2]               # conv1 spatial positions (H*W)

    # ---- conv1: 3x3 / stride 1 / pad 1 / ReLU -------------------------------
    # xcols[j] is the padded input, pre-shifted along W by j and flattened to
    # ((H+2)*W, B*Cin); tap (i, j) is then a *contiguous, sublane-aligned* row
    # window -> no in-kernel im2col, strided access, or risky reshapes.
    xj = [xcols_ref[j] for j in range(3)]
    f1 = None
    for i in range(3):
        for j in range(3):
            a = xj[j][i * conv1_w:i * conv1_w + L1, :]            # (L1, B*Cin)
            c = jnp.dot(a, w1blk_ref[i * 3 + j], preferred_element_type=f32)
            f1 = c if f1 is None else f1 + c
    f1 = jnp.maximum(f1 + b1_ref[...], 0.0)                       # (L1, B*C1)

    # ---- conv2: 3x3 / stride 2 / pad 1 / ReLU -------------------------------
    # im2col + stride + zero-padding folded into per-tap 0/1 gather matrices
    # that run on the MXU.  bf16 operands (exact for 0/1 weights) halve the
    # only non-trivial DMA of the launch.
    f1b = f1.astype(jnp.bfloat16)
    f2 = None
    for t in range(n_taps):
        pt = jnp.dot(sel2_ref[t], f1b, preferred_element_type=f32)  # (L2, B*C1)
        c = jnp.dot(pt, w2blk_ref[t], preferred_element_type=f32)   # (L2, B*Cp)
        f2 = c if f2 is None else f2 + c
    f2 = jnp.maximum(f2 + b2_ref[...], 0.0)                       # (L2, B*Cp)

    # ---- L2 prototype distances (torch.cdist semantics), all in f32 ---------
    # d2[(b,p), l] = |proto_p|^2 - 2<proto_p, f2_bl> + |f2_bl|^2.  Block-
    # diagonal lhs operands handle every batch element in one NT dot each.
    f2sq = f2 * f2
    xp = lax.dot_general(pneg2_ref[...], f2, _NT, preferred_element_type=f32)
    x2 = lax.dot_general(onesb_ref[...], f2sq, _NT, preferred_element_type=f32)
    d = jnp.sqrt(jnp.maximum(xp + x2 + p2_ref[...], 0.0))         # (B*P, L2)

    # ---- topk_k == 1: min distance; activation of the min (log is monotone) -
    mind_col = jnp.min(d, axis=1, keepdims=True)                  # (B*P, 1)
    acts_col = jnp.log(mind_col + 1.0) - jnp.log(mind_col + epsilon)

    # last layer (bias-free) on the VPU/XLU: broadcast-multiply + sublane sum.
    # wlastT already has its class-0 columns zeroed when class_specific=False,
    # which is exactly logits[:, 0] = 0 of the reference forward.
    logits_ref[...] = jnp.sum(acts_col * wlastT_ref[...], axis=0, keepdims=True)

    # lane-dense min-distance row without a (B*P,1)->(1,B*P) relayout:
    bp = mind_col.shape[0]
    eye = (lax.broadcasted_iota(jnp.int32, (bp, bp), 0) ==
           lax.broadcasted_iota(jnp.int32, (bp, bp), 1)).astype(f32)
    mind_ref[...] = jnp.sum(mind_col * eye, axis=0, keepdims=True)

    # ---- similarity map + bilinear upsample as one lane-dense matmul --------
    sim = jnp.log(d + 1.0) - jnp.log(d + epsilon)                 # (B*P, L2)
    ups_ref[...] = jnp.dot(sim.astype(jnp.bfloat16), interp_ref[...],
                           preferred_element_type=f32)            # (B*P, H*W)


# ----------------------------------------------------------------------------
# One-time preparation: block-diagonal weights, gather tables, interp matrix.
# ----------------------------------------------------------------------------
def _bilinear_matrix(in_size, out_size):
    """PyTorch Upsample(mode='bilinear', align_corners=False) 1-D matrix (out, in)."""
    m = np.zeros((out_size, in_size), dtype=np.float32)
    scale = in_size / out_size
    for i in range(out_size):
        src = max((i + 0.5) * scale - 0.5, 0.0)
        i0 = min(int(np.floor(src)), in_size - 1)
        i1 = min(i0 + 1, in_size - 1)
        w1 = src - i0
        m[i, i0] += 1.0 - w1
        m[i, i1] += w1
    return m


def _conv2_gather_tables(h1, w1, h2, w2, stride=2, pad=1):
    """Per-tap 0/1 gather matrices folding the stride-2, zero-padded 3x3 im2col."""
    sel = np.zeros((9, h2 * w2, h1 * w1), dtype=np.float32)
    for i in range(3):
        for j in range(3):
            t = i * 3 + j
            for oh in range(h2):
                for ow in range(w2):
                    ih = stride * oh + i - pad
                    iw = stride * ow + j - pad
                    if 0 <= ih < h1 and 0 <= iw < w1:
                        sel[t, oh * w2 + ow, ih * w1 + iw] = 1.0
    return sel


def prepare_params(params, batch_size, img_size=16, class_specific=False):
    """Build the kernel-side constant operands once (not per forward call)."""
    B = batch_size
    H = W = img_size
    H2, W2 = H // 2, W // 2
    w1, b1 = params["w1"], params["b1"]            # (C1,3,3,3), (C1,)
    w2, b2 = params["w2"], params["b2"]            # (Cp,C1,3,3), (Cp,)
    proto = params["proto2d"]                      # (P, Cp)
    w_last = params["w_last"]                      # (C, P)
    P, Cp = proto.shape
    C = w_last.shape[0]
    eyeB = jnp.eye(B, dtype=jnp.float32)

    # conv weights per tap, block-diagonal over batch: (I_B (x) W_tap)
    w1blk = jnp.stack([jnp.kron(eyeB, w1[:, :, i, j].T)
                       for i in range(3) for j in range(3)])       # (9, B*3, B*C1)
    w2blk = jnp.stack([jnp.kron(eyeB, w2[:, :, i, j].T)
                       for i in range(3) for j in range(3)])       # (9, B*C1, B*Cp)
    b1row = jnp.tile(b1, B)[None, :]                               # (1, B*C1)
    b2row = jnp.tile(b2, B)[None, :]                               # (1, B*Cp)

    # cdist pieces (block-diagonal over batch; stays f32 in the kernel)
    pneg2 = jnp.kron(eyeB, -2.0 * proto)                           # (B*P, B*Cp)
    onesb = jnp.kron(eyeB, jnp.ones((P, Cp), jnp.float32))         # (B*P, B*Cp)
    p2col = jnp.tile(jnp.sum(proto * proto, axis=1), B)[:, None]   # (B*P, 1)

    # last layer: logits[:, 0] = 0 (reference forward, class_specific=False);
    # with a bias-free last layer this equals a zeroed class-0 weight column.
    wlt = w_last.T.astype(jnp.float32)                             # (P, C)
    if not class_specific:
        wlt = wlt * (jnp.arange(C) != 0).astype(jnp.float32)[None, :]
    wlastT = jnp.kron(eyeB, wlt)                                   # (B*P, B*C)

    # static tables (independent of params) -- exact in bf16 (0/1 and dyadic)
    sel2 = jnp.asarray(_conv2_gather_tables(H, W, H2, W2), jnp.bfloat16)
    interp = jnp.asarray(
        np.kron(_bilinear_matrix(H2, H), _bilinear_matrix(W2, W)).T,
        jnp.bfloat16)                                              # (H2*W2, H*W)

    return {"w1blk": w1blk, "b1row": b1row, "w2blk": w2blk, "b2row": b2row,
            "sel2": sel2, "pneg2": pneg2, "onesb": onesb, "p2col": p2col,
            "wlastT": wlastT, "interp": interp}


# ----------------------------------------------------------------------------
# PPNet forward: minimal input-layout glue + ONE pallas_call.
# ----------------------------------------------------------------------------
def ppnet_forward(prep, x, epsilon=1e-4):
    B, _, H, W = x.shape
    P = prep["pneg2"].shape[0] // B
    C = prep["wlastT"].shape[1] // B
    HW = prep["interp"].shape[1]

    # x = x[:, 0:3, :, :]; fold batch into the matmul column (lane) dimension.
    xhw = jnp.transpose(x[:, 0:3, :, :], (2, 3, 0, 1)).reshape(H, W, B * 3)
    xpad = jnp.pad(xhw, ((1, 1), (1, 1), (0, 0)))                  # (H+2, W+2, B*3)
    # Pre-shift along W so every conv1 tap is a contiguous, aligned row window.
    xcols = jnp.stack([xpad[:, j:j + W, :].reshape((H + 2) * W, B * 3)
                       for j in range(3)])                         # (3,(H+2)*W,B*3)

    kern = functools.partial(_ppnet_fused_kernel, epsilon=epsilon, conv1_w=W)
    mind_row, logits_row, ups = pl.pallas_call(
        kern,
        out_shape=(
            jax.ShapeDtypeStruct((1, B * P), jnp.float32),   # min distances (lane-dense)
            jax.ShapeDtypeStruct((1, B * C), jnp.float32),   # logits       (lane-dense)
            jax.ShapeDtypeStruct((B * P, HW), jnp.float32),  # upsampled sim (256 lanes)
        ),
    )(xcols, prep["w1blk"], prep["b1row"], prep["w2blk"], prep["b2row"],
      prep["sel2"], prep["pneg2"], prep["onesb"], prep["p2col"],
      prep["wlastT"], prep["interp"])

    logits = logits_row.reshape(B, C)
    min_distances = mind_row.reshape(B, P)
    upsampled_activation = ups.reshape(B, P, H, W)
    return logits, min_distances, upsampled_activation


# ----------------------------------------------------------------------------
# Deterministic parameter init (same stand-in backbone as before).
# ----------------------------------------------------------------------------
def init_params(key, num_prototypes=6, proto_channels=16, num_classes=3,
                hidden_channels=8):
    k1, k2, k3, _, _ = jax.random.split(key, 5)
    w1 = jax.random.normal(k1, (hidden_channels, 3, 3, 3), jnp.float32) * \
        np.sqrt(2.0 / (hidden_channels * 9))
    b1 = jnp.zeros((hidden_channels,), jnp.float32)
    w2 = jax.random.normal(k2, (proto_channels, hidden_channels, 3, 3),
                           jnp.float32) * np.sqrt(2.0 / (proto_channels * 9))
    b2 = jnp.zeros((proto_channels,), jnp.float32)
    # prototype_vectors = torch.rand(prototype_shape)  (spatial 1x1)
    proto = jax.random.uniform(k3, (num_prototypes, proto_channels, 1, 1),
                               jnp.float32)
    proto2d = proto.reshape(num_prototypes, proto_channels)
    # set_last_layer_incorrect_connection(-2), class_specific=False
    # -> prototype_class_identity[:, 1] = 1 for all prototypes
    ident = np.zeros((num_prototypes, num_classes), dtype=np.float32)
    ident[:, 1] = 1.0
    pos = ident.T                                            # (C, P)
    w_last = jnp.asarray(1.0 * pos + (-2.0) * (1.0 - pos))   # (C, P)
    return {"w1": w1, "b1": b1, "w2": w2, "b2": b2,
            "proto2d": proto2d, "w_last": w_last}


if __name__ == "__main__":
    key = jax.random.PRNGKey(0)
    pkey, xkey = jax.random.split(key)

    # prototype_shape = (6, 16, 1, 1), num_classes = 3, topk_k = 1, img_size = 16
    params = init_params(pkey, num_prototypes=6, proto_channels=16, num_classes=3)
    prep = prepare_params(params, batch_size=2, img_size=16, class_specific=False)

    # input has 4 channels; forward slices to the first 3 (as in the module)
    x = jax.random.normal(xkey, (2, 4, 16, 16), jnp.float32)

    fwd = jax.jit(ppnet_forward)
    logits, min_distances, upsampled_activation = fwd(prep, x)
    jax.block_until_ready((logits, min_distances, upsampled_activation))

    assert logits.shape == (2, 3)
    assert min_distances.shape == (2, 6)
    assert upsampled_activation.shape == (2, 6, 16, 16)
    assert bool(jnp.all(jnp.isfinite(logits)))
    assert bool(jnp.all(logits[:, 0] == 0.0))
    assert bool(jnp.all(min_distances >= 0.0))
    assert bool(jnp.all(jnp.isfinite(upsampled_activation)))
    print("KERNEL_OK")
</pallas_src>

<mosaic_0001>
module attributes {stable_mosaic.version = 11 : i64} {
  func.func @_ppnet_fused_kernel(%arg0: memref<3x288x6xf32, #tpu.memory_space<vmem>>, %arg1: memref<9x6x16xf32, #tpu.memory_space<vmem>>, %arg2: memref<1x16xf32, #tpu.memory_space<vmem>>, %arg3: memref<9x16x32xf32, #tpu.memory_space<vmem>>, %arg4: memref<1x32xf32, #tpu.memory_space<vmem>>, %arg5: memref<9x64x256xbf16, #tpu.memory_space<vmem>>, %arg6: memref<12x32xf32, #tpu.memory_space<vmem>>, %arg7: memref<12x32xf32, #tpu.memory_space<vmem>>, %arg8: memref<12x1xf32, #tpu.memory_space<vmem>>, %arg9: memref<12x6xf32, #tpu.memory_space<vmem>>, %arg10: memref<64x256xbf16, #tpu.memory_space<vmem>>, %arg11: memref<1x12xf32, #tpu.memory_space<vmem>>, %arg12: memref<1x6xf32, #tpu.memory_space<vmem>>, %arg13: memref<12x256xf32, #tpu.memory_space<vmem>>) attributes {dimension_semantics = [], scalar_prefetch = 0 : i64, scratch_operands = 0 : i64, tpu.core_type = #tpu.core_type<tc>} {
    %c0 = arith.constant 0 : index
    %c0_0 = arith.constant 0 : index
    %c0_1 = arith.constant 0 : index
    %0 = vector.load %arg0[%c0, %c0_0, %c0_1] : memref<3x288x6xf32, #tpu.memory_space<vmem>>, vector<1x288x6xf32>
    %1 = vector.shape_cast %0 : vector<1x288x6xf32> to vector<288x6xf32>
    %c1 = arith.constant 1 : index
    %c0_2 = arith.constant 0 : index
    %c0_3 = arith.constant 0 : index
    %2 = vector.load %arg0[%c1, %c0_2, %c0_3] : memref<3x288x6xf32, #tpu.memory_space<vmem>>, vector<1x288x6xf32>
    %3 = vector.shape_cast %2 : vector<1x288x6xf32> to vector<288x6xf32>
    %c2 = arith.constant 2 : index
    %c0_4 = arith.constant 0 : index
    %c0_5 = arith.constant 0 : index
    %4 = vector.load %arg0[%c2, %c0_4, %c0_5] : memref<3x288x6xf32, #tpu.memory_space<vmem>>, vector<1x288x6xf32>
    %5 = vector.shape_cast %4 : vector<1x288x6xf32> to vector<288x6xf32>
    %6 = vector.extract_strided_slice %1 {offsets = [0, 0], sizes = [256, 6], strides = [1, 1]} : vector<288x6xf32> to vector<256x6xf32>
    %c0_6 = arith.constant 0 : index
    %c0_7 = arith.constant 0 : index
    %c0_8 = arith.constant 0 : index
    %7 = vector.load %arg1[%c0_6, %c0_7, %c0_8] : memref<9x6x16xf32, #tpu.memory_space<vmem>>, vector<1x6x16xf32>
    %8 = vector.shape_cast %7 : vector<1x6x16xf32> to vector<6x16xf32>
    %cst = arith.constant dense<0.000000e+00> : vector<256x16xf32>
    %9 = tpu.matmul %6, %8, %cst {dimension_numbers = #tpu.dot_dimension_numbers<[1], [0], [0], [1], [0, 0, 1, 1], [], []>} : vector<256x6xf32>, vector<6x16xf32>, vector<256x16xf32> -> vector<256x16xf32>
    %10 = vector.extract_strided_slice %3 {offsets = [0, 0], sizes = [256, 6], strides = [1, 1]} : vector<288x6xf32> to vector<256x6xf32>
    %c1_9 = arith.constant 1 : index
    %c0_10 = arith.constant 0 : index
    %c0_11 = arith.constant 0 : index
    %11 = vector.load %arg1[%c1_9, %c0_10, %c0_11] : memref<9x6x16xf32, #tpu.memory_space<vmem>>, vector<1x6x16xf32>
    %12 = vector.shape_cast %11 : vector<1x6x16xf32> to vector<6x16xf32>
    %cst_12 = arith.constant dense<0.000000e+00> : vector<256x16xf32>
    %13 = tpu.matmul %10, %12, %cst_12 {dimension_numbers = #tpu.dot_dimension_numbers<[1], [0], [0], [1], [0, 0, 1, 1], [], []>} : vector<256x6xf32>, vector<6x16xf32>, vector<256x16xf32> -> vector<256x16xf32>
    %14 = arith.addf %9, %13 : vector<256x16xf32>
    %15 = vector.extract_strided_slice %5 {offsets = [0, 0], sizes = [256, 6], strides = [1, 1]} : vector<288x6xf32> to vector<256x6xf32>
    %c2_13 = arith.constant 2 : index
    %c0_14 = arith.constant 0 : index
    %c0_15 = arith.constant 0 : index
    %16 = vector.load %arg1[%c2_13, %c0_14, %c0_15] : memref<9x6x16xf32, #tpu.memory_space<vmem>>, vector<1x6x16xf32>
    %17 = vector.shape_cast %16 : vector<1x6x16xf32> to vector<6x16xf32>
    %cst_16 = arith.constant dense<0.000000e+00> : vector<256x16xf32>
    %18 = tpu.matmul %15, %17, %cst_16 {dimension_numbers = #tpu.dot_dimension_numbers<[1], [0], [0], [1], [0, 0, 1, 1], [], []>} : vector<256x6xf32>, vector<6x16xf32>, vector<256x16xf32> -> vector<256x16xf32>
    %19 = arith.addf %14, %18 : vector<256x16xf32>
    %20 = vector.extract_strided_slice %1 {offsets = [16, 0], sizes = [256, 6], strides = [1, 1]} : vector<288x6xf32> to vector<256x6xf32>
    %c3 = arith.constant 3 : index
    %c0_17 = arith.constant 0 : index
    %c0_18 = arith.constant 0 : index
    %21 = vector.load %arg1[%c3, %c0_17, %c0_18] : memref<9x6x16xf32, #tpu.memory_space<vmem>>, vector<1x6x16xf32>
    %22 = vector.shape_cast %21 : vector<1x6x16xf32> to vector<6x16xf32>
    %cst_19 = arith.constant dense<0.000000e+00> : vector<256x16xf32>
    %23 = tpu.matmul %20, %22, %cst_19 {dimension_numbers = #tpu.dot_dimension_numbers<[1], [0], [0], [1], [0, 0, 1, 1], [], []>} : vector<256x6xf32>, vector<6x16xf32>, vector<256x16xf32> -> vector<256x16xf32>
    %24 = arith.addf %19, %23 : vector<256x16xf32>
    %25 = vector.extract_strided_slice %3 {offsets = [16, 0], sizes = [256, 6], strides = [1, 1]} : vector<288x6xf32> to vector<256x6xf32>
    %c4 = arith.constant 4 : index
    %c0_20 = arith.constant 0 : index
    %c0_21 = arith.constant 0 : index
    %26 = vector.load %arg1[%c4, %c0_20, %c0_21] : memref<9x6x16xf32, #tpu.memory_space<vmem>>, vector<1x6x16xf32>
    %27 = vector.shape_cast %26 : vector<1x6x16xf32> to vector<6x16xf32>
    %cst_22 = arith.constant dense<0.000000e+00> : vector<256x16xf32>
    %28 = tpu.matmul %25, %27, %cst_22 {dimension_numbers = #tpu.dot_dimension_numbers<[1], [0], [0], [1], [0, 0, 1, 1], [], []>} : vector<256x6xf32>, vector<6x16xf32>, vector<256x16xf32> -> vector<256x16xf32>
    %29 = arith.addf %24, %28 : vector<256x16xf32>
    %30 = vector.extract_strided_slice %5 {offsets = [16, 0], sizes = [256, 6], strides = [1, 1]} : vector<288x6xf32> to vector<256x6xf32>
    %c5 = arith.constant 5 : index
    %c0_23 = arith.constant 0 : index
    %c0_24 = arith.constant 0 : index
    %31 = vector.load %arg1[%c5, %c0_23, %c0_24] : memref<9x6x16xf32, #tpu.memory_space<vmem>>, vector<1x6x16xf32>
    %32 = vector.shape_cast %31 : vector<1x6x16xf32> to vector<6x16xf32>
    %cst_25 = arith.constant dense<0.000000e+00> : vector<256x16xf32>
    %33 = tpu.matmul %30, %32, %cst_25 {dimension_numbers = #tpu.dot_dimension_numbers<[1], [0], [0], [1], [0, 0, 1, 1], [], []>} : vector<256x6xf32>, vector<6x16xf32>, vector<256x16xf32> -> vector<256x16xf32>
    %34 = arith.addf %29, %33 : vector<256x16xf32>
    %35 = vector.extract_strided_slice %1 {offsets = [32, 0], sizes = [256, 6], strides = [1, 1]} : vector<288x6xf32> to vector<256x6xf32>
    %c6 = arith.constant 6 : index
    %c0_26 = arith.constant 0 : index
    %c0_27 = arith.constant 0 : index
    %36 = vector.load %arg1[%c6, %c0_26, %c0_27] : memref<9x6x16xf32, #tpu.memory_space<vmem>>, vector<1x6x16xf32>
    %37 = vector.shape_cast %36 : vector<1x6x16xf32> to vector<6x16xf32>
    %cst_28 = arith.constant dense<0.000000e+00> : vector<256x16xf32>
    %38 = tpu.matmul %35, %37, %cst_28 {dimension_numbers = #tpu.dot_dimension_numbers<[1], [0], [0], [1], [0, 0, 1, 1], [], []>} : vector<256x6xf32>, vector<6x16xf32>, vector<256x16xf32> -> vector<256x16xf32>
    %39 = arith.addf %34, %38 : vector<256x16xf32>
    %40 = vector.extract_strided_slice %3 {offsets = [32, 0], sizes = [256, 6], strides = [1, 1]} : vector<288x6xf32> to vector<256x6xf32>
    %c7 = arith.constant 7 : index
    %c0_29 = arith.constant 0 : index
    %c0_30 = arith.constant 0 : index
    %41 = vector.load %arg1[%c7, %c0_29, %c0_30] : memref<9x6x16xf32, #tpu.memory_space<vmem>>, vector<1x6x16xf32>
    %42 = vector.shape_cast %41 : vector<1x6x16xf32> to vector<6x16xf32>
    %cst_31 = arith.constant dense<0.000000e+00> : vector<256x16xf32>
    %43 = tpu.matmul %40, %42, %cst_31 {dimension_numbers = #tpu.dot_dimension_numbers<[1], [0], [0], [1], [0, 0, 1, 1], [], []>} : vector<256x6xf32>, vector<6x16xf32>, vector<256x16xf32> -> vector<256x16xf32>
    %44 = arith.addf %39, %43 : vector<256x16xf32>
    %45 = vector.extract_strided_slice %5 {offsets = [32, 0], sizes = [256, 6], strides = [1, 1]} : vector<288x6xf32> to vector<256x6xf32>
    %c8 = arith.constant 8 : index
    %c0_32 = arith.constant 0 : index
    %c0_33 = arith.constant 0 : index
    %46 = vector.load %arg1[%c8, %c0_32, %c0_33] : memref<9x6x16xf32, #tpu.memory_space<vmem>>, vector<1x6x16xf32>
    %47 = vector.shape_cast %46 : vector<1x6x16xf32> to vector<6x16xf32>
    %cst_34 = arith.constant dense<0.000000e+00> : vector<256x16xf32>
    %48 = tpu.matmul %45, %47, %cst_34 {dimension_numbers = #tpu.dot_dimension_numbers<[1], [0], [0], [1], [0, 0, 1, 1], [], []>} : vector<256x6xf32>, vector<6x16xf32>, vector<256x16xf32> -> vector<256x16xf32>
    %49 = arith.addf %44, %48 : vector<256x16xf32>
    %c0_35 = arith.constant 0 : index
    %c0_36 = arith.constant 0 : index
    %50 = vector.load %arg2[%c0_35, %c0_36] : memref<1x16xf32, #tpu.memory_space<vmem>>, vector<1x16xf32>
    %51 = vector.broadcast %50 : vector<1x16xf32> to vector<256x16xf32>
    %52 = arith.addf %49, %51 : vector<256x16xf32>
    %cst_37 = arith.constant 0.000000e+00 : f32
    %53 = vector.broadcast %cst_37 : f32 to vector<256x16xf32>
    %54 = arith.maximumf %52, %53 : vector<256x16xf32>
    %55 = arith.truncf %54 : vector<256x16xf32> to vector<256x16xbf16>
    %c0_38 = arith.constant 0 : index
    %c0_39 = arith.constant 0 : index
    %c0_40 = arith.constant 0 : index
    %56 = vector.load %arg5[%c0_38, %c0_39, %c0_40] : memref<9x64x256xbf16, #tpu.memory_space<vmem>>, vector<1x64x256xbf16>
    %57 = vector.shape_cast %56 : vector<1x64x256xbf16> to vector<64x256xbf16>
    %cst_41 = arith.constant dense<0.000000e+00> : vector<64x16xf32>
    %58 = tpu.matmul %57, %55, %cst_41 {dimension_numbers = #tpu.dot_dimension_numbers<[1], [0], [0], [1], [0, 0, 1, 1], [], []>} : vector<64x256xbf16>, vector<256x16xbf16>, vector<64x16xf32> -> vector<64x16xf32>
    %c0_42 = arith.constant 0 : index
    %c0_43 = arith.constant 0 : index
    %c0_44 = arith.constant 0 : index
    %59 = vector.load %arg3[%c0_42, %c0_43, %c0_44] : memref<9x16x32xf32, #tpu.memory_space<vmem>>, vector<1x16x32xf32>
    %60 = vector.shape_cast %59 : vector<1x16x32xf32> to vector<16x32xf32>
    %cst_45 = arith.constant dense<0.000000e+00> : vector<64x32xf32>
    %61 = tpu.matmul %58, %60, %cst_45 {dimension_numbers = #tpu.dot_dimension_numbers<[1], [0], [0], [1], [0, 0, 1, 1], [], []>} : vector<64x16xf32>, vector<16x32xf32>, vector<64x32xf32> -> vector<64x32xf32>
    %c1_46 = arith.constant 1 : index
    %c0_47 = arith.constant 0 : index
    %c0_48 = arith.constant 0 : index
    %62 = vector.load %arg5[%c1_46, %c0_47, %c0_48] : memref<9x64x256xbf16, #tpu.memory_space<vmem>>, vector<1x64x256xbf16>
    %63 = vector.shape_cast %62 : vector<1x64x256xbf16> to vector<64x256xbf16>
    %cst_49 = arith.constant dense<0.000000e+00> : vector<64x16xf32>
    %64 = tpu.matmul %63, %55, %cst_49 {dimension_numbers = #tpu.dot_dimension_numbers<[1], [0], [0], [1], [0, 0, 1, 1], [], []>} : vector<64x256xbf16>, vector<256x16xbf16>, vector<64x16xf32> -> vector<64x16xf32>
    %c1_50 = arith.constant 1 : index
    %c0_51 = arith.constant 0 : index
    %c0_52 = arith.constant 0 : index
    %65 = vector.load %arg3[%c1_50, %c0_51, %c0_52] : memref<9x16x32xf32, #tpu.memory_space<vmem>>, vector<1x16x32xf32>
    %66 = vector.shape_cast %65 : vector<1x16x32xf32> to vector<16x32xf32>
    %cst_53 = arith.constant dense<0.000000e+00> : vector<64x32xf32>
    %67 = tpu.matmul %64, %66, %cst_53 {dimension_numbers = #tpu.dot_dimension_numbers<[1], [0], [0], [1], [0, 0, 1, 1], [], []>} : vector<64x16xf32>, vector<16x32xf32>, vector<64x32xf32> -> vector<64x32xf32>
    %68 = arith.addf %61, %67 : vector<64x32xf32>
    %c2_54 = arith.constant 2 : index
    %c0_55 = arith.constant 0 : index
    %c0_56 = arith.constant 0 : index
    %69 = vector.load %arg5[%c2_54, %c0_55, %c0_56] : memref<9x64x256xbf16, #tpu.memory_space<vmem>>, vector<1x64x256xbf16>
    %70 = vector.shape_cast %69 : vector<1x64x256xbf16> to vector<64x256xbf16>
    %cst_57 = arith.constant dense<0.000000e+00> : vector<64x16xf32>
    %71 = tpu.matmul %70, %55, %cst_57 {dimension_numbers = #tpu.dot_dimension_numbers<[1], [0], [0], [1], [0, 0, 1, 1], [], []>} : vector<64x256xbf16>, vector<256x16xbf16>, vector<64x16xf32> -> vector<64x16xf32>
    %c2_58 = arith.constant 2 : index
    %c0_59 = arith.constant 0 : index
    %c0_60 = arith.constant 0 : index
    %72 = vector.load %arg3[%c2_58, %c0_59, %c0_60] : memref<9x16x32xf32, #tpu.memory_space<vmem>>, vector<1x16x32xf32>
    %73 = vector.shape_cast %72 : vector<1x16x32xf32> to vector<16x32xf32>
    %cst_61 = arith.constant dense<0.000000e+00> : vector<64x32xf32>
    %74 = tpu.matmul %71, %73, %cst_61 {dimension_numbers = #tpu.dot_dimension_numbers<[1], [0], [0], [1], [0, 0, 1, 1], [], []>} : vector<64x16xf32>, vector<16x32xf32>, vector<64x32xf32> -> vector<64x32xf32>
    %75 = arith.addf %68, %74 : vector<64x32xf32>
    %c3_62 = arith.constant 3 : index
    %c0_63 = arith.constant 0 : index
    %c0_64 = arith.constant 0 : index
    %76 = vector.load %arg5[%c3_62, %c0_63, %c0_64] : memref<9x64x256xbf16, #tpu.memory_space<vmem>>, vector<1x64x256xbf16>
    %77 = vector.shape_cast %76 : vector<1x64x256xbf16> to vector<64x256xbf16>
    %cst_65 = arith.constant dense<0.000000e+00> : vector<64x16xf32>
    %78 = tpu.matmul %77, %55, %cst_65 {dimension_numbers = #tpu.dot_dimension_numbers<[1], [0], [0], [1], [0, 0, 1, 1], [], []>} : vector<64x256xbf16>, vector<256x16xbf16>, vector<64x16xf32> -> vector<64x16xf32>
    %c3_66 = arith.constant 3 : index
    %c0_67 = arith.constant 0 : index
    %c0_68 = arith.constant 0 : index
    %79 = vector.load %arg3[%c3_66, %c0_67, %c0_68] : memref<9x16x32xf32, #tpu.memory_space<vmem>>, vector<1x16x32xf32>
    %80 = vector.shape_cast %79 : vector<1x16x32xf32> to vector<16x32xf32>
    %cst_69 = arith.constant dense<0.000000e+00> : vector<64x32xf32>
    %81 = tpu.matmul %78, %80, %cst_69 {dimension_numbers = #tpu.dot_dimension_numbers<[1], [0], [0], [1], [0, 0, 1, 1], [], []>} : vector<64x16xf32>, vector<16x32xf32>, vector<64x32xf32> -> vector<64x32xf32>
    %82 = arith.addf %75, %81 : vector<64x32xf32>
    %c4_70 = arith.constant 4 : index
    %c0_71 = arith.constant 0 : index
    %c0_72 = arith.constant 0 : index
    %83 = vector.load %arg5[%c4_70, %c0_71, %c0_72] : memref<9x64x256xbf16, #tpu.memory_space<vmem>>, vector<1x64x256xbf16>
    %84 = vector.shape_cast %83 : vector<1x64x256xbf16> to vector<64x256xbf16>
    %cst_73 = arith.constant dense<0.000000e+00> : vector<64x16xf32>
    %85 = tpu.matmul %84, %55, %cst_73 {dimension_numbers = #tpu.dot_dimension_numbers<[1], [0], [0], [1], [0, 0, 1, 1], [], []>} : vector<64x256xbf16>, vector<256x16xbf16>, vector<64x16xf32> -> vector<64x16xf32>
    %c4_74 = arith.constant 4 : index
    %c0_75 = arith.constant 0 : index
    %c0_76 = arith.constant 0 : index
    %86 = vector.load %arg3[%c4_74, %c0_75, %c0_76] : memref<9x16x32xf32, #tpu.memory_space<vmem>>, vector<1x16x32xf32>
    %87 = vector.shape_cast %86 : vector<1x16x32xf32> to vector<16x32xf32>
    %cst_77 = arith.constant dense<0.000000e+00> : vector<64x32xf32>
    %88 = tpu.matmul %85, %87, %cst_77 {dimension_numbers = #tpu.dot_dimension_numbers<[1], [0], [0], [1], [0, 0, 1, 1], [], []>} : vector<64x16xf32>, vector<16x32xf32>, vector<64x32xf32> -> vector<64x32xf32>
    %89 = arith.addf %82, %88 : vector<64x32xf32>
    %c5_78 = arith.constant 5 : index
    %c0_79 = arith.constant 0 : index
    %c0_80 = arith.constant 0 : index
    %90 = vector.load %arg5[%c5_78, %c0_79, %c0_80] : memref<9x64x256xbf16, #tpu.memory_space<vmem>>, vector<1x64x256xbf16>
    %91 = vector.shape_cast %90 : vector<1x64x256xbf16> to vector<64x256xbf16>
    %cst_81 = arith.constant dense<0.000000e+00> : vector<64x16xf32>
    %92 = tpu.matmul %91, %55, %cst_81 {dimension_numbers = #tpu.dot_dimension_numbers<[1], [0], [0], [1], [0, 0, 1, 1], [], []>} : vector<64x256xbf16>, vector<256x16xbf16>, vector<64x16xf32> -> vector<64x16xf32>
    %c5_82 = arith.constant 5 : index
    %c0_83 = arith.constant 0 : index
    %c0_84 = arith.constant 0 : index
    %93 = vector.load %arg3[%c5_82, %c0_83, %c0_84] : memref<9x16x32xf32, #tpu.memory_space<vmem>>, vector<1x16x32xf32>
    %94 = vector.shape_cast %93 : vector<1x16x32xf32> to vector<16x32xf32>
    %cst_85 = arith.constant dense<0.000000e+00> : vector<64x32xf32>
    %95 = tpu.matmul %92, %94, %cst_85 {dimension_numbers = #tpu.dot_dimension_numbers<[1], [0], [0], [1], [0, 0, 1, 1], [], []>} : vector<64x16xf32>, vector<16x32xf32>, vector<64x32xf32> -> vector<64x32xf32>
    %96 = arith.addf %89, %95 : vector<64x32xf32>
    %c6_86 = arith.constant 6 : index
    %c0_87 = arith.constant 0 : index
    %c0_88 = arith.constant 0 : index
    %97 = vector.load %arg5[%c6_86, %c0_87, %c0_88] : memref<9x64x256xbf16, #tpu.memory_space<vmem>>, vector<1x64x256xbf16>
    %98 = vector.shape_cast %97 : vector<1x64x256xbf16> to vector<64x256xbf16>
    %cst_89 = arith.constant dense<0.000000e+00> : vector<64x16xf32>
    %99 = tpu.matmul %98, %55, %cst_89 {dimension_numbers = #tpu.dot_dimension_numbers<[1], [0], [0], [1], [0, 0, 1, 1], [], []>} : vector<64x256xbf16>, vector<256x16xbf16>, vector<64x16xf32> -> vector<64x16xf32>
    %c6_90 = arith.constant 6 : index
    %c0_91 = arith.constant 0 : index
    %c0_92 = arith.constant 0 : index
    %100 = vector.load %arg3[%c6_90, %c0_91, %c0_92] : memref<9x16x32xf32, #tpu.memory_space<vmem>>, vector<1x16x32xf32>
    %101 = vector.shape_cast %100 : vector<1x16x32xf32> to vector<16x32xf32>
    %cst_93 = arith.constant dense<0.000000e+00> : vector<64x32xf32>
    %102 = tpu.matmul %99, %101, %cst_93 {dimension_numbers = #tpu.dot_dimension_numbers<[1], [0], [0], [1], [0, 0, 1, 1], [], []>} : vector<64x16xf32>, vector<16x32xf32>, vector<64x32xf32> -> vector<64x32xf32>
    %103 = arith.addf %96, %102 : vector<64x32xf32>
    %c7_94 = arith.constant 7 : index
    %c0_95 = arith.constant 0 : index
    %c0_96 = arith.constant 0 : index
    %104 = vector.load %arg5[%c7_94, %c0_95, %c0_96] : memref<9x64x256xbf16, #tpu.memory_space<vmem>>, vector<1x64x256xbf16>
    %105 = vector.shape_cast %104 : vector<1x64x256xbf16> to vector<64x256xbf16>
    %cst_97 = arith.constant dense<0.000000e+00> : vector<64x16xf32>
    %106 = tpu.matmul %105, %55, %cst_97 {dimension_numbers = #tpu.dot_dimension_numbers<[1], [0], [0], [1], [0, 0, 1, 1], [], []>} : vector<64x256xbf16>, vector<256x16xbf16>, vector<64x16xf32> -> vector<64x16xf32>
    %c7_98 = arith.constant 7 : index
    %c0_99 = arith.constant 0 : index
    %c0_100 = arith.constant 0 : index
    %107 = vector.load %arg3[%c7_98, %c0_99, %c0_100] : memref<9x16x32xf32, #tpu.memory_space<vmem>>, vector<1x16x32xf32>
    %108 = vector.shape_cast %107 : vector<1x16x32xf32> to vector<16x32xf32>
    %cst_101 = arith.constant dense<0.000000e+00> : vector<64x32xf32>
    %109 = tpu.matmul %106, %108, %cst_101 {dimension_numbers = #tpu.dot_dimension_numbers<[1], [0], [0], [1], [0, 0, 1, 1], [], []>} : vector<64x16xf32>, vector<16x32xf32>, vector<64x32xf32> -> vector<64x32xf32>
    %110 = arith.addf %103, %109 : vector<64x32xf32>
    %c8_102 = arith.constant 8 : index
    %c0_103 = arith.constant 0 : index
    %c0_104 = arith.constant 0 : index
    %111 = vector.load %arg5[%c8_102, %c0_103, %c0_104] : memref<9x64x256xbf16, #tpu.memory_space<vmem>>, vector<1x64x256xbf16>
    %112 = vector.shape_cast %111 : vector<1x64x256xbf16> to vector<64x256xbf16>
    %cst_105 = arith.constant dense<0.000000e+00> : vector<64x16xf32>
    %113 = tpu.matmul %112, %55, %cst_105 {dimension_numbers = #tpu.dot_dimension_numbers<[1], [0], [0], [1], [0, 0, 1, 1], [], []>} : vector<64x256xbf16>, vector<256x16xbf16>, vector<64x16xf32> -> vector<64x16xf32>
    %c8_106 = arith.constant 8 : index
    %c0_107 = arith.constant 0 : index
    %c0_108 = arith.constant 0 : index
    %114 = vector.load %arg3[%c8_106, %c0_107, %c0_108] : memref<9x16x32xf32, #tpu.memory_space<vmem>>, vector<1x16x32xf32>
    %115 = vector.shape_cast %114 : vector<1x16x32xf32> to vector<16x32xf32>
    %cst_109 = arith.constant dense<0.000000e+00> : vector<64x32xf32>
    %116 = tpu.matmul %113, %115, %cst_109 {dimension_numbers = #tpu.dot_dimension_numbers<[1], [0], [0], [1], [0, 0, 1, 1], [], []>} : vector<64x16xf32>, vector<16x32xf32>, vector<64x32xf32> -> vector<64x32xf32>
    %117 = arith.addf %110, %116 : vector<64x32xf32>
    %c0_110 = arith.constant 0 : index
    %c0_111 = arith.constant 0 : index
    %118 = vector.load %arg4[%c0_110, %c0_111] : memref<1x32xf32, #tpu.memory_space<vmem>>, vector<1x32xf32>
    %119 = vector.broadcast %118 : vector<1x32xf32> to vector<64x32xf32>
    %120 = arith.addf %117, %119 : vector<64x32xf32>
    %cst_112 = arith.constant 0.000000e+00 : f32
    %121 = vector.broadcast %cst_112 : f32 to vector<64x32xf32>
    %122 = arith.maximumf %120, %121 : vector<64x32xf32>
    %123 = arith.mulf %122, %122 : vector<64x32xf32>
    %c0_113 = arith.constant 0 : index
    %c0_114 = arith.constant 0 : index
    %124 = vector.load %arg6[%c0_113, %c0_114] : memref<12x32xf32, #tpu.memory_space<vmem>>, vector<12x32xf32>
    %cst_115 = arith.constant dense<0.000000e+00> : vector<12x64xf32>
    %125 = tpu.matmul %124, %122, %cst_115 {dimension_numbers = #tpu.dot_dimension_numbers<[1], [1], [0], [0], [0, 0, 1, 0], [], []>} : vector<12x32xf32>, vector<64x32xf32>, vector<12x64xf32> -> vector<12x64xf32>
    %c0_116 = arith.constant 0 : index
    %c0_117 = arith.constant 0 : index
    %126 = vector.load %arg7[%c0_116, %c0_117] : memref<12x32xf32, #tpu.memory_space<vmem>>, vector<12x32xf32>
    %cst_118 = arith.constant dense<0.000000e+00> : vector<12x64xf32>
    %127 = tpu.matmul %126, %123, %cst_118 {dimension_numbers = #tpu.dot_dimension_numbers<[1], [1], [0], [0], [0, 0, 1, 0], [], []>} : vector<12x32xf32>, vector<64x32xf32>, vector<12x64xf32> -> vector<12x64xf32>
    %128 = arith.addf %125, %127 : vector<12x64xf32>
    %c0_119 = arith.constant 0 : index
    %c0_120 = arith.constant 0 : index
    %129 = vector.load %arg8[%c0_119, %c0_120] : memref<12x1xf32, #tpu.memory_space<vmem>>, vector<12x1xf32>
    %130 = vector.broadcast %129 : vector<12x1xf32> to vector<12x64xf32>
    %131 = arith.addf %128, %130 : vector<12x64xf32>
    %cst_121 = arith.constant 0.000000e+00 : f32
    %132 = vector.broadcast %cst_121 : f32 to vector<12x64xf32>
    %133 = arith.maximumf %131, %132 : vector<12x64xf32>
    %134 = math.sqrt %133 : vector<12x64xf32>
    %cst_122 = arith.constant dense<0x7F800000> : vector<12xf32>
    %135 = vector.multi_reduction <minimumf>, %134, %cst_122 [1] : vector<12x64xf32> to vector<12xf32>
    %136 = vector.shape_cast %135 : vector<12xf32> to vector<12x1xf32>
    %cst_123 = arith.constant 1.000000e+00 : f32
    %137 = vector.broadcast %cst_123 : f32 to vector<12x1xf32>
    %138 = arith.addf %136, %137 : vector<12x1xf32>
    %139 = math.log %138 : vector<12x1xf32>
    %cst_124 = arith.constant 9.99999974E-5 : f32
    %140 = vector.broadcast %cst_124 : f32 to vector<12x1xf32>
    %141 = arith.addf %136, %140 : vector<12x1xf32>
    %142 = math.log %141 : vector<12x1xf32>
    %143 = arith.subf %139, %142 : vector<12x1xf32>
    %c0_125 = arith.constant 0 : index
    %c0_126 = arith.constant 0 : index
    %144 = vector.load %arg9[%c0_125, %c0_126] : memref<12x6xf32, #tpu.memory_space<vmem>>, vector<12x6xf32>
    %145 = vector.broadcast %143 : vector<12x1xf32> to vector<12x6xf32>
    %146 = arith.mulf %145, %144 : vector<12x6xf32>
    %cst_127 = arith.constant dense<0.000000e+00> : vector<6xf32>
    %147 = vector.multi_reduction <add>, %146, %cst_127 [0] : vector<12x6xf32> to vector<6xf32>
    %148 = vector.shape_cast %147 : vector<6xf32> to vector<1x6xf32>
    %c0_128 = arith.constant 0 : index
    %c0_129 = arith.constant 0 : index
    %149 = vector.load %arg12[%c0_128, %c0_129] : memref<1x6xf32, #tpu.memory_space<vmem>>, vector<1x6xf32>
    tpu.vector_store %arg12[%c0_128, %c0_129], %148 {strides = array<i32>} : memref<1x6xf32, #tpu.memory_space<vmem>>, vector<1x6xf32>,
    %150 = tpu.iota {dimensions = array<i32: 0>} : vector<12x12xi32>
    %151 = tpu.iota {dimensions = array<i32: 1>} : vector<12x12xi32>
    %152 = arith.cmpi eq, %150, %151 : vector<12x12xi32>
    %153 = arith.extui %152 : vector<12x12xi1> to vector<12x12xi32>
    %154 = arith.sitofp %153 : vector<12x12xi32> to vector<12x12xf32>
    %155 = vector.broadcast %136 : vector<12x1xf32> to vector<12x12xf32>
    %156 = arith.mulf %155, %154 : vector<12x12xf32>
    %cst_130 = arith.constant dense<0.000000e+00> : vector<12xf32>
    %157 = vector.multi_reduction <add>, %156, %cst_130 [0] : vector<12x12xf32> to vector<12xf32>
    %158 = vector.shape_cast %157 : vector<12xf32> to vector<1x12xf32>
    %c0_131 = arith.constant 0 : index
    %c0_132 = arith.constant 0 : index
    %159 = vector.load %arg11[%c0_131, %c0_132] : memref<1x12xf32, #tpu.memory_space<vmem>>, vector<1x12xf32>
    tpu.vector_store %arg11[%c0_131, %c0_132], %158 {strides = array<i32>} : memref<1x12xf32, #tpu.memory_space<vmem>>, vector<1x12xf32>,
    %cst_133 = arith.constant 1.000000e+00 : f32
    %160 = vector.broadcast %cst_133 : f32 to vector<12x64xf32>
    %161 = arith.addf %134, %160 : vector<12x64xf32>
    %162 = math.log %161 : vector<12x64xf32>
    %cst_134 = arith.constant 9.99999974E-5 : f32
    %163 = vector.broadcast %cst_134 : f32 to vector<12x64xf32>
    %164 = arith.addf %134, %163 : vector<12x64xf32>
    %165 = math.log %164 : vector<12x64xf32>
    %166 = arith.subf %162, %165 : vector<12x64xf32>
    %167 = arith.truncf %166 : vector<12x64xf32> to vector<12x64xbf16>
    %c0_135 = arith.constant 0 : index
    %c0_136 = arith.constant 0 : index
    %168 = vector.load %arg10[%c0_135, %c0_136] : memref<64x256xbf16, #tpu.memory_space<vmem>>, vector<64x256xbf16>
    %cst_137 = arith.constant dense<0.000000e+00> : vector<12x256xf32>
    %169 = tpu.matmul %167, %168, %cst_137 {dimension_numbers = #tpu.dot_dimension_numbers<[1], [0], [0], [1], [0, 0, 1, 1], [], []>} : vector<12x64xbf16>, vector<64x256xbf16>, vector<12x256xf32> -> vector<12x256xf32>
    %c0_138 = arith.constant 0 : index
    %c0_139 = arith.constant 0 : index
    %170 = vector.load %arg13[%c0_138, %c0_139] : memref<12x256xf32, #tpu.memory_space<vmem>>, vector<12x256xf32>
    tpu.vector_store %arg13[%c0_138, %c0_139], %169 {strides = array<i32>} : memref<12x256xf32, #tpu.memory_space<vmem>>, vector<12x256xf32>,
    return
  }
}

</mosaic_0001>

<llo_original>
// kernel: ppnet_forward.1
$region0: #{ppnet_forward.1}
  #allocation0 [shape = 'u32[]', space=smem, size = 0x4, offset = 0x4, fixed_abs, tag = 'smem constant byte address 0x4 - core index']
  #allocation1 [shape = 'u32[144,128]{1,0:T(1,128)}', space=vmem, size = 0x12000, scoped, tag = 'internal scratch']
  %s0 = inlined_call_operand.vmem [shape: f32[3,288,6], index: 0, kind: input, shape index: {}]
  %s1 = inlined_call_operand.vmem [shape: f32[9,6,16], index: 1, kind: input, shape index: {}]
  %s2 = inlined_call_operand.vmem [shape: f32[1,16], index: 2, kind: input, shape index: {}]
  %s3 = inlined_call_operand.vmem [shape: f32[9,16,32], index: 3, kind: input, shape index: {}]
  %s4 = inlined_call_operand.vmem [shape: f32[1,32], index: 4, kind: input, shape index: {}]
  %s5 = inlined_call_operand.vmem [shape: bf16[9,64,256], index: 5, kind: input, shape index: {}]
  %s6 = inlined_call_operand.vmem [shape: f32[12,32], index: 6, kind: input, shape index: {}]
  %s7 = inlined_call_operand.vmem [shape: f32[12,32], index: 7, kind: input, shape index: {}]
  %s8 = inlined_call_operand.vmem [shape: f32[12,1], index: 8, kind: input, shape index: {}]
  %s9 = inlined_call_operand.vmem [shape: f32[12,6], index: 9, kind: input, shape index: {}]
  %s10 = inlined_call_operand.vmem [shape: bf16[64,256], index: 10, kind: input, shape index: {}]
  %s11 = inlined_call_operand.vmem [shape: f32[1,12], index: 11, kind: output, shape index: {0}]
  %s12 = inlined_call_operand.vmem [shape: f32[1,6], index: 12, kind: output, shape index: {1}]
  %s13 = inlined_call_operand.vmem [shape: f32[12,256], index: 13, kind: output, shape index: {2}]
  %14 = xla_tuple %s11, %s12, %s13
  %s15 = sld [smem:[#allocation0]]
  $region70: #{ppnet_forward.1} parent=0
    _
  %s17 = ssub.s32 1, %s15
  %s18 = scalar_select 0, %s17, %s15
  // Predicated region
  $region2: #{ppnet_forward.1} parent=0 // pred_check
    _
  $region3: #{ppnet_forward.1} parent=0 // pred_check_branch
    %20 = sbr.rel (0) target = $region5
  $region4: #{ppnet_forward.1} parent=0 // pred_region
    _
  $region5: #{ppnet_forward.1} parent=0 // pred_fallthru
    _
  // Predicated region
  $region6: #{ppnet_forward.1} parent=0 // pred_check
    _
  $region7: #{ppnet_forward.1} parent=0 // pred_check_branch
    %22 = sbr.rel (0) target = $region9
  $region8: #{ppnet_forward.1} parent=0 // pred_region
    _
  $region9: #{ppnet_forward.1} parent=0 // pred_fallthru
    _
  // Predicated region
  $region10: #{ppnet_forward.1} parent=0 // pred_check
    _
  $region11: #{ppnet_forward.1} parent=0 // pred_check_branch
    %24 = sbr.rel (0) target = $region13
  $region12: #{ppnet_forward.1} parent=0 // pred_region
    _
  $region13: #{ppnet_forward.1} parent=0 // pred_fallthru
    _
  // Predicated region
  $region14: #{ppnet_forward.1} parent=0 // pred_check
    _
  $region15: #{ppnet_forward.1} parent=0 // pred_check_branch
    %26 = sbr.rel (0) target = $region17
  $region16: #{ppnet_forward.1} parent=0 // pred_region
    _
  $region17: #{ppnet_forward.1} parent=0 // pred_fallthru
    _
  // Predicated region
  $region18: #{ppnet_forward.1} parent=0 // pred_check
    _
  $region19: #{ppnet_forward.1} parent=0 // pred_check_branch
    %28 = sbr.rel (0) target = $region21
  $region20: #{ppnet_forward.1} parent=0 // pred_region
    _
  $region21: #{ppnet_forward.1} parent=0 // pred_fallthru
    _
  // Predicated region
  $region22: #{ppnet_forward.1} parent=0 // pred_check
    _
  $region23: #{ppnet_forward.1} parent=0 // pred_check_branch
    %30 = sbr.rel (0) target = $region25
  $region24: #{ppnet_forward.1} parent=0 // pred_region
    _
  $region25: #{ppnet_forward.1} parent=0 // pred_fallthru
    _
  // Predicated region
  $region26: #{ppnet_forward.1} parent=0 // pred_check
    _
  $region27: #{ppnet_forward.1} parent=0 // pred_check_branch
    %32 = sbr.rel (0) target = $region29
  $region28: #{ppnet_forward.1} parent=0 // pred_region
    _
  $region29: #{ppnet_forward.1} parent=0 // pred_fallthru
    _
  // Predicated region
  $region30: #{ppnet_forward.1} parent=0 // pred_check
    _
  $region31: #{ppnet_forward.1} parent=0 // pred_check_branch
    %34 = sbr.rel (0) target = $region33
  $region32: #{ppnet_forward.1} parent=0 // pred_region
    _
  $region33: #{ppnet_forward.1} parent=0 // pred_fallthru
    _
  // Predicated region
  $region34: #{ppnet_forward.1} parent=0 // pred_check
    _
  $region35: #{ppnet_forward.1} parent=0 // pred_check_branch
    %36 = sbr.rel (0) target = $region37
  $region36: #{ppnet_forward.1} parent=0 // pred_region
    _
  $region37: #{ppnet_forward.1} parent=0 // pred_fallthru
    _
  // Predicated region
  $region38: #{ppnet_forward.1} parent=0 // pred_check
    _
  $region39: #{ppnet_forward.1} parent=0 // pred_check_branch
    %38 = sbr.rel (0) target = $region41
  $region40: #{ppnet_forward.1} parent=0 // pred_region
    _
  $region41: #{ppnet_forward.1} parent=0 // pred_fallthru
    _
  // Predicated region
  $region42: #{ppnet_forward.1} parent=0 // pred_check
    _
  $region43: #{ppnet_forward.1} parent=0 // pred_check_branch
    %40 = sbr.rel (0) target = $region45
  $region44: #{ppnet_forward.1} parent=0 // pred_region
    _
  $region45: #{ppnet_forward.1} parent=0 // pred_fallthru
    _
  %v42 = vld [vmem:[%s0] sm:$0xff]
  %v43 = vld [vmem:[%s0 + $0x8] sm:$0xff]
  %v44 = vld [vmem:[%s0 + $0x10] sm:$0xff]
  %v45 = vld [vmem:[%s0 + $0x18] sm:$0xff]
  %v46 = vld [vmem:[%s0 + $0x20] sm:$0xff]
  %v47 = vld [vmem:[%s0 + $0x28] sm:$0xff]
  %v48 = vld [vmem:[%s0 + $0x30] sm:$0xff]
  %v49 = vld [vmem:[%s0 + $0x38] sm:$0xff]
  %v50 = vld [vmem:[%s0 + $0x40] sm:$0xff]
  %v51 = vld [vmem:[%s0 + $0x48] sm:$0xff]
  %v52 = vld [vmem:[%s0 + $0x50] sm:$0xff]
  %v53 = vld [vmem:[%s0 + $0x58] sm:$0xff]
  %v54 = vld [vmem:[%s0 + $0x60] sm:$0xff]
  %v55 = vld [vmem:[%s0 + $0x68] sm:$0xff]
  %v56 = vld [vmem:[%s0 + $0x70] sm:$0xff]
  %v57 = vld [vmem:[%s0 + $0x78] sm:$0xff]
  %v58 = vld [vmem:[%s0 + $0x80] sm:$0xff]
  %v59 = vld [vmem:[%s0 + $0x88] sm:$0xff]
  %v60 = vld [vmem:[%s0 + $0x90] sm:$0xff]
  %v61 = vld [vmem:[%s0 + $0x98] sm:$0xff]
  %v62 = vld [vmem:[%s0 + $0xa0] sm:$0xff]
  %v63 = vld [vmem:[%s0 + $0xa8] sm:$0xff]
  %v64 = vld [vmem:[%s0 + $0xb0] sm:$0xff]
  %v65 = vld [vmem:[%s0 + $0xb8] sm:$0xff]
  %v66 = vld [vmem:[%s0 + $0xc0] sm:$0xff]
  %v67 = vld [vmem:[%s0 + $0xc8] sm:$0xff]
  %v68 = vld [vmem:[%s0 + $0xd0] sm:$0xff]
  %v69 = vld [vmem:[%s0 + $0xd8] sm:$0xff]
  %v70 = vld [vmem:[%s0 + $0xe0] sm:$0xff]
  %v71 = vld [vmem:[%s0 + $0xe8] sm:$0xff]
  %v72 = vld [vmem:[%s0 + $0xf0] sm:$0xff]
  %v73 = vld [vmem:[%s0 + $0xf8] sm:$0xff]
  %v74 = vld [vmem:[%s0 + $0x100] sm:$0xff]
  %v75 = vld [vmem:[%s0 + $0x108] sm:$0xff]
  %v76 = vld [vmem:[%s0 + $0x110] sm:$0xff]
  %v77 = vld [vmem:[%s0 + $0x118] sm:$0xff]
  %s78 = scalar_lea.vmem %s0, 288
  %v79 = vld [vmem:[%s78] sm:$0xff]
  %v80 = vld [vmem:[%s78 + $0x8] sm:$0xff]
  %v81 = vld [vmem:[%s78 + $0x10] sm:$0xff]
  %v82 = vld [vmem:[%s78 + $0x18] sm:$0xff]
  %v83 = vld [vmem:[%s78 + $0x20] sm:$0xff]
  %v84 = vld [vmem:[%s78 + $0x28] sm:$0xff]
  %v85 = vld [vmem:[%s78 + $0x30] sm:$0xff]
  %v86 = vld [vmem:[%s78 + $0x38] sm:$0xff]
  %v87 = vld [vmem:[%s78 + $0x40] sm:$0xff]
  %v88 = vld [vmem:[%s78 + $0x48] sm:$0xff]
  %v89 = vld [vmem:[%s78 + $0x50] sm:$0xff]
  %v90 = vld [vmem:[%s78 + $0x58] sm:$0xff]
  %v91 = vld [vmem:[%s78 + $0x60] sm:$0xff]
  %v92 = vld [vmem:[%s78 + $0x68] sm:$0xff]
  %v93 = vld [vmem:[%s78 + $0x70] sm:$0xff]
  %v94 = vld [vmem:[%s78 + $0x78] sm:$0xff]
  %v95 = vld [vmem:[%s78 + $0x80] sm:$0xff]
  %v96 = vld [vmem:[%s78 + $0x88] sm:$0xff]
  %v97 = vld [vmem:[%s78 + $0x90] sm:$0xff]
  %v98 = vld [vmem:[%s78 + $0x98] sm:$0xff]
  %v99 = vld [vmem:[%s78 + $0xa0] sm:$0xff]
  %v100 = vld [vmem:[%s78 + $0xa8] sm:$0xff]
  %v101 = vld [vmem:[%s78 + $0xb0] sm:$0xff]
  %v102 = vld [vmem:[%s78 + $0xb8] sm:$0xff]
  %v103 = vld [vmem:[%s78 + $0xc0] sm:$0xff]
  %v104 = vld [vmem:[%s78 + $0xc8] sm:$0xff]
  %v105 = vld [vmem:[%s78 + $0xd0] sm:$0xff]
  %v106 = vld [vmem:[%s78 + $0xd8] sm:$0xff]
  %v107 = vld [vmem:[%s78 + $0xe0] sm:$0xff]
  %v108 = vld [vmem:[%s78 + $0xe8] sm:$0xff]
  %v109 = vld [vmem:[%s78 + $0xf0] sm:$0xff]
  %v110 = vld [vmem:[%s78 + $0xf8] sm:$0xff]
  %v111 = vld [vmem:[%s78 + $0x100] sm:$0xff]
  %v112 = vld [vmem:[%s78 + $0x108] sm:$0xff]
  %v113 = vld [vmem:[%s78 + $0x110] sm:$0xff]
  %v114 = vld [vmem:[%s78 + $0x118] sm:$0xff]
  %s115 = scalar_lea.vmem %s0, 576
  %v116 = vld [vmem:[%s115] sm:$0xff]
  %v117 = vld [vmem:[%s115 + $0x8] sm:$0xff]
  %v118 = vld [vmem:[%s115 + $0x10] sm:$0xff]
  %v119 = vld [vmem:[%s115 + $0x18] sm:$0xff]
  %v120 = vld [vmem:[%s115 + $0x20] sm:$0xff]
  %v121 = vld [vmem:[%s115 + $0x28] sm:$0xff]
  %v122 = vld [vmem:[%s115 + $0x30] sm:$0xff]
  %v123 = vld [vmem:[%s115 + $0x38] sm:$0xff]
  %v124 = vld [vmem:[%s115 + $0x40] sm:$0xff]
  %v125 = vld [vmem:[%s115 + $0x48] sm:$0xff]
  %v126 = vld [vmem:[%s115 + $0x50] sm:$0xff]
  %v127 = vld [vmem:[%s115 + $0x58] sm:$0xff]
  %v128 = vld [vmem:[%s115 + $0x60] sm:$0xff]
  %v129 = vld [vmem:[%s115 + $0x68] sm:$0xff]
  %v130 = vld [vmem:[%s115 + $0x70] sm:$0xff]
  %v131 = vld [vmem:[%s115 + $0x78] sm:$0xff]
  %v132 = vld [vmem:[%s115 + $0x80] sm:$0xff]
  %v133 = vld [vmem:[%s115 + $0x88] sm:$0xff]
  %v134 = vld [vmem:[%s115 + $0x90] sm:$0xff]
  %v135 = vld [vmem:[%s115 + $0x98] sm:$0xff]
  %v136 = vld [vmem:[%s115 + $0xa0] sm:$0xff]
  %v137 = vld [vmem:[%s115 + $0xa8] sm:$0xff]
  %v138 = vld [vmem:[%s115 + $0xb0] sm:$0xff]
  %v139 = vld [vmem:[%s115 + $0xb8] sm:$0xff]
  %v140 = vld [vmem:[%s115 + $0xc0] sm:$0xff]
  %v141 = vld [vmem:[%s115 + $0xc8] sm:$0xff]
  %v142 = vld [vmem:[%s115 + $0xd0] sm:$0xff]
  %v143 = vld [vmem:[%s115 + $0xd8] sm:$0xff]
  %v144 = vld [vmem:[%s115 + $0xe0] sm:$0xff]
  %v145 = vld [vmem:[%s115 + $0xe8] sm:$0xff]
  %v146 = vld [vmem:[%s115 + $0xf0] sm:$0xff]
  %v147 = vld [vmem:[%s115 + $0xf8] sm:$0xff]
  %v148 = vld [vmem:[%s115 + $0x100] sm:$0xff]
  %v149 = vld [vmem:[%s115 + $0x108] sm:$0xff]
  %v150 = vld [vmem:[%s115 + $0x110] sm:$0xff]
  %v151 = vld [vmem:[%s115 + $0x118] sm:$0xff]
  %v152 = vld [vmem:[%s1] sm:$0x3f]
  %s153 = scalar_lea.vmem %s1, 8
  %v154 = vld [vmem:[%s153] sm:$0x3f]
  %vm155 = vcmask 48128
  %v157 = vsel %vm155, %v79, 0
  %v160 = vsel %vm155, %v80, 0
  %v163 = vsel %vm155, %v81, 0
  %v166 = vsel %vm155, %v82, 0
  %v169 = vsel %vm155, %v83, 0
  %v172 = vsel %vm155, %v84, 0
  %v175 = vsel %vm155, %v85, 0
  %v178 = vsel %vm155, %v86, 0
  %v181 = vsel %vm155, %v87, 0
  %v184 = vsel %vm155, %v88, 0
  %v187 = vsel %vm155, %v89, 0
  %v190 = vsel %vm155, %v90, 0
  %v193 = vsel %vm155, %v91, 0
  %v196 = vsel %vm155, %v92, 0
  %v199 = vsel %vm155, %v93, 0
  %v202 = vsel %vm155, %v94, 0
  %v205 = vsel %vm155, %v95, 0
  %v208 = vsel %vm155, %v96, 0
  %v211 = vsel %vm155, %v97, 0
  %v214 = vsel %vm155, %v98, 0
  %v217 = vsel %vm155, %v99, 0
  %v220 = vsel %vm155, %v100, 0
  %v223 = vsel %vm155, %v101, 0
  %v226 = vsel %vm155, %v102, 0
  %v229 = vsel %vm155, %v103, 0
  %v232 = vsel %vm155, %v104, 0
  %v235 = vsel %vm155, %v105, 0
  %v238 = vsel %vm155, %v106, 0
  %v241 = vsel %vm155, %v107, 0
  %v244 = vsel %vm155, %v108, 0
  %v247 = vsel %vm155, %v109, 0
  %v250 = vsel %vm155, %v110, 0
  %vm252 = vcmask 1045504
  %v254 = vsel %vm252, %v154, 0
  %256 = vmatprep.subr.mxu0 0.0
  %257 = vmatpush1.msra.mxu0 %v254
  %258 = vmatprep.subr.mxu0 0.0
  %259 = vmatpush1.msra.mxu0 0.0
  %260 = vmatprep.subr.mxu0 0.0
  %261 = vmatpush1.msra.mxu0 0.0
  %262 = vmatprep.subr.mxu0 0.0
  %263 = vmatpush1.msra.mxu0 0.0
  %264 = vmatprep.subr.mxu0 0.0
  %265 = vmatpush1.msra.mxu0 0.0
  %266 = vmatprep.subr.mxu0 0.0
  %267 = vmatpush1.msra.mxu0 0.0
  %268 = vmatprep.subr.mxu0 0.0
  %269 = vmatpush1.msra.mxu0 0.0
  %270 = vmatprep.subr.mxu0 0.0
  %271 = vmatpush1.msra.mxu0 0.0
  %272 = vmatprep.subr.mxu0 0.0
  %273 = vmatpush1.msra.mxu0 0.0
  %274 = vmatprep.subr.mxu0 0.0
  %275 = vmatpush1.msra.mxu0 0.0
  %276 = vmatprep.subr.mxu0 0.0
  %277 = vmatpush1.msra.mxu0 0.0
  %278 = vmatprep.subr.mxu0 0.0
  %279 = vmatpush1.msra.mxu0 0.0
  %280 = vmatprep.subr.mxu0 0.0
  %281 = vmatpush1.msra.mxu0 0.0
  %282 = vmatprep.subr.mxu0 0.0
  %283 = vmatpush1.msra.mxu0 0.0
  %284 = vmatprep.subr.mxu0 0.0
  %285 = vmatpush1.msra.mxu0 0.0
  %286 = vmatprep.subr.mxu0 0.0
  %287 = vmatpush1.msra.mxu0 0.0
  %288 = vmatprep.subr.mxu0 0.0
  %289 = vmatpush1.msra.mxu0 0.0
  %290 = vmatprep.subr.mxu0 0.0
  %291 = vmatpush1.msra.mxu0 0.0
  %292 = vmatprep.subr.mxu0 0.0
  %293 = vmatpush1.msra.mxu0 0.0
  %294 = vmatprep.subr.mxu0 0.0
  %295 = vmatpush1.msra.mxu0 0.0
  %296 = vmatprep.subr.mxu0 0.0
  %297 = vmatpush1.msra.mxu0 0.0
  %298 = vmatprep.subr.mxu0 0.0
  %299 = vmatpush1.msra.mxu0 0.0
  %300 = vmatprep.subr.mxu0 0.0
  %301 = vmatpush1.msra.mxu0 0.0
  %302 = vmatprep.subr.mxu0 0.0
  %303 = vmatpush1.msra.mxu0 0.0
  %304 = vmatprep.subr.mxu0 0.0
  %305 = vmatpush1.msra.mxu0 0.0
  %306 = vmatprep.subr.mxu0 0.0
  %307 = vmatpush1.msra.mxu0 0.0
  %308 = vmatprep.subr.mxu0 0.0
  %309 = vmatpush1.msra.mxu0 0.0
  %310 = vmatprep.subr.mxu0 0.0
  %311 = vmatpush1.msra.mxu0 0.0
  %312 = vmatprep.subr.mxu0 0.0
  %313 = vmatpush1.msra.mxu0 0.0
  %314 = vmatprep.subr.mxu0 0.0
  %315 = vmatpush1.msra.mxu0 0.0
  %316 = vmatprep.subr.mxu0 0.0
  %317 = vmatpush1.msra.mxu0 0.0
  %318 = vmatprep.subr.mxu0 0.0
  %319 = vmatpush1.msra.mxu0 0.0
  %320 = vmatprep.mubr.f32.mxu0 0.0
  %321 = vmatmul.mubr.f32.gmra.mrb[0].mxu0 %v157
  %v322 = vpop.f32.mrb[0].mxu0
  %v323 = vadd.f32 0.0, %v322
  %v324 = vpop.f32.mrb[0].mxu0
  %325 = vmatprep.mubr.f32.mxu0 0.0
  %326 = vmatmul.mubr.f32.gmra.mrb[0].mxu0 %v160
  %v327 = vpop.f32.mrb[0].mxu0
  %v328 = vadd.f32 0.0, %v327
  %v329 = vpop.f32.mrb[0].mxu0
  %330 = vmatprep.mubr.f32.mxu0 0.0
  %331 = vmatmul.mubr.f32.gmra.mrb[0].mxu0 %v163
  %v332 = vpop.f32.mrb[0].mxu0
  %v333 = vadd.f32 0.0, %v332
  %v334 = vpop.f32.mrb[0].mxu0
  %335 = vmatprep.mubr.f32.mxu0 0.0
  %336 = vmatmul.mubr.f32.gmra.mrb[0].mxu0 %v166
  %v337 = vpop.f32.mrb[0].mxu0
  %v338 = vadd.f32 0.0, %v337
  %v339 = vpop.f32.mrb[0].mxu0
  %340 = vmatprep.mubr.f32.mxu0 0.0
  %341 = vmatmul.mubr.f32.gmra.mrb[0].mxu0 %v169
  %v342 = vpop.f32.mrb[0].mxu0
  %v343 = vadd.f32 0.0, %v342
  %v344 = vpop.f32.mrb[0].mxu0
  %345 = vmatprep.mubr.f32.mxu0 0.0
  %346 = vmatmul.mubr.f32.gmra.mrb[0].mxu0 %v172
  %v347 = vpop.f32.mrb[0].mxu0
  %v348 = vadd.f32 0.0, %v347
  %v349 = vpop.f32.mrb[0].mxu0
  %350 = vmatprep.mubr.f32.mxu0 0.0
  %351 = vmatmul.mubr.f32.gmra.mrb[0].mxu0 %v175
  %v352 = vpop.f32.mrb[0].mxu0
  %v353 = vadd.f32 0.0, %v352
  %v354 = vpop.f32.mrb[0].mxu0
  %355 = vmatprep.mubr.f32.mxu0 0.0
  %356 = vmatmul.mubr.f32.gmra.mrb[0].mxu0 %v178
  %v357 = vpop.f32.mrb[0].mxu0
  %v358 = vadd.f32 0.0, %v357
  %v359 = vpop.f32.mrb[0].mxu0
  %360 = vmatprep.mubr.f32.mxu0 0.0
  %361 = vmatmul.mubr.f32.gmra.mrb[0].mxu0 %v181
  %v362 = vpop.f32.mrb[0].mxu0
  %v363 = vadd.f32 0.0, %v362
  %v364 = vpop.f32.mrb[0].mxu0
  %365 = vmatprep.mubr.f32.mxu0 0.0
  %366 = vmatmul.mubr.f32.gmra.mrb[0].mxu0 %v184
  %v367 = vpop.f32.mrb[0].mxu0
  %v368 = vadd.f32 0.0, %v367
  %v369 = vpop.f32.mrb[0].mxu0
  %370 = vmatprep.mubr.f32.mxu0 0.0
  %371 = vmatmul.mubr.f32.gmra.mrb[0].mxu0 %v187
  %v372 = vpop.f32.mrb[0].mxu0
  %v373 = vadd.f32 0.0, %v372
  %v374 = vpop.f32.mrb[0].mxu0
  %375 = vmatprep.mubr.f32.mxu0 0.0
  %376 = vmatmul.mubr.f32.gmra.mrb[0].mxu0 %v190
  %v377 = vpop.f32.mrb[0].mxu0
  %v378 = vadd.f32 0.0, %v377
  %v379 = vpop.f32.mrb[0].mxu0
  %380 = vmatprep.mubr.f32.mxu0 0.0
  %381 = vmatmul.mubr.f32.gmra.mrb[0].mxu0 %v193
  %v382 = vpop.f32.mrb[0].mxu0
  %v383 = vadd.f32 0.0, %v382
  %v384 = vpop.f32.mrb[0].mxu0
  %385 = vmatprep.mubr.f32.mxu0 0.0
  %386 = vmatmul.mubr.f32.gmra.mrb[0].mxu0 %v196
  %v387 = vpop.f32.mrb[0].mxu0
  %v388 = vadd.f32 0.0, %v387
  %v389 = vpop.f32.mrb[0].mxu0
  %390 = vmatprep.mubr.f32.mxu0 0.0
  %391 = vmatmul.mubr.f32.gmra.mrb[0].mxu0 %v199
  %v392 = vpop.f32.mrb[0].mxu0
  %v393 = vadd.f32 0.0, %v392
  %v394 = vpop.f32.mrb[0].mxu0
  %395 = vmatprep.mubr.f32.mxu0 0.0
  %396 = vmatmul.mubr.f32.gmra.mrb[0].mxu0 %v202
  %v397 = vpop.f32.mrb[0].mxu0
  %v398 = vadd.f32 0.0, %v397
  %v399 = vpop.f32.mrb[0].mxu0
  %400 = vmatprep.mubr.f32.mxu0 0.0
  %401 = vmatmul.mubr.f32.gmra.mrb[0].mxu0 %v205
  %v402 = vpop.f32.mrb[0].mxu0
  %v403 = vadd.f32 0.0, %v402
  %v404 = vpop.f32.mrb[0].mxu0
  %405 = vmatprep.mubr.f32.mxu0 0.0
  %406 = vmatmul.mubr.f32.gmra.mrb[0].mxu0 %v208
  %v407 = vpop.f32.mrb[0].mxu0
  %v408 = vadd.f32 0.0, %v407
  %v409 = vpop.f32.mrb[0].mxu0
  %410 = vmatprep.mubr.f32.mxu0 0.0
  %411 = vmatmul.mubr.f32.gmra.mrb[0].mxu0 %v211
  %v412 = vpop.f32.mrb[0].mxu0
  %v413 = vadd.f32 0.0, %v412
  %v414 = vpop.f32.mrb[0].mxu0
  %415 = vmatprep.mubr.f32.mxu0 0.0
  %416 = vmatmul.mubr.f32.gmra.mrb[0].mxu0 %v214
  %v417 = vpop.f32.mrb[0].mxu0
  %v418 = vadd.f32 0.0, %v417
  %v419 = vpop.f32.mrb[0].mxu0
  %420 = vmatprep.mubr.f32.mxu0 0.0
  %421 = vmatmul.mubr.f32.gmra.mrb[0].mxu0 %v217
  %v422 = vpop.f32.mrb[0].mxu0
  %v423 = vadd.f32 0.0, %v422
  %v424 = vpop.f32.mrb[0].mxu0
  %425 = vmatprep.mubr.f32.mxu0 0.0
  %426 = vmatmul.mubr.f32.gmra.mrb[0].mxu0 %v220
  %v427 = vpop.f32.mrb[0].mxu0
  %v428 = vadd.f32 0.0, %v427
  %v429 = vpop.f32.mrb[0].mxu0
  %430 = vmatprep.mubr.f32.mxu0 0.0
  %431 = vmatmul.mubr.f32.gmra.mrb[0].mxu0 %v223
  %v432 = vpop.f32.mrb[0].mxu0
  %v433 = vadd.f32 0.0, %v432
  %v434 = vpop.f32.mrb[0].mxu0
  %435 = vmatprep.mubr.f32.mxu0 0.0
  %436 = vmatmul.mubr.f32.gmra.mrb[0].mxu0 %v226
  %v437 = vpop.f32.mrb[0].mxu0
  %v438 = vadd.f32 0.0, %v437
  %v439 = vpop.f32.mrb[0].mxu0
  %440 = vmatprep.mubr.f32.mxu0 0.0
  %441 = vmatmul.mubr.f32.gmra.mrb[0].mxu0 %v229
  %v442 = vpop.f32.mrb[0].mxu0
  %v443 = vadd.f32 0.0, %v442
  %v444 = vpop.f32.mrb[0].mxu0
  %445 = vmatprep.mubr.f32.mxu0 0.0
  %446 = vmatmul.mubr.f32.gmra.mrb[0].mxu0 %v232
  %v447 = vpop.f32.mrb[0].mxu0
  %v448 = vadd.f32 0.0, %v447
  %v449 = vpop.f32.mrb[0].mxu0
  %450 = vmatprep.mubr.f32.mxu0 0.0
  %451 = vmatmul.mubr.f32.gmra.mrb[0].mxu0 %v235
  %v452 = vpop.f32.mrb[0].mxu0
  %v453 = vadd.f32 0.0, %v452
  %v454 = vpop.f32.mrb[0].mxu0
  %455 = vmatprep.mubr.f32.mxu0 0.0
  %456 = vmatmul.mubr.f32.gmra.mrb[0].mxu0 %v238
  %v457 = vpop.f32.mrb[0].mxu0
  %v458 = vadd.f32 0.0, %v457
  %v459 = vpop.f32.mrb[0].mxu0
  %460 = vmatprep.mubr.f32.mxu0 0.0
  %461 = vmatmul.mubr.f32.gmra.mrb[0].mxu0 %v241
  %v462 = vpop.f32.mrb[0].mxu0
  %v463 = vadd.f32 0.0, %v462
  %v464 = vpop.f32.mrb[0].mxu0
  %465 = vmatprep.mubr.f32.mxu0 0.0
  %466 = vmatmul.mubr.f32.gmra.mrb[0].mxu0 %v244
  %v467 = vpop.f32.mrb[0].mxu0
  %v468 = vadd.f32 0.0, %v467
  %v469 = vpop.f32.mrb[0].mxu0
  %470 = vmatprep.mubr.f32.mxu0 0.0
  %471 = vmatmul.mubr.f32.gmra.mrb[0].mxu0 %v247
  %v472 = vpop.f32.mrb[0].mxu0
  %v473 = vadd.f32 0.0, %v472
  %v474 = vpop.f32.mrb[0].mxu0
  %475 = vmatprep.mubr.f32.mxu0 0.0
  %476 = vmatmul.mubr.f32.gmra.mrb[0].mxu0 %v250
  %v477 = vpop.f32.mrb[0].mxu0
  %v478 = vadd.f32 0.0, %v477
  %v479 = vpop.f32.mrb[0].mxu0
  %480 = vdwg.mxu0
  %v482 = vsel %vm155, %v42, 0
  %v485 = vsel %vm155, %v43, 0
  %v488 = vsel %vm155, %v44, 0
  %v491 = vsel %vm155, %v45, 0
  %v494 = vsel %vm155, %v46, 0
  %v497 = vsel %vm155, %v47, 0
  %v500 = vsel %vm155, %v48, 0
  %v503 = vsel %vm155, %v49, 0
  %v506 = vsel %vm155, %v50, 0
  %v509 = vsel %vm155, %v51, 0
  %v512 = vsel %vm155, %v52, 0
  %v515 = vsel %vm155, %v53, 0
  %v518 = vsel %vm155, %v54, 0
  %v521 = vsel %vm155, %v55, 0
  %v524 = vsel %vm155, %v56, 0
  %v527 = vsel %vm155, %v57, 0
  %v530 = vsel %vm155, %v58, 0
  %v533 = vsel %vm155, %v59, 0
  %v536 = vsel %vm155, %v60, 0
  %v539 = vsel %vm155, %v61, 0
  %v542 = vsel %vm155, %v62, 0
  %v545 = vsel %vm155, %v63, 0
  %v548 = vsel %vm155, %v64, 0
  %v551 = vsel %vm155, %v65, 0
  %v554 = vsel %vm155, %v66, 0
  %v557 = vsel %vm155, %v67, 0
  %v560 = vsel %vm155, %v68, 0
  %v563 = vsel %vm155, %v69, 0
  %v566 = vsel %vm155, %v70, 0
  %v569 = vsel %vm155, %v71, 0
  %v572 = vsel %vm155, %v72, 0
  %v575 = vsel %vm155, %v73, 0
  %v578 = vsel %vm252, %v152, 0
  %580 = vmatprep.subr.mxu0 0.0
  %581 = vmatpush1.msra.mxu0 %v578
  %582 = vmatprep.subr.mxu0 0.0
  %583 = vmatpush1.msra.mxu0 0.0
  %584 = vmatprep.subr.mxu0 0.0
  %585 = vmatpush1.msra.mxu0 0.0
  %586 = vmatprep.subr.mxu0 0.0
  %587 = vmatpush1.msra.mxu0 0.0
  %588 = vmatprep.subr.mxu0 0.0
  %589 = vmatpush1.msra.mxu0 0.0
  %590 = vmatprep.subr.mxu0 0.0
  %591 = vmatpush1.msra.mxu0 0.0
  %592 = vmatprep.subr.mxu0 0.0
  %593 = vmatpush1.msra.mxu0 0.0
  %594 = vmatprep.subr.mxu0 0.0
  %595 = vmatpush1.msra.mxu0 0.0
  %596 = vmatprep.subr.mxu0 0.0
  %597 = vmatpush1.msra.mxu0 0.0
  %598 = vmatprep.subr.mxu0 0.0
  %599 = vmatpush1.msra.mxu0 0.0
  %600 = vmatprep.subr.mxu0 0.0
  %601 = vmatpush1.msra.mxu0 0.0
  %602 = vmatprep.subr.mxu0 0.0
  %603 = vmatpush1.msra.mxu0 0.0
  %604 = vmatprep.subr.mxu0 0.0
  %605 = vmatpush1.msra.mxu0 0.0
  %606 = vmatprep.subr.mxu0 0.0
  %607 = vmatpush1.msra.mxu0 0.0
  %608 = vmatprep.subr.mxu0 0.0
  %609 = vmatpush1.msra.mxu0 0.0
  %610 = vmatprep.subr.mxu0 0.0
  %611 = vmatpush1.msra.mxu0 0.0
  %612 = vmatprep.subr.mxu0 0.0
  %613 = vmatpush1.msra.mxu0 0.0
  %614 = vmatprep.subr.mxu0 0.0
  %615 = vmatpush1.msra.mxu0 0.0
  %616 = vmatprep.subr.mxu0 0.0
  %617 = vmatpush1.msra.mxu0 0.0
  %618 = vmatprep.subr.mxu0 0.0
  %619 = vmatpush1.msra.mxu0 0.0
  %620 = vmatprep.subr.mxu0 0.0
  %621 = vmatpush1.msra.mxu0 0.0
  %622 = vmatprep.subr.mxu0 0.0
  %623 = vmatpush1.msra.mxu0 0.0
  %624 = vmatprep.subr.mxu0 0.0
  %625 = vmatpush1.msra.mxu0 0.0
  %626 = vmatprep.subr.mxu0 0.0
  %627 = vmatpush1.msra.mxu0 0.0
  %628 = vmatprep.subr.mxu0 0.0
  %629 = vmatpush1.msra.mxu0 0.0
  %630 = vmatprep.subr.mxu0 0.0
  %631 = vmatpush1.msra.mxu0 0.0
  %632 = vmatprep.subr.mxu0 0.0
  %633 = vmatpush1.msra.mxu0 0.0
  %634 = vmatprep.subr.mxu0 0.0
  %635 = vmatpush1.msra.mxu0 0.0
  %636 = vmatprep.subr.mxu0 0.0
  %637 = vmatpush1.msra.mxu0 0.0
  %638 = vmatprep.subr.mxu0 0.0
  %639 = vmatpush1.msra.mxu0 0.0
  %640 = vmatprep.subr.mxu0 0.0
  %641 = vmatpush1.msra.mxu0 0.0
  %642 = vmatprep.subr.mxu0 0.0
  %643 = vmatpush1.msra.mxu0 0.0
  %644 = vmatprep.mubr.f32.mxu0 0.0
  %645 = vmatmul.mubr.f32.gmra.mrb[0].mxu0 %v482
  %v646 = vpop.f32.mrb[0].mxu0
  %v647 = vadd.f32 %v323, %v646
  %v648 = vpop.f32.mrb[0].mxu0
  %649 = vmatprep.mubr.f32.mxu0 0.0
  %650 = vmatmul.mubr.f32.gmra.mrb[0].mxu0 %v485
  %v651 = vpop.f32.mrb[0].mxu0
  %v652 = vadd.f32 %v328, %v651
  %v653 = vpop.f32.mrb[0].mxu0
  %654 = vmatprep.mubr.f32.mxu0 0.0
  %655 = vmatmul.mubr.f32.gmra.mrb[0].mxu0 %v488
  %v656 = vpop.f32.mrb[0].mxu0
  %v657 = vadd.f32 %v333, %v656
  %v658 = vpop.f32.mrb[0].mxu0
  %659 = vmatprep.mubr.f32.mxu0 0.0
  %660 = vmatmul.mubr.f32.gmra.mrb[0].mxu0 %v491
  %v661 = vpop.f32.mrb[0].mxu0
  %v662 = vadd.f32 %v338, %v661
  %v663 = vpop.f32.mrb[0].mxu0
  %664 = vmatprep.mubr.f32.mxu0 0.0
  %665 = vmatmul.mubr.f32.gmra.mrb[0].mxu0 %v494
  %v666 = vpop.f32.mrb[0].mxu0
  %v667 = vadd.f32 %v343, %v666
  %v668 = vpop.f32.mrb[0].mxu0
  %669 = vmatprep.mubr.f32.mxu0 0.0
  %670 = vmatmul.mubr.f32.gmra.mrb[0].mxu0 %v497
  %v671 = vpop.f32.mrb[0].mxu0
  %v672 = vadd.f32 %v348, %v671
  %v673 = vpop.f32.mrb[0].mxu0
  %674 = vmatprep.mubr.f32.mxu0 0.0
  %675 = vmatmul.mubr.f32.gmra.mrb[0].mxu0 %v500
  %v676 = vpop.f32.mrb[0].mxu0
  %v677 = vadd.f32 %v353, %v676
  %v678 = vpop.f32.mrb[0].mxu0
  %679 = vmatprep.mubr.f32.mxu0 0.0
  %680 = vmatmul.mubr.f32.gmra.mrb[0].mxu0 %v503
  %v681 = vpop.f32.mrb[0].mxu0
  %v682 = vadd.f32 %v358, %v681
  %v683 = vpop.f32.mrb[0].mxu0
  %684 = vmatprep.mubr.f32.mxu0 0.0
  %685 = vmatmul.mubr.f32.gmra.mrb[0].mxu0 %v506
  %v686 = vpop.f32.mrb[0].mxu0
  %v687 = vadd.f32 %v363, %v686
  %v688 = vpop.f32.mrb[0].mxu0
  %689 = vmatprep.mubr.f32.mxu0 0.0
  %690 = vmatmul.mubr.f32.gmra.mrb[0].mxu0 %v509
  %v691 = vpop.f32.mrb[0].mxu0
  %v692 = vadd.f32 %v368, %v691
  %v693 = vpop.f32.mrb[0].mxu0
  %694 = vmatprep.mubr.f32.mxu0 0.0
  %695 = vmatmul.mubr.f32.gmra.mrb[0].mxu0 %v512
  %v696 = vpop.f32.mrb[0].mxu0
  %v697 = vadd.f32 %v373, %v696
  %v698 = vpop.f32.mrb[0].mxu0
  %699 = vmatprep.mubr.f32.mxu0 0.0
  %700 = vmatmul.mubr.f32.gmra.mrb[0].mxu0 %v515
  %v701 = vpop.f32.mrb[0].mxu0
  %v702 = vadd.f32 %v378, %v701
  %v703 = vpop.f32.mrb[0].mxu0
  %704 = vmatprep.mubr.f32.mxu0 0.0
  %705 = vmatmul.mubr.f32.gmra.mrb[0].mxu0 %v518
  %v706 = vpop.f32.mrb[0].mxu0
  %v707 = vadd.f32 %v383, %v706
  %v708 = vpop.f32.mrb[0].mxu0
  %709 = vmatprep.mubr.f32.mxu0 0.0
  %710 = vmatmul.mubr.f32.gmra.mrb[0].mxu0 %v521
  %v711 = vpop.f32.mrb[0].mxu0
  %v712 = vadd.f32 %v388, %v711
  %v713 = vpop.f32.mrb[0].mxu0
  %714 = vmatprep.mubr.f32.mxu0 0.0
  %715 = vmatmul.mubr.f32.gmra.mrb[0].mxu0 %v524
  %v716 = vpop.f32.mrb[0].mxu0
  %v717 = vadd.f32 %v393, %v716
  %v718 = vpop.f32.mrb[0].mxu0
  %719 = vmatprep.mubr.f32.mxu0 0.0
  %720 = vmatmul.mubr.f32.gmra.mrb[0].mxu0 %v527
  %v721 = vpop.f32.mrb[0].mxu0
  %v722 = vadd.f32 %v398, %v721
  %v723 = vpop.f32.mrb[0].mxu0
  %724 = vmatprep.mubr.f32.mxu0 0.0
  %725 = vmatmul.mubr.f32.gmra.mrb[0].mxu0 %v530
  %v726 = vpop.f32.mrb[0].mxu0
  %v727 = vadd.f32 %v403, %v726
  %v728 = vpop.f32.mrb[0].mxu0
  %729 = vmatprep.mubr.f32.mxu0 0.0
  %730 = vmatmul.mubr.f32.gmra.mrb[0].mxu0 %v533
  %v731 = vpop.f32.mrb[0].mxu0
  %v732 = vadd.f32 %v408, %v731
  %v733 = vpop.f32.mrb[0].mxu0
  %734 = vmatprep.mubr.f32.mxu0 0.0
  %735 = vmatmul.mubr.f32.gmra.mrb[0].mxu0 %v536
  %v736 = vpop.f32.mrb[0].mxu0
  %v737 = vadd.f32 %v413, %v736
  %v738 = vpop.f32.mrb[0].mxu0
  %739 = vmatprep.mubr.f32.mxu0 0.0
  %740 = vmatmul.mubr.f32.gmra.mrb[0].mxu0 %v539
  %v741 = vpop.f32.mrb[0].mxu0
  %v742 = vadd.f32 %v418, %v741
  %v743 = vpop.f32.mrb[0].mxu0
  %744 = vmatprep.mubr.f32.mxu0 0.0
  %745 = vmatmul.mubr.f32.gmra.mrb[0].mxu0 %v542
  %v746 = vpop.f32.mrb[0].mxu0
  %v747 = vadd.f32 %v423, %v746
  %v748 = vpop.f32.mrb[0].mxu0
  %749 = vmatprep.mubr.f32.mxu0 0.0
  %750 = vmatmul.mubr.f32.gmra.mrb[0].mxu0 %v545
  %v751 = vpop.f32.mrb[0].mxu0
  %v752 = vadd.f32 %v428, %v751
  %v753 = vpop.f32.mrb[0].mxu0
  %754 = vmatprep.mubr.f32.mxu0 0.0
  %755 = vmatmul.mubr.f32.gmra.mrb[0].mxu0 %v548
  %v756 = vpop.f32.mrb[0].mxu0
  %v757 = vadd.f32 %v433, %v756
  %v758 = vpop.f32.mrb[0].mxu0
  %759 = vmatprep.mubr.f32.mxu0 0.0
  %760 = vmatmul.mubr.f32.gmra.mrb[0].mxu0 %v551
  %v761 = vpop.f32.mrb[0].mxu0
  %v762 = vadd.f32 %v438, %v761
  %v763 = vpop.f32.mrb[0].mxu0
  %764 = vmatprep.mubr.f32.mxu0 0.0
  %765 = vmatmul.mubr.f32.gmra.mrb[0].mxu0 %v554
  %v766 = vpop.f32.mrb[0].mxu0
  %v767 = vadd.f32 %v443, %v766
  %v768 = vpop.f32.mrb[0].mxu0
  %769 = vmatprep.mubr.f32.mxu0 0.0
  %770 = vmatmul.mubr.f32.gmra.mrb[0].mxu0 %v557
  %v771 = vpop.f32.mrb[0].mxu0
  %v772 = vadd.f32 %v448, %v771
  %v773 = vpop.f32.mrb[0].mxu0
  %774 = vmatprep.mubr.f32.mxu0 0.0
  %775 = vmatmul.mubr.f32.gmra.mrb[0].mxu0 %v560
  %v776 = vpop.f32.mrb[0].mxu0
  %v777 = vadd.f32 %v453, %v776
  %v778 = vpop.f32.mrb[0].mxu0
  %779 = vmatprep.mubr.f32.mxu0 0.0
  %780 = vmatmul.mubr.f32.gmra.mrb[0].mxu0 %v563
  %v781 = vpop.f32.mrb[0].mxu0
  %v782 = vadd.f32 %v458, %v781
  %v783 = vpop.f32.mrb[0].mxu0
  %784 = vmatprep.mubr.f32.mxu0 0.0
  %785 = vmatmul.mubr.f32.gmra.mrb[0].mxu0 %v566
  %v786 = vpop.f32.mrb[0].mxu0
  %v787 = vadd.f32 %v463, %v786
  %v788 = vpop.f32.mrb[0].mxu0
  %789 = vmatprep.mubr.f32.mxu0 0.0
  %790 = vmatmul.mubr.f32.gmra.mrb[0].mxu0 %v569
  %v791 = vpop.f32.mrb[0].mxu0
  %v792 = vadd.f32 %v468, %v791
  %v793 = vpop.f32.mrb[0].mxu0
  %794 = vmatprep.mubr.f32.mxu0 0.0
  %795 = vmatmul.mubr.f32.gmra.mrb[0].mxu0 %v572
  %v796 = vpop.f32.mrb[0].mxu0
  %v797 = vadd.f32 %v473, %v796
  %v798 = vpop.f32.mrb[0].mxu0
  %799 = vmatprep.mubr.f32.mxu0 0.0
  %800 = vmatmul.mubr.f32.gmra.mrb[0].mxu0 %v575
  %v801 = vpop.f32.mrb[0].mxu0
  %v802 = vadd.f32 %v478, %v801
  %v803 = vpop.f32.mrb[0].mxu0
  %804 = vdwg.mxu0
  %s805 = scalar_lea.vmem %s1, 16
  %v806 = vld [vmem:[%s805] sm:$0x3f]
  %v808 = vsel %vm155, %v116, 0
  %v811 = vsel %vm155, %v117, 0
  %v814 = vsel %vm155, %v118, 0
  %v817 = vsel %vm155, %v119, 0
  %v820 = vsel %vm155, %v120, 0
  %v823 = vsel %vm155, %v121, 0
  %v826 = vsel %vm155, %v122, 0
  %v829 = vsel %vm155, %v123, 0
  %v832 = vsel %vm155, %v124, 0
  %v835 = vsel %vm155, %v125, 0
  %v838 = vsel %vm155, %v126, 0
  %v841 = vsel %vm155, %v127, 0
  %v844 = vsel %vm155, %v128, 0
  %v847 = vsel %vm155, %v129, 0
  %v850 = vsel %vm155, %v130, 0
  %v853 = vsel %vm155, %v131, 0
  %v856 = vsel %vm155, %v132, 0
  %v859 = vsel %vm155, %v133, 0
  %v862 = vsel %vm155, %v134, 0
  %v865 = vsel %vm155, %v135, 0
  %v868 = vsel %vm155, %v136, 0
  %v871 = vsel %vm155, %v137, 0
  %v874 = vsel %vm155, %v138, 0
  %v877 = vsel %vm155, %v139, 0
  %v880 = vsel %vm155, %v140, 0
  %v883 = vsel %vm155, %v141, 0
  %v886 = vsel %vm155, %v142, 0
  %v889 = vsel %vm155, %v143, 0
  %v892 = vsel %vm155, %v144, 0
  %v895 = vsel %vm155, %v145, 0
  %v898 = vsel %vm155, %v146, 0
  %v901 = vsel %vm155, %v147, 0
  %v904 = vsel %vm252, %v806, 0
  %906 = vmatprep.subr.mxu0 0.0
  %907 = vmatpush1.msra.mxu0 %v904
  %908 = vmatprep.subr.mxu0 0.0
  %909 = vmatpush1.msra.mxu0 0.0
  %910 = vmatprep.subr.mxu0 0.0
  %911 = vmatpush1.msra.mxu0 0.0
  %912 = vmatprep.subr.mxu0 0.0
  %913 = vmatpush1.msra.mxu0 0.0
  %914 = vmatprep.subr.mxu0 0.0
  %915 = vmatpush1.msra.mxu0 0.0
  %916 = vmatprep.subr.mxu0 0.0
  %917 = vmatpush1.msra.mxu0 0.0
  %918 = vmatprep.subr.mxu0 0.0
  %919 = vmatpush1.msra.mxu0 0.0
  %920 = vmatprep.subr.mxu0 0.0
  %921 = vmatpush1.msra.mxu0 0.0
  %922 = vmatprep.subr.mxu0 0.0
  %923 = vmatpush1.msra.mxu0 0.0
  %924 = vmatprep.subr.mxu0 0.0
  %925 = vmatpush1.msra.mxu0 0.0
  %926 = vmatprep.subr.mxu0 0.0
  %927 = vmatpush1.msra.mxu0 0.0
  %928 = vmatprep.subr.mxu0 0.0
  %929 = vmatpush1.msra.mxu0 0.0
  %930 = vmatprep.subr.mxu0 0.0
  %931 = vmatpush1.msra.mxu0 0.0
  %932 = vmatprep.subr.mxu0 0.0
  %933 = vmatpush1.msra.mxu0 0.0
  %934 = vmatprep.subr.mxu0 0.0
  %935 = vmatpush1.msra.mxu0 0.0
  %936 = vmatprep.subr.mxu0 0.0
  %937 = vmatpush1.msra.mxu0 0.0
  %938 = vmatprep.subr.mxu0 0.0
  %939 = vmatpush1.msra.mxu0 0.0
  %940 = vmatprep.subr.mxu0 0.0
  %941 = vmatpush1.msra.mxu0 0.0
  %942 = vmatprep.subr.mxu0 0.0
  %943 = vmatpush1.msra.mxu0 0.0
  %944 = vmatprep.subr.mxu0 0.0
  %945 = vmatpush1.msra.mxu0 0.0
  %946 = vmatprep.subr.mxu0 0.0
  %947 = vmatpush1.msra.mxu0 0.0
  %948 = vmatprep.subr.mxu0 0.0
  %949 = vmatpush1.msra.mxu0 0.0
  %950 = vmatprep.subr.mxu0 0.0
  %951 = vmatpush1.msra.mxu0 0.0
  %952 = vmatprep.subr.mxu0 0.0
  %953 = vmatpush1.msra.mxu0 0.0
  %954 = vmatprep.subr.mxu0 0.0
  %955 = vmatpush1.msra.mxu0 0.0
  %956 = vmatprep.subr.mxu0 0.0
  %957 = vmatpush1.msra.mxu0 0.0
  %958 = vmatprep.subr.mxu0 0.0
  %959 = vmatpush1.msra.mxu0 0.0
  %960 = vmatprep.subr.mxu0 0.0
  %961 = vmatpush1.msra.mxu0 0.0
  %962 = vmatprep.subr.mxu0 0.0
  %963 = vmatpush1.msra.mxu0 0.0
  %964 = vmatprep.subr.mxu0 0.0
  %965 = vmatpush1.msra.mxu0 0.0
  %966 = vmatprep.subr.mxu0 0.0
  %967 = vmatpush1.msra.mxu0 0.0
  %968 = vmatprep.subr.mxu0 0.0
  %969 = vmatpush1.msra.mxu0 0.0
  %970 = vmatprep.mubr.f32.mxu0 0.0
  %971 = vmatmul.mubr.f32.gmra.mrb[0].mxu0 %v808
  %v972 = vpop.f32.mrb[0].mxu0
  %v973 = vadd.f32 0.0, %v972
  %v974 = vpop.f32.mrb[0].mxu0
  %975 = vmatprep.mubr.f32.mxu0 0.0
  %976 = vmatmul.mubr.f32.gmra.mrb[0].mxu0 %v811
  %v977 = vpop.f32.mrb[0].mxu0
  %v978 = vadd.f32 0.0, %v977
  %v979 = vpop.f32.mrb[0].mxu0
  %980 = vmatprep.mubr.f32.mxu0 0.0
  %981 = vmatmul.mubr.f32.gmra.mrb[0].mxu0 %v814
  %v982 = vpop.f32.mrb[0].mxu0
  %v983 = vadd.f32 0.0, %v982
  %v984 = vpop.f32.mrb[0].mxu0
  %985 = vmatprep.mubr.f32.mxu0 0.0
  %986 = vmatmul.mubr.f32.gmra.mrb[0].mxu0 %v817
  %v987 = vpop.f32.mrb[0].mxu0
  %v988 = vadd.f32 0.0, %v987
  %v989 = vpop.f32.mrb[0].mxu0
  %990 = vmatprep.mubr.f32.mxu0 0.0
  %991 = vmatmul.mubr.f32.gmra.mrb[0].mxu0 %v820
  %v992 = vpop.f32.mrb[0].mxu0
  %v993 = vadd.f32 0.0, %v992
  %v994 = vpop.f32.mrb[0].mxu0
  %995 = vmatprep.mubr.f32.mxu0 0.0
  %996 = vmatmul.mubr.f32.gmra.mrb[0].mxu0 %v823
  %v997 = vpop.f32.mrb[0].mxu0
  %v998 = vadd.f32 0.0, %v997
  %v999 = vpop.f32.mrb[0].mxu0
  %1000 = vmatprep.mubr.f32.mxu0 0.0
  %1001 = vmatmul.mubr.f32.gmra.mrb[0].mxu0 %v826
  %v1002 = vpop.f32.mrb[0].mxu0
  %v1003 = vadd.f32 0.0, %v1002
  %v1004 = vpop.f32.mrb[0].mxu0
  %1005 = vmatprep.mubr.f32.mxu0 0.0
  %1006 = vmatmul.mubr.f32.gmra.mrb[0].mxu0 %v829
  %v1007 = vpop.f32.mrb[0].mxu0
  %v1008 = vadd.f32 0.0, %v1007
  %v1009 = vpop.f32.mrb[0].mxu0
  %1010 = vmatprep.mubr.f32.mxu0 0.0
  %1011 = vmatmul.mubr.f32.gmra.mrb[0].mxu0 %v832
  %v1012 = vpop.f32.mrb[0].mxu0
  %v1013 = vadd.f32 0.0, %v1012
  %v1014 = vpop.f32.mrb[0].mxu0
  %1015 = vmatprep.mubr.f32.mxu0 0.0
  %1016 = vmatmul.mubr.f32.gmra.mrb[0].mxu0 %v835
  %v1017 = vpop.f32.mrb[0].mxu0
  %v1018 = vadd.f32 0.0, %v1017
  %v1019 = vpop.f32.mrb[0].mxu0
  %1020 = vmatprep.mubr.f32.mxu0 0.0
  %1021 = vmatmul.mubr.f32.gmra.mrb[0].mxu0 %v838
  %v1022 = vpop.f32.mrb[0].mxu0
  %v1023 = vadd.f32 0.0, %v1022
  %v1024 = vpop.f32.mrb[0].mxu0
  %1025 = vmatprep.mubr.f32.mxu0 0.0
  %1026 = vmatmul.mubr.f32.gmra.mrb[0].mxu0 %v841
  %v1027 = vpop.f32.mrb[0].mxu0
  %v1028 = vadd.f32 0.0, %v1027
  %v1029 = vpop.f32.mrb[0].mxu0
  %1030 = vmatprep.mubr.f32.mxu0 0.0
  %1031 = vmatmul.mubr.f32.gmra.mrb[0].mxu0 %v844
  %v1032 = vpop.f32.mrb[0].mxu0
  %v1033 = vadd.f32 0.0, %v1032
  %v1034 = vpop.f32.mrb[0].mxu0
  %1035 = vmatprep.mubr.f32.mxu0 0.0
  %1036 = vmatmul.mubr.f32.gmra.mrb[0].mxu0 %v847
  %v1037 = vpop.f32.mrb[0].mxu0
  %v1038 = vadd.f32 0.0, %v1037
  %v1039 = vpop.f32.mrb[0].mxu0
  %1040 = vmatprep.mubr.f32.mxu0 0.0
  %1041 = vmatmul.mubr.f32.gmra.mrb[0].mxu0 %v850
  %v1042 = vpop.f32.mrb[0].mxu0
  %v1043 = vadd.f32 0.0, %v1042
  %v1044 = vpop.f32.mrb[0].mxu0
  %1045 = vmatprep.mubr.f32.mxu0 0.0
  %1046 = vmatmul.mubr.f32.gmra.mrb[0].mxu0 %v853
  %v1047 = vpop.f32.mrb[0].mxu0
  %v1048 = vadd.f32 0.0, %v1047
  %v1049 = vpop.f32.mrb[0].mxu0
  %1050 = vmatprep.mubr.f32.mxu0 0.0
  %1051 = vmatmul.mubr.f32.gmra.mrb[0].mxu0 %v856
  %v1052 = vpop.f32.mrb[0].mxu0
  %v1053 = vadd.f32 0.0, %v1052
  %v1054 = vpop.f32.mrb[0].mxu0
  %1055 = vmatprep.mubr.f32.mxu0 0.0
  %1056 = vmatmul.mubr.f32.gmra.mrb[0].mxu0 %v859
  %v1057 = vpop.f32.mrb[0].mxu0
  %v1058 = vadd.f32 0.0, %v1057
  %v1059 = vpop.f32.mrb[0].mxu0
  %1060 = vmatprep.mubr.f32.mxu0 0.0
  %1061 = vmatmul.mubr.f32.gmra.mrb[0].mxu0 %v862
  %v1062 = vpop.f32.mrb[0].mxu0
  %v1063 = vadd.f32 0.0, %v1062
  %v1064 = vpop.f32.mrb[0].mxu0
  %1065 = vmatprep.mubr.f32.mxu0 0.0
  %1066 = vmatmul.mubr.f32.gmra.mrb[0].mxu0 %v865
  %v1067 = vpop.f32.mrb[0].mxu0
  %v1068 = vadd.f32 0.0, %v1067
  %v1069 = vpop.f32.mrb[0].mxu0
  %1070 = vmatprep.mubr.f32.mxu0 0.0
  %1071 = vmatmul.mubr.f32.gmra.mrb[0].mxu0 %v868
  %v1072 = vpop.f32.mrb[0].mxu0
  %v1073 = vadd.f32 0.0, %v1072
  %v1074 = vpop.f32.mrb[0].mxu0
  %1075 = vmatprep.mubr.f32.mxu0 0.0
  %1076 = vmatmul.mubr.f32.gmra.mrb[0].mxu0 %v871
  %v1077 = vpop.f32.mrb[0].mxu0
  %v1078 = vadd.f32 0.0, %v1077
  %v1079 = vpop.f32.mrb[0].mxu0
  %1080 = vmatprep.mubr.f32.mxu0 0.0
  %1081 = vmatmul.mubr.f32.gmra.mrb[0].mxu0 %v874
  %v1082 = vpop.f32.mrb[0].mxu0
  %v1083 = vadd.f32 0.0, %v1082
  %v1084 = vpop.f32.mrb[0].mxu0
  %1085 = vmatprep.mubr.f32.mxu0 0.0
  %1086 = vmatmul.mubr.f32.gmra.mrb[0].mxu0 %v877
  %v1087 = vpop.f32.mrb[0].mxu0
  %v1088 = vadd.f32 0.0, %v1087
  %v1089 = vpop.f32.mrb[0].mxu0
  %1090 = vmatprep.mubr.f32.mxu0 0.0
  %1091 = vmatmul.mubr.f32.gmra.mrb[0].mxu0 %v880
  %v1092 = vpop.f32.mrb[0].mxu0
  %v1093 = vadd.f32 0.0, %v1092
  %v1094 = vpop.f32.mrb[0].mxu0
  %1095 = vmatprep.mubr.f32.mxu0 0.0
  %1096 = vmatmul.mubr.f32.gmra.mrb[0].mxu0 %v883
  %v1097 = vpop.f32.mrb[0].mxu0
  %v1098 = vadd.f32 0.0, %v1097
  %v1099 = vpop.f32.mrb[0].mxu0
  %1100 = vmatprep.mubr.f32.mxu0 0.0
  %1101 = vmatmul.mubr.f32.gmra.mrb[0].mxu0 %v886
  %v1102 = vpop.f32.mrb[0].mxu0
  %v1103 = vadd.f32 0.0, %v1102
  %v1104 = vpop.f32.mrb[0].mxu0
  %1105 = vmatprep.mubr.f32.mxu0 0.0
  %1106 = vmatmul.mubr.f32.gmra.mrb[0].mxu0 %v889
  %v1107 = vpop.f32.mrb[0].mxu0
  %v1108 = vadd.f32 0.0, %v1107
  %v1109 = vpop.f32.mrb[0].mxu0
  %1110 = vmatprep.mubr.f32.mxu0 0.0
  %1111 = vmatmul.mubr.f32.gmra.mrb[0].mxu0 %v892
  %v1112 = vpop.f32.mrb[0].mxu0
  %v1113 = vadd.f32 0.0, %v1112
  %v1114 = vpop.f32.mrb[0].mxu0
  %1115 = vmatprep.mubr.f32.mxu0 0.0
  %1116 = vmatmul.mubr.f32.gmra.mrb[0].mxu0 %v895
  %v1117 = vpop.f32.mrb[0].mxu0
  %v1118 = vadd.f32 0.0, %v1117
  %v1119 = vpop.f32.mrb[0].mxu0
  %1120 = vmatprep.mubr.f32.mxu0 0.0
  %1121 = vmatmul.mubr.f32.gmra.mrb[0].mxu0 %v898
  %v1122 = vpop.f32.mrb[0].mxu0
  %v1123 = vadd.f32 0.0, %v1122
  %v1124 = vpop.f32.mrb[0].mxu0
  %1125 = vmatprep.mubr.f32.mxu0 0.0
  %1126 = vmatmul.mubr.f32.gmra.mrb[0].mxu0 %v901
  %v1127 = vpop.f32.mrb[0].mxu0
  %v1128 = vadd.f32 0.0, %v1127
  %v1129 = vpop.f32.mrb[0].mxu0
  %1130 = vdwg.mxu0
  %v1131 = vadd.f32 %v647, %v973
  %v1132 = vadd.f32 %v652, %v978
  %v1133 = vadd.f32 %v657, %v983
  %v1134 = vadd.f32 %v662, %v988
  %v1135 = vadd.f32 %v667, %v993
  %v1136 = vadd.f32 %v672, %v998
  %v1137 = vadd.f32 %v677, %v1003
  %v1138 = vadd.f32 %v682, %v1008
  %v1139 = vadd.f32 %v687, %v1013
  %v1140 = vadd.f32 %v692, %v1018
  %v1141 = vadd.f32 %v697, %v1023
  %v1142 = vadd.f32 %v702, %v1028
  %v1143 = vadd.f32 %v707, %v1033
  %v1144 = vadd.f32 %v712, %v1038
  %v1145 = vadd.f32 %v717, %v1043
  %v1146 = vadd.f32 %v722, %v1048
  %v1147 = vadd.f32 %v727, %v1053
  %v1148 = vadd.f32 %v732, %v1058
  %v1149 = vadd.f32 %v737, %v1063
  %v1150 = vadd.f32 %v742, %v1068
  %v1151 = vadd.f32 %v747, %v1073
  %v1152 = vadd.f32 %v752, %v1078
  %v1153 = vadd.f32 %v757, %v1083
  %v1154 = vadd.f32 %v762, %v1088
  %v1155 = vadd.f32 %v767, %v1093
  %v1156 = vadd.f32 %v772, %v1098
  %v1157 = vadd.f32 %v777, %v1103
  %v1158 = vadd.f32 %v782, %v1108
  %v1159 = vadd.f32 %v787, %v1113
  %v1160 = vadd.f32 %v792, %v1118
  %v1161 = vadd.f32 %v797, %v1123
  %v1162 = vadd.f32 %v802, %v1128
  %s1163 = scalar_lea.vmem %s1, 24
  %v1164 = vld [vmem:[%s1163] sm:$0x3f]
  %v1166 = vsel %vm155, %v74, 0
  %v1169 = vsel %vm155, %v75, 0
  %v1172 = vsel %vm252, %v1164, 0
  %1174 = vmatprep.subr.mxu0 0.0
  %1175 = vmatpush1.msra.mxu0 %v1172
  %1176 = vmatprep.subr.mxu0 0.0
  %1177 = vmatpush1.msra.mxu0 0.0
  %1178 = vmatprep.subr.mxu0 0.0
  %1179 = vmatpush1.msra.mxu0 0.0
  %1180 = vmatprep.subr.mxu0 0.0
  %1181 = vmatpush1.msra.mxu0 0.0
  %1182 = vmatprep.subr.mxu0 0.0
  %1183 = vmatpush1.msra.mxu0 0.0
  %1184 = vmatprep.subr.mxu0 0.0
  %1185 = vmatpush1.msra.mxu0 0.0
  %1186 = vmatprep.subr.mxu0 0.0
  %1187 = vmatpush1.msra.mxu0 0.0
  %1188 = vmatprep.subr.mxu0 0.0
  %1189 = vmatpush1.msra.mxu0 0.0
  %1190 = vmatprep.subr.mxu0 0.0
  %1191 = vmatpush1.msra.mxu0 0.0
  %1192 = vmatprep.subr.mxu0 0.0
  %1193 = vmatpush1.msra.mxu0 0.0
  %1194 = vmatprep.subr.mxu0 0.0
  %1195 = vmatpush1.msra.mxu0 0.0
  %1196 = vmatprep.subr.mxu0 0.0
  %1197 = vmatpush1.msra.mxu0 0.0
  %1198 = vmatprep.subr.mxu0 0.0
  %1199 = vmatpush1.msra.mxu0 0.0
  %1200 = vmatprep.subr.mxu0 0.0
  %1201 = vmatpush1.msra.mxu0 0.0
  %1202 = vmatprep.subr.mxu0 0.0
  %1203 = vmatpush1.msra.mxu0 0.0
  %1204 = vmatprep.subr.mxu0 0.0
  %1205 = vmatpush1.msra.mxu0 0.0
  %1206 = vmatprep.subr.mxu0 0.0
  %1207 = vmatpush1.msra.mxu0 0.0
  %1208 = vmatprep.subr.mxu0 0.0
  %1209 = vmatpush1.msra.mxu0 0.0
  %1210 = vmatprep.subr.mxu0 0.0
  %1211 = vmatpush1.msra.mxu0 0.0
  %1212 = vmatprep.subr.mxu0 0.0
  %1213 = vmatpush1.msra.mxu0 0.0
  %1214 = vmatprep.subr.mxu0 0.0
  %1215 = vmatpush1.msra.mxu0 0.0
  %1216 = vmatprep.subr.mxu0 0.0
  %1217 = vmatpush1.msra.mxu0 0.0
  %1218 = vmatprep.subr.mxu0 0.0
  %1219 = vmatpush1.msra.mxu0 0.0
  %1220 = vmatprep.subr.mxu0 0.0
  %1221 = vmatpush1.msra.mxu0 0.0
  %1222 = vmatprep.subr.mxu0 0.0
  %1223 = vmatpush1.msra.mxu0 0.0
  %1224 = vmatprep.subr.mxu0 0.0
  %1225 = vmatpush1.msra.mxu0 0.0
  %1226 = vmatprep.subr.mxu0 0.0
  %1227 = vmatpush1.msra.mxu0 0.0
  %1228 = vmatprep.subr.mxu0 0.0
  %1229 = vmatpush1.msra.mxu0 0.0
  %1230 = vmatprep.subr.mxu0 0.0
  %1231 = vmatpush1.msra.mxu0 0.0
  %1232 = vmatprep.subr.mxu0 0.0
  %1233 = vmatpush1.msra.mxu0 0.0
  %1234 = vmatprep.subr.mxu0 0.0
  %1235 = vmatpush1.msra.mxu0 0.0
  %1236 = vmatprep.subr.mxu0 0.0
  %1237 = vmatpush1.msra.mxu0 0.0
  %1238 = vmatprep.mubr.f32.mxu0 0.0
  %1239 = vmatmul.mubr.f32.gmra.mrb[0].mxu0 %v488
  %v1240 = vpop.f32.mrb[0].mxu0
  %v1241 = vadd.f32 0.0, %v1240
  %v1242 = vpop.f32.mrb[0].mxu0
  %1243 = vmatprep.mubr.f32.mxu0 0.0
  %1244 = vmatmul.mubr.f32.gmra.mrb[0].mxu0 %v491
  %v1245 = vpop.f32.mrb[0].mxu0
  %v1246 = vadd.f32 0.0, %v1245
  %v1247 = vpop.f32.mrb[0].mxu0
  %1248 = vmatprep.mubr.f32.mxu0 0.0
  %1249 = vmatmul.mubr.f32.gmra.mrb[0].mxu0 %v494
  %v1250 = vpop.f32.mrb[0].mxu0
  %v1251 = vadd.f32 0.0, %v1250
  %v1252 = vpop.f32.mrb[0].mxu0
  %1253 = vmatprep.mubr.f32.mxu0 0.0
  %1254 = vmatmul.mubr.f32.gmra.mrb[0].mxu0 %v497
  %v1255 = vpop.f32.mrb[0].mxu0
  %v1256 = vadd.f32 0.0, %v1255
  %v1257 = vpop.f32.mrb[0].mxu0
  %1258 = vmatprep.mubr.f32.mxu0 0.0
  %1259 = vmatmul.mubr.f32.gmra.mrb[0].mxu0 %v500
  %v1260 = vpop.f32.mrb[0].mxu0
  %v1261 = vadd.f32 0.0, %v1260
  %v1262 = vpop.f32.mrb[0].mxu0
  %1263 = vmatprep.mubr.f32.mxu0 0.0
  %1264 = vmatmul.mubr.f32.gmra.mrb[0].mxu0 %v503
  %v1265 = vpop.f32.mrb[0].mxu0
  %v1266 = vadd.f32 0.0, %v1265
  %v1267 = vpop.f32.mrb[0].mxu0
  %1268 = vmatprep.mubr.f32.mxu0 0.0
  %1269 = vmatmul.mubr.f32.gmra.mrb[0].mxu0 %v506
  %v1270 = vpop.f32.mrb[0].mxu0
  %v1271 = vadd.f32 0.0, %v1270
  %v1272 = vpop.f32.mrb[0].mxu0
  %1273 = vmatprep.mubr.f32.mxu0 0.0
  %1274 = vmatmul.mubr.f32.gmra.mrb[0].mxu0 %v509
  %v1275 = vpop.f32.mrb[0].mxu0
  %v1276 = vadd.f32 0.0, %v1275
  %v1277 = vpop.f32.mrb[0].mxu0
  %1278 = vmatprep.mubr.f32.mxu0 0.0
  %1279 = vmatmul.mubr.f32.gmra.mrb[0].mxu0 %v512
  %v1280 = vpop.f32.mrb[0].mxu0
  %v1281 = vadd.f32 0.0, %v1280
  %v1282 = vpop.f32.mrb[0].mxu0
  %1283 = vmatprep.mubr.f32.mxu0 0.0
  %1284 = vmatmul.mubr.f32.gmra.mrb[0].mxu0 %v515
  %v1285 = vpop.f32.mrb[0].mxu0
  %v1286 = vadd.f32 0.0, %v1285
  %v1287 = vpop.f32.mrb[0].mxu0
  %1288 = vmatprep.mubr.f32.mxu0 0.0
  %1289 = vmatmul.mubr.f32.gmra.mrb[0].mxu0 %v518
  %v1290 = vpop.f32.mrb[0].mxu0
  %v1291 = vadd.f32 0.0, %v1290
  %v1292 = vpop.f32.mrb[0].mxu0
  %1293 = vmatprep.mubr.f32.mxu0 0.0
  %1294 = vmatmul.mubr.f32.gmra.mrb[0].mxu0 %v521
  %v1295 = vpop.f32.mrb[0].mxu0
  %v1296 = vadd.f32 0.0, %v1295
  %v1297 = vpop.f32.mrb[0].mxu0
  %1298 = vmatprep.mubr.f32.mxu0 0.0
  %1299 = vmatmul.mubr.f32.gmra.mrb[0].mxu0 %v524
  %v1300 = vpop.f32.mrb[0].mxu0
  %v1301 = vadd.f32 0.0, %v1300
  %v1302 = vpop.f32.mrb[0].mxu0
  %1303 = vmatprep.mubr.f32.mxu0 0.0
  %1304 = vmatmul.mubr.f32.gmra.mrb[0].mxu0 %v527
  %v1305 = vpop.f32.mrb[0].mxu0
  %v1306 = vadd.f32 0.0, %v1305
  %v1307 = vpop.f32.mrb[0].mxu0
  %1308 = vmatprep.mubr.f32.mxu0 0.0
  %1309 = vmatmul.mubr.f32.gmra.mrb[0].mxu0 %v530
  %v1310 = vpop.f32.mrb[0].mxu0
  %v1311 = vadd.f32 0.0, %v1310
  %v1312 = vpop.f32.mrb[0].mxu0
  %1313 = vmatprep.mubr.f32.mxu0 0.0
  %1314 = vmatmul.mubr.f32.gmra.mrb[0].mxu0 %v533
  %v1315 = vpop.f32.mrb[0].mxu0
  %v1316 = vadd.f32 0.0, %v1315
  %v1317 = vpop.f32.mrb[0].mxu0
  %1318 = vmatprep.mubr.f32.mxu0 0.0
  %1319 = vmatmul.mubr.f32.gmra.mrb[0].mxu0 %v536
  %v1320 = vpop.f32.mrb[0].mxu0
  %v1321 = vadd.f32 0.0, %v1320
  %v1322 = vpop.f32.mrb[0].mxu0
  %1323 = vmatprep.mubr.f32.mxu0 0.0
  %1324 = vmatmul.mubr.f32.gmra.mrb[0].mxu0 %v539
  %v1325 = vpop.f32.mrb[0].mxu0
  %v1326 = vadd.f32 0.0, %v1325
  %v1327 = vpop.f32.mrb[0].mxu0
  %1328 = vmatprep.mubr.f32.mxu0 0.0
  %1329 = vmatmul.mubr.f32.gmra.mrb[0].mxu0 %v542
  %v1330 = vpop.f32.mrb[0].mxu0
  %v1331 = vadd.f32 0.0, %v1330
  %v1332 = vpop.f32.mrb[0].mxu0
  %1333 = vmatprep.mubr.f32.mxu0 0.0
  %1334 = vmatmul.mubr.f32.gmra.mrb[0].mxu0 %v545
  %v1335 = vpop.f32.mrb[0].mxu0
  %v1336 = vadd.f32 0.0, %v1335
  %v1337 = vpop.f32.mrb[0].mxu0
  %1338 = vmatprep.mubr.f32.mxu0 0.0
  %1339 = vmatmul.mubr.f32.gmra.mrb[0].mxu0 %v548
  %v1340 = vpop.f32.mrb[0].mxu0
  %v1341 = vadd.f32 0.0, %v1340
  %v1342 = vpop.f32.mrb[0].mxu0
  %1343 = vmatprep.mubr.f32.mxu0 0.0
  %1344 = vmatmul.mubr.f32.gmra.mrb[0].mxu0 %v551
  %v1345 = vpop.f32.mrb[0].mxu0
  %v1346 = vadd.f32 0.0, %v1345
  %v1347 = vpop.f32.mrb[0].mxu0
  %1348 = vmatprep.mubr.f32.mxu0 0.0
  %1349 = vmatmul.mubr.f32.gmra.mrb[0].mxu0 %v554
  %v1350 = vpop.f32.mrb[0].mxu0
  %v1351 = vadd.f32 0.0, %v1350
  %v1352 = vpop.f32.mrb[0].mxu0
  %1353 = vmatprep.mubr.f32.mxu0 0.0
  %1354 = vmatmul.mubr.f32.gmra.mrb[0].mxu0 %v557
  %v1355 = vpop.f32.mrb[0].mxu0
  %v1356 = vadd.f32 0.0, %v1355
  %v1357 = vpop.f32.mrb[0].mxu0
  %1358 = vmatprep.mubr.f32.mxu0 0.0
  %1359 = vmatmul.mubr.f32.gmra.mrb[0].mxu0 %v560
  %v1360 = vpop.f32.mrb[0].mxu0
  %v1361 = vadd.f32 0.0, %v1360
  %v1362 = vpop.f32.mrb[0].mxu0
  %1363 = vmatprep.mubr.f32.mxu0 0.0
  %1364 = vmatmul.mubr.f32.gmra.mrb[0].mxu0 %v563
  %v1365 = vpop.f32.mrb[0].mxu0
  %v1366 = vadd.f32 0.0, %v1365
  %v1367 = vpop.f32.mrb[0].mxu0
  %1368 = vmatprep.mubr.f32.mxu0 0.0
  %1369 = vmatmul.mubr.f32.gmra.mrb[0].mxu0 %v566
  %v1370 = vpop.f32.mrb[0].mxu0
  %v1371 = vadd.f32 0.0, %v1370
  %v1372 = vpop.f32.mrb[0].mxu0
  %1373 = vmatprep.mubr.f32.mxu0 0.0
  %1374 = vmatmul.mubr.f32.gmra.mrb[0].mxu0 %v569
  %v1375 = vpop.f32.mrb[0].mxu0
  %v1376 = vadd.f32 0.0, %v1375
  %v1377 = vpop.f32.mrb[0].mxu0
  %1378 = vmatprep.mubr.f32.mxu0 0.0
  %1379 = vmatmul.mubr.f32.gmra.mrb[0].mxu0 %v572
  %v1380 = vpop.f32.mrb[0].mxu0
  %v1381 = vadd.f32 0.0, %v1380
  %v1382 = vpop.f32.mrb[0].mxu0
  %1383 = vmatprep.mubr.f32.mxu0 0.0
  %1384 = vmatmul.mubr.f32.gmra.mrb[0].mxu0 %v575
  %v1385 = vpop.f32.mrb[0].mxu0
  %v1386 = vadd.f32 0.0, %v1385
  %v1387 = vpop.f32.mrb[0].mxu0
  %1388 = vmatprep.mubr.f32.mxu0 0.0
  %1389 = vmatmul.mubr.f32.gmra.mrb[0].mxu0 %v1166
  %v1390 = vpop.f32.mrb[0].mxu0
  %v1391 = vadd.f32 0.0, %v1390
  %v1392 = vpop.f32.mrb[0].mxu0
  %1393 = vmatprep.mubr.f32.mxu0 0.0
  %1394 = vmatmul.mubr.f32.gmra.mrb[0].mxu0 %v1169
  %v1395 = vpop.f32.mrb[0].mxu0
  %v1396 = vadd.f32 0.0, %v1395
  %v1397 = vpop.f32.mrb[0].mxu0
  %1398 = vdwg.mxu0
  %v1399 = vadd.f32 %v1131, %v1241
  %v1400 = vadd.f32 %v1132, %v1246
  %v1401 = vadd.f32 %v1133, %v1251
  %v1402 = vadd.f32 %v1134, %v1256
  %v1403 = vadd.f32 %v1135, %v1261
  %v1404 = vadd.f32 %v1136, %v1266
  %v1405 = vadd.f32 %v1137, %v1271
  %v1406 = vadd.f32 %v1138, %v1276
  %v1407 = vadd.f32 %v1139, %v1281
  %v1408 = vadd.f32 %v1140, %v1286
  %v1409 = vadd.f32 %v1141, %v1291
  %v1410 = vadd.f32 %v1142, %v1296
  %v1411 = vadd.f32 %v1143, %v1301
  %v1412 = vadd.f32 %v1144, %v1306
  %v1413 = vadd.f32 %v1145, %v1311
  %v1414 = vadd.f32 %v1146, %v1316
  %v1415 = vadd.f32 %v1147, %v1321
  %v1416 = vadd.f32 %v1148, %v1326
  %v1417 = vadd.f32 %v1149, %v1331
  %v1418 = vadd.f32 %v1150, %v1336
  %v1419 = vadd.f32 %v1151, %v1341
  %v1420 = vadd.f32 %v1152, %v1346
  %v1421 = vadd.f32 %v1153, %v1351
  %v1422 = vadd.f32 %v1154, %v1356
  %v1423 = vadd.f32 %v1155, %v1361
  %v1424 = vadd.f32 %v1156, %v1366
  %v1425 = vadd.f32 %v1157, %v1371
  %v1426 = vadd.f32 %v1158, %v1376
  %v1427 = vadd.f32 %v1159, %v1381
  %v1428 = vadd.f32 %v1160, %v1386
  %v1429 = vadd.f32 %v1161, %v1391
  %v1430 = vadd.f32 %v1162, %v1396
  %s1431 = scalar_lea.vmem %s1, 32
  %v1432 = vld [vmem:[%s1431] sm:$0x3f]
  %v1434 = vsel %vm155, %v111, 0
  %v1437 = vsel %vm155, %v112, 0
  %v1440 = vsel %vm252, %v1432, 0
  %1442 = vmatprep.subr.mxu0 0.0
  %1443 = vmatpush1.msra.mxu0 %v1440
  %1444 = vmatprep.subr.mxu0 0.0
  %1445 = vmatpush1.msra.mxu0 0.0
  %1446 = vmatprep.subr.mxu0 0.0
  %1447 = vmatpush1.msra.mxu0 0.0
  %1448 = vmatprep.subr.mxu0 0.0
  %1449 = vmatpush1.msra.mxu0 0.0
  %1450 = vmatprep.subr.mxu0 0.0
  %1451 = vmatpush1.msra.mxu0 0.0
  %1452 = vmatprep.subr.mxu0 0.0
  %1453 = vmatpush1.msra.mxu0 0.0
  %1454 = vmatprep.subr.mxu0 0.0
  %1455 = vmatpush1.msra.mxu0 0.0
  %1456 = vmatprep.subr.mxu0 0.0
  %1457 = vmatpush1.msra.mxu0 0.0
  %1458 = vmatprep.subr.mxu0 0.0
  %1459 = vmatpush1.msra.mxu0 0.0
  %1460 = vmatprep.subr.mxu0 0.0
  %1461 = vmatpush1.msra.mxu0 0.0
  %1462 = vmatprep.subr.mxu0 0.0
  %1463 = vmatpush1.msra.mxu0 0.0
  %1464 = vmatprep.subr.mxu0 0.0
  %1465 = vmatpush1.msra.mxu0 0.0
  %1466 = vmatprep.subr.mxu0 0.0
  %1467 = vmatpush1.msra.mxu0 0.0
  %1468 = vmatprep.subr.mxu0 0.0
  %1469 = vmatpush1.msra.mxu0 0.0
  %1470 = vmatprep.subr.mxu0 0.0
  %1471 = vmatpush1.msra.mxu0 0.0
  %1472 = vmatprep.subr.mxu0 0.0
  %1473 = vmatpush1.msra.mxu0 0.0
  %1474 = vmatprep.subr.mxu0 0.0
  %1475 = vmatpush1.msra.mxu0 0.0
  %1476 = vmatprep.subr.mxu0 0.0
  %1477 = vmatpush1.msra.mxu0 0.0
  %1478 = vmatprep.subr.mxu0 0.0
  %1479 = vmatpush1.msra.mxu0 0.0
  %1480 = vmatprep.subr.mxu0 0.0
  %1481 = vmatpush1.msra.mxu0 0.0
  %1482 = vmatprep.subr.mxu0 0.0
  %1483 = vmatpush1.msra.mxu0 0.0
  %1484 = vmatprep.subr.mxu0 0.0
  %1485 = vmatpush1.msra.mxu0 0.0
  %1486 = vmatprep.subr.mxu0 0.0
  %1487 = vmatpush1.msra.mxu0 0.0
  %1488 = vmatprep.subr.mxu0 0.0
  %1489 = vmatpush1.msra.mxu0 0.0
  %1490 = vmatprep.subr.mxu0 0.0
  %1491 = vmatpush1.msra.mxu0 0.0
  %1492 = vmatprep.subr.mxu0 0.0
  %1493 = vmatpush1.msra.mxu0 0.0
  %1494 = vmatprep.subr.mxu0 0.0
  %1495 = vmatpush1.msra.mxu0 0.0
  %1496 = vmatprep.subr.mxu0 0.0
  %1497 = vmatpush1.msra.mxu0 0.0
  %1498 = vmatprep.subr.mxu0 0.0
  %1499 = vmatpush1.msra.mxu0 0.0
  %1500 = vmatprep.subr.mxu0 0.0
  %1501 = vmatpush1.msra.mxu0 0.0
  %1502 = vmatprep.subr.mxu0 0.0
  %1503 = vmatpush1.msra.mxu0 0.0
  %1504 = vmatprep.subr.mxu0 0.0
  %1505 = vmatpush1.msra.mxu0 0.0
  %1506 = vmatprep.mubr.f32.mxu0 0.0
  %1507 = vmatmul.mubr.f32.gmra.mrb[0].mxu0 %v163
  %v1508 = vpop.f32.mrb[0].mxu0
  %v1509 = vadd.f32 0.0, %v1508
  %v1510 = vpop.f32.mrb[0].mxu0
  %1511 = vmatprep.mubr.f32.mxu0 0.0
  %1512 = vmatmul.mubr.f32.gmra.mrb[0].mxu0 %v166
  %v1513 = vpop.f32.mrb[0].mxu0
  %v1514 = vadd.f32 0.0, %v1513
  %v1515 = vpop.f32.mrb[0].mxu0
  %1516 = vmatprep.mubr.f32.mxu0 0.0
  %1517 = vmatmul.mubr.f32.gmra.mrb[0].mxu0 %v169
  %v1518 = vpop.f32.mrb[0].mxu0
  %v1519 = vadd.f32 0.0, %v1518
  %v1520 = vpop.f32.mrb[0].mxu0
  %1521 = vmatprep.mubr.f32.mxu0 0.0
  %1522 = vmatmul.mubr.f32.gmra.mrb[0].mxu0 %v172
  %v1523 = vpop.f32.mrb[0].mxu0
  %v1524 = vadd.f32 0.0, %v1523
  %v1525 = vpop.f32.mrb[0].mxu0
  %1526 = vmatprep.mubr.f32.mxu0 0.0
  %1527 = vmatmul.mubr.f32.gmra.mrb[0].mxu0 %v175
  %v1528 = vpop.f32.mrb[0].mxu0
  %v1529 = vadd.f32 0.0, %v1528
  %v1530 = vpop.f32.mrb[0].mxu0
  %1531 = vmatprep.mubr.f32.mxu0 0.0
  %1532 = vmatmul.mubr.f32.gmra.mrb[0].mxu0 %v178
  %v1533 = vpop.f32.mrb[0].mxu0
  %v1534 = vadd.f32 0.0, %v1533
  %v1535 = vpop.f32.mrb[0].mxu0
  %1536 = vmatprep.mubr.f32.mxu0 0.0
  %1537 = vmatmul.mubr.f32.gmra.mrb[0].mxu0 %v181
  %v1538 = vpop.f32.mrb[0].mxu0
  %v1539 = vadd.f32 0.0, %v1538
  %v1540 = vpop.f32.mrb[0].mxu0
  %1541 = vmatprep.mubr.f32.mxu0 0.0
  %1542 = vmatmul.mubr.f32.gmra.mrb[0].mxu0 %v184
  %v1543 = vpop.f32.mrb[0].mxu0
  %v1544 = vadd.f32 0.0, %v1543
  %v1545 = vpop.f32.mrb[0].mxu0
  %1546 = vmatprep.mubr.f32.mxu0 0.0
  %1547 = vmatmul.mubr.f32.gmra.mrb[0].mxu0 %v187
  %v1548 = vpop.f32.mrb[0].mxu0
  %v1549 = vadd.f32 0.0, %v1548
  %v1550 = vpop.f32.mrb[0].mxu0
  %1551 = vmatprep.mubr.f32.mxu0 0.0
  %1552 = vmatmul.mubr.f32.gmra.mrb[0].mxu0 %v190
  %v1553 = vpop.f32.mrb[0].mxu0
  %v1554 = vadd.f32 0.0, %v1553
  %v1555 = vpop.f32.mrb[0].mxu0
  %1556 = vmatprep.mubr.f32.mxu0 0.0
  %1557 = vmatmul.mubr.f32.gmra.mrb[0].mxu0 %v193
  %v1558 = vpop.f32.mrb[0].mxu0
  %v1559 = vadd.f32 0.0, %v1558
  %v1560 = vpop.f32.mrb[0].mxu0
  %1561 = vmatprep.mubr.f32.mxu0 0.0
  %1562 = vmatmul.mubr.f32.gmra.mrb[0].mxu0 %v196
  %v1563 = vpop.f32.mrb[0].mxu0
  %v1564 = vadd.f32 0.0, %v1563
  %v1565 = vpop.f32.mrb[0].mxu0
  %1566 = vmatprep.mubr.f32.mxu0 0.0
  %1567 = vmatmul.mubr.f32.gmra.mrb[0].mxu0 %v199
  %v1568 = vpop.f32.mrb[0].mxu0
  %v1569 = vadd.f32 0.0, %v1568
  %v1570 = vpop.f32.mrb[0].mxu0
  %1571 = vmatprep.mubr.f32.mxu0 0.0
  %1572 = vmatmul.mubr.f32.gmra.mrb[0].mxu0 %v202
  %v1573 = vpop.f32.mrb[0].mxu0
  %v1574 = vadd.f32 0.0, %v1573
  %v1575 = vpop.f32.mrb[0].mxu0
  %1576 = vmatprep.mubr.f32.mxu0 0.0
  %1577 = vmatmul.mubr.f32.gmra.mrb[0].mxu0 %v205
  %v1578 = vpop.f32.mrb[0].mxu0
  %v1579 = vadd.f32 0.0, %v1578
  %v1580 = vpop.f32.mrb[0].mxu0
  %1581 = vmatprep.mubr.f32.mxu0 0.0
  %1582 = vmatmul.mubr.f32.gmra.mrb[0].mxu0 %v208
  %v1583 = vpop.f32.mrb[0].mxu0
  %v1584 = vadd.f32 0.0, %v1583
  %v1585 = vpop.f32.mrb[0].mxu0
  %1586 = vmatprep.mubr.f32.mxu0 0.0
  %1587 = vmatmul.mubr.f32.gmra.mrb[0].mxu0 %v211
  %v1588 = vpop.f32.mrb[0].mxu0
  %v1589 = vadd.f32 0.0, %v1588
  %v1590 = vpop.f32.mrb[0].mxu0
  %1591 = vmatprep.mubr.f32.mxu0 0.0
  %1592 = vmatmul.mubr.f32.gmra.mrb[0].mxu0 %v214
  %v1593 = vpop.f32.mrb[0].mxu0
  %v1594 = vadd.f32 0.0, %v1593
  %v1595 = vpop.f32.mrb[0].mxu0
  %1596 = vmatprep.mubr.f32.mxu0 0.0
  %1597 = vmatmul.mubr.f32.gmra.mrb[0].mxu0 %v217
  %v1598 = vpop.f32.mrb[0].mxu0
  %v1599 = vadd.f32 0.0, %v1598
  %v1600 = vpop.f32.mrb[0].mxu0
  %1601 = vmatprep.mubr.f32.mxu0 0.0
  %1602 = vmatmul.mubr.f32.gmra.mrb[0].mxu0 %v220
  %v1603 = vpop.f32.mrb[0].mxu0
  %v1604 = vadd.f32 0.0, %v1603
  %v1605 = vpop.f32.mrb[0].mxu0
  %1606 = vmatprep.mubr.f32.mxu0 0.0
  %1607 = vmatmul.mubr.f32.gmra.mrb[0].mxu0 %v223
  %v1608 = vpop.f32.mrb[0].mxu0
  %v1609 = vadd.f32 0.0, %v1608
  %v1610 = vpop.f32.mrb[0].mxu0
  %1611 = vmatprep.mubr.f32.mxu0 0.0
  %1612 = vmatmul.mubr.f32.gmra.mrb[0].mxu0 %v226
  %v1613 = vpop.f32.mrb[0].mxu0
  %v1614 = vadd.f32 0.0, %v1613
  %v1615 = vpop.f32.mrb[0].mxu0
  %1616 = vmatprep.mubr.f32.mxu0 0.0
  %1617 = vmatmul.mubr.f32.gmra.mrb[0].mxu0 %v229
  %v1618 = vpop.f32.mrb[0].mxu0
  %v1619 = vadd.f32 0.0, %v1618
  %v1620 = vpop.f32.mrb[0].mxu0
  %1621 = vmatprep.mubr.f32.mxu0 0.0
  %1622 = vmatmul.mubr.f32.gmra.mrb[0].mxu0 %v232
  %v1623 = vpop.f32.mrb[0].mxu0
  %v1624 = vadd.f32 0.0, %v1623
  %v1625 = vpop.f32.mrb[0].mxu0
  %1626 = vmatprep.mubr.f32.mxu0 0.0
  %1627 = vmatmul.mubr.f32.gmra.mrb[0].mxu0 %v235
  %v1628 = vpop.f32.mrb[0].mxu0
  %v1629 = vadd.f32 0.0, %v1628
  %v1630 = vpop.f32.mrb[0].mxu0
  %1631 = vmatprep.mubr.f32.mxu0 0.0
  %1632 = vmatmul.mubr.f32.gmra.mrb[0].mxu0 %v238
  %v1633 = vpop.f32.mrb[0].mxu0
  %v1634 = vadd.f32 0.0, %v1633
  %v1635 = vpop.f32.mrb[0].mxu0
  %1636 = vmatprep.mubr.f32.mxu0 0.0
  %1637 = vmatmul.mubr.f32.gmra.mrb[0].mxu0 %v241
  %v1638 = vpop.f32.mrb[0].mxu0
  %v1639 = vadd.f32 0.0, %v1638
  %v1640 = vpop.f32.mrb[0].mxu0
  %1641 = vmatprep.mubr.f32.mxu0 0.0
  %1642 = vmatmul.mubr.f32.gmra.mrb[0].mxu0 %v244
  %v1643 = vpop.f32.mrb[0].mxu0
  %v1644 = vadd.f32 0.0, %v1643
  %v1645 = vpop.f32.mrb[0].mxu0
  %1646 = vmatprep.mubr.f32.mxu0 0.0
  %1647 = vmatmul.mubr.f32.gmra.mrb[0].mxu0 %v247
  %v1648 = vpop.f32.mrb[0].mxu0
  %v1649 = vadd.f32 0.0, %v1648
  %v1650 = vpop.f32.mrb[0].mxu0
  %1651 = vmatprep.mubr.f32.mxu0 0.0
  %1652 = vmatmul.mubr.f32.gmra.mrb[0].mxu0 %v250
  %v1653 = vpop.f32.mrb[0].mxu0
  %v1654 = vadd.f32 0.0, %v1653
  %v1655 = vpop.f32.mrb[0].mxu0
  %1656 = vmatprep.mubr.f32.mxu0 0.0
  %1657 = vmatmul.mubr.f32.gmra.mrb[0].mxu0 %v1434
  %v1658 = vpop.f32.mrb[0].mxu0
  %v1659 = vadd.f32 0.0, %v1658
  %v1660 = vpop.f32.mrb[0].mxu0
  %1661 = vmatprep.mubr.f32.mxu0 0.0
  %1662 = vmatmul.mubr.f32.gmra.mrb[0].mxu0 %v1437
  %v1663 = vpop.f32.mrb[0].mxu0
  %v1664 = vadd.f32 0.0, %v1663
  %v1665 = vpop.f32.mrb[0].mxu0
  %1666 = vdwg.mxu0
  %v1667 = vadd.f32 %v1399, %v1509
  %v1668 = vadd.f32 %v1400, %v1514
  %v1669 = vadd.f32 %v1401, %v1519
  %v1670 = vadd.f32 %v1402, %v1524
  %v1671 = vadd.f32 %v1403, %v1529
  %v1672 = vadd.f32 %v1404, %v1534
  %v1673 = vadd.f32 %v1405, %v1539
  %v1674 = vadd.f32 %v1406, %v1544
  %v1675 = vadd.f32 %v1407, %v1549
  %v1676 = vadd.f32 %v1408, %v1554
  %v1677 = vadd.f32 %v1409, %v1559
  %v1678 = vadd.f32 %v1410, %v1564
  %v1679 = vadd.f32 %v1411, %v1569
  %v1680 = vadd.f32 %v1412, %v1574
  %v1681 = vadd.f32 %v1413, %v1579
  %v1682 = vadd.f32 %v1414, %v1584
  %v1683 = vadd.f32 %v1415, %v1589
  %v1684 = vadd.f32 %v1416, %v1594
  %v1685 = vadd.f32 %v1417, %v1599
  %v1686 = vadd.f32 %v1418, %v1604
  %v1687 = vadd.f32 %v1419, %v1609
  %v1688 = vadd.f32 %v1420, %v1614
  %v1689 = vadd.f32 %v1421, %v1619
  %v1690 = vadd.f32 %v1422, %v1624
  %v1691 = vadd.f32 %v1423, %v1629
  %v1692 = vadd.f32 %v1424, %v1634
  %v1693 = vadd.f32 %v1425, %v1639
  %v1694 = vadd.f32 %v1426, %v1644
  %v1695 = vadd.f32 %v1427, %v1649
  %v1696 = vadd.f32 %v1428, %v1654
  %v1697 = vadd.f32 %v1429, %v1659
  %v1698 = vadd.f32 %v1430, %v1664
  %s1699 = scalar_lea.vmem %s1, 40
  %v1700 = vld [vmem:[%s1699] sm:$0x3f]
  %v1702 = vsel %vm155, %v148, 0
  %v1705 = vsel %vm155, %v149, 0
  %v1708 = vsel %vm252, %v1700, 0
  %1710 = vmatprep.subr.mxu0 0.0
  %1711 = vmatpush1.msra.mxu0 %v1708
  %1712 = vmatprep.subr.mxu0 0.0
  %1713 = vmatpush1.msra.mxu0 0.0
  %1714 = vmatprep.subr.mxu0 0.0
  %1715 = vmatpush1.msra.mxu0 0.0
  %1716 = vmatprep.subr.mxu0 0.0
  %1717 = vmatpush1.msra.mxu0 0.0
  %1718 = vmatprep.subr.mxu0 0.0
  %1719 = vmatpush1.msra.mxu0 0.0
  %1720 = vmatprep.subr.mxu0 0.0
  %1721 = vmatpush1.msra.mxu0 0.0
  %1722 = vmatprep.subr.mxu0 0.0
  %1723 = vmatpush1.msra.mxu0 0.0
  %1724 = vmatprep.subr.mxu0 0.0
  %1725 = vmatpush1.msra.mxu0 0.0
  %1726 = vmatprep.subr.mxu0 0.0
  %1727 = vmatpush1.msra.mxu0 0.0
  %1728 = vmatprep.subr.mxu0 0.0
  %1729 = vmatpush1.msra.mxu0 0.0
  %1730 = vmatprep.subr.mxu0 0.0
  %1731 = vmatpush1.msra.mxu0 0.0
  %1732 = vmatprep.subr.mxu0 0.0
  %1733 = vmatpush1.msra.mxu0 0.0
  %1734 = vmatprep.subr.mxu0 0.0
  %1735 = vmatpush1.msra.mxu0 0.0
  %1736 = vmatprep.subr.mxu0 0.0
  %1737 = vmatpush1.msra.mxu0 0.0
  %1738 = vmatprep.subr.mxu0 0.0
  %1739 = vmatpush1.msra.mxu0 0.0
  %1740 = vmatprep.subr.mxu0 0.0
  %1741 = vmatpush1.msra.mxu0 0.0
  %1742 = vmatprep.subr.mxu0 0.0
  %1743 = vmatpush1.msra.mxu0 0.0
  %1744 = vmatprep.subr.mxu0 0.0
  %1745 = vmatpush1.msra.mxu0 0.0
  %1746 = vmatprep.subr.mxu0 0.0
  %1747 = vmatpush1.msra.mxu0 0.0
  %1748 = vmatprep.subr.mxu0 0.0
  %1749 = vmatpush1.msra.mxu0 0.0
  %1750 = vmatprep.subr.mxu0 0.0
  %1751 = vmatpush1.msra.mxu0 0.0
  %1752 = vmatprep.subr.mxu0 0.0
  %1753 = vmatpush1.msra.mxu0 0.0
  %1754 = vmatprep.subr.mxu0 0.0
  %1755 = vmatpush1.msra.mxu0 0.0
  %1756 = vmatprep.subr.mxu0 0.0
  %1757 = vmatpush1.msra.mxu0 0.0
  %1758 = vmatprep.subr.mxu0 0.0
  %1759 = vmatpush1.msra.mxu0 0.0
  %1760 = vmatprep.subr.mxu0 0.0
  %1761 = vmatpush1.msra.mxu0 0.0
  %1762 = vmatprep.subr.mxu0 0.0
  %1763 = vmatpush1.msra.mxu0 0.0
  %1764 = vmatprep.subr.mxu0 0.0
  %1765 = vmatpush1.msra.mxu0 0.0
  %1766 = vmatprep.subr.mxu0 0.0
  %1767 = vmatpush1.msra.mxu0 0.0
  %1768 = vmatprep.subr.mxu0 0.0
  %1769 = vmatpush1.msra.mxu0 0.0
  %1770 = vmatprep.subr.mxu0 0.0
  %1771 = vmatpush1.msra.mxu0 0.0
  %1772 = vmatprep.subr.mxu0 0.0
  %1773 = vmatpush1.msra.mxu0 0.0
  %1774 = vmatprep.mubr.f32.mxu0 0.0
  %1775 = vmatmul.mubr.f32.gmra.mrb[0].mxu0 %v814
  %v1776 = vpop.f32.mrb[0].mxu0
  %v1777 = vadd.f32 0.0, %v1776
  %v1778 = vpop.f32.mrb[0].mxu0
  %1779 = vmatprep.mubr.f32.mxu0 0.0
  %1780 = vmatmul.mubr.f32.gmra.mrb[0].mxu0 %v817
  %v1781 = vpop.f32.mrb[0].mxu0
  %v1782 = vadd.f32 0.0, %v1781
  %v1783 = vpop.f32.mrb[0].mxu0
  %1784 = vmatprep.mubr.f32.mxu0 0.0
  %1785 = vmatmul.mubr.f32.gmra.mrb[0].mxu0 %v820
  %v1786 = vpop.f32.mrb[0].mxu0
  %v1787 = vadd.f32 0.0, %v1786
  %v1788 = vpop.f32.mrb[0].mxu0
  %1789 = vmatprep.mubr.f32.mxu0 0.0
  %1790 = vmatmul.mubr.f32.gmra.mrb[0].mxu0 %v823
  %v1791 = vpop.f32.mrb[0].mxu0
  %v1792 = vadd.f32 0.0, %v1791
  %v1793 = vpop.f32.mrb[0].mxu0
  %1794 = vmatprep.mubr.f32.mxu0 0.0
  %1795 = vmatmul.mubr.f32.gmra.mrb[0].mxu0 %v826
  %v1796 = vpop.f32.mrb[0].mxu0
  %v1797 = vadd.f32 0.0, %v1796
  %v1798 = vpop.f32.mrb[0].mxu0
  %1799 = vmatprep.mubr.f32.mxu0 0.0
  %1800 = vmatmul.mubr.f32.gmra.mrb[0].mxu0 %v829
  %v1801 = vpop.f32.mrb[0].mxu0
  %v1802 = vadd.f32 0.0, %v1801
  %v1803 = vpop.f32.mrb[0].mxu0
  %1804 = vmatprep.mubr.f32.mxu0 0.0
  %1805 = vmatmul.mubr.f32.gmra.mrb[0].mxu0 %v832
  %v1806 = vpop.f32.mrb[0].mxu0
  %v1807 = vadd.f32 0.0, %v1806
  %v1808 = vpop.f32.mrb[0].mxu0
  %1809 = vmatprep.mubr.f32.mxu0 0.0
  %1810 = vmatmul.mubr.f32.gmra.mrb[0].mxu0 %v835
  %v1811 = vpop.f32.mrb[0].mxu0
  %v1812 = vadd.f32 0.0, %v1811
  %v1813 = vpop.f32.mrb[0].mxu0
  %1814 = vmatprep.mubr.f32.mxu0 0.0
  %1815 = vmatmul.mubr.f32.gmra.mrb[0].mxu0 %v838
  %v1816 = vpop.f32.mrb[0].mxu0
  %v1817 = vadd.f32 0.0, %v1816
  %v1818 = vpop.f32.mrb[0].mxu0
  %1819 = vmatprep.mubr.f32.mxu0 0.0
  %1820 = vmatmul.mubr.f32.gmra.mrb[0].mxu0 %v841
  %v1821 = vpop.f32.mrb[0].mxu0
  %v1822 = vadd.f32 0.0, %v1821
  %v1823 = vpop.f32.mrb[0].mxu0
  %1824 = vmatprep.mubr.f32.mxu0 0.0
  %1825 = vmatmul.mubr.f32.gmra.mrb[0].mxu0 %v844
  %v1826 = vpop.f32.mrb[0].mxu0
  %v1827 = vadd.f32 0.0, %v1826
  %v1828 = vpop.f32.mrb[0].mxu0
  %1829 = vmatprep.mubr.f32.mxu0 0.0
  %1830 = vmatmul.mubr.f32.gmra.mrb[0].mxu0 %v847
  %v1831 = vpop.f32.mrb[0].mxu0
  %v1832 = vadd.f32 0.0, %v1831
  %v1833 = vpop.f32.mrb[0].mxu0
  %1834 = vmatprep.mubr.f32.mxu0 0.0
  %1835 = vmatmul.mubr.f32.gmra.mrb[0].mxu0 %v850
  %v1836 = vpop.f32.mrb[0].mxu0
  %v1837 = vadd.f32 0.0, %v1836
  %v1838 = vpop.f32.mrb[0].mxu0
  %1839 = vmatprep.mubr.f32.mxu0 0.0
  %1840 = vmatmul.mubr.f32.gmra.mrb[0].mxu0 %v853
  %v1841 = vpop.f32.mrb[0].mxu0
  %v1842 = vadd.f32 0.0, %v1841
  %v1843 = vpop.f32.mrb[0].mxu0
  %1844 = vmatprep.mubr.f32.mxu0 0.0
  %1845 = vmatmul.mubr.f32.gmra.mrb[0].mxu0 %v856
  %v1846 = vpop.f32.mrb[0].mxu0
  %v1847 = vadd.f32 0.0, %v1846
  %v1848 = vpop.f32.mrb[0].mxu0
  %1849 = vmatprep.mubr.f32.mxu0 0.0
  %1850 = vmatmul.mubr.f32.gmra.mrb[0].mxu0 %v859
  %v1851 = vpop.f32.mrb[0].mxu0
  %v1852 = vadd.f32 0.0, %v1851
  %v1853 = vpop.f32.mrb[0].mxu0
  %1854 = vmatprep.mubr.f32.mxu0 0.0
  %1855 = vmatmul.mubr.f32.gmra.mrb[0].mxu0 %v862
  %v1856 = vpop.f32.mrb[0].mxu0
  %v1857 = vadd.f32 0.0, %v1856
  %v1858 = vpop.f32.mrb[0].mxu0
  %1859 = vmatprep.mubr.f32.mxu0 0.0
  %1860 = vmatmul.mubr.f32.gmra.mrb[0].mxu0 %v865
  %v1861 = vpop.f32.mrb[0].mxu0
  %v1862 = vadd.f32 0.0, %v1861
  %v1863 = vpop.f32.mrb[0].mxu0
  %1864 = vmatprep.mubr.f32.mxu0 0.0
  %1865 = vmatmul.mubr.f32.gmra.mrb[0].mxu0 %v868
  %v1866 = vpop.f32.mrb[0].mxu0
  %v1867 = vadd.f32 0.0, %v1866
  %v1868 = vpop.f32.mrb[0].mxu0
  %1869 = vmatprep.mubr.f32.mxu0 0.0
  %1870 = vmatmul.mubr.f32.gmra.mrb[0].mxu0 %v871
  %v1871 = vpop.f32.mrb[0].mxu0
  %v1872 = vadd.f32 0.0, %v1871
  %v1873 = vpop.f32.mrb[0].mxu0
  %1874 = vmatprep.mubr.f32.mxu0 0.0
  %1875 = vmatmul.mubr.f32.gmra.mrb[0].mxu0 %v874
  %v1876 = vpop.f32.mrb[0].mxu0
  %v1877 = vadd.f32 0.0, %v1876
  %v1878 = vpop.f32.mrb[0].mxu0
  %1879 = vmatprep.mubr.f32.mxu0 0.0
  %1880 = vmatmul.mubr.f32.gmra.mrb[0].mxu0 %v877
  %v1881 = vpop.f32.mrb[0].mxu0
  %v1882 = vadd.f32 0.0, %v1881
  %v1883 = vpop.f32.mrb[0].mxu0
  %1884 = vmatprep.mubr.f32.mxu0 0.0
  %1885 = vmatmul.mubr.f32.gmra.mrb[0].mxu0 %v880
  %v1886 = vpop.f32.mrb[0].mxu0
  %v1887 = vadd.f32 0.0, %v1886
  %v1888 = vpop.f32.mrb[0].mxu0
  %1889 = vmatprep.mubr.f32.mxu0 0.0
  %1890 = vmatmul.mubr.f32.gmra.mrb[0].mxu0 %v883
  %v1891 = vpop.f32.mrb[0].mxu0
  %v1892 = vadd.f32 0.0, %v1891
  %v1893 = vpop.f32.mrb[0].mxu0
  %1894 = vmatprep.mubr.f32.mxu0 0.0
  %1895 = vmatmul.mubr.f32.gmra.mrb[0].mxu0 %v886
  %v1896 = vpop.f32.mrb[0].mxu0
  %v1897 = vadd.f32 0.0, %v1896
  %v1898 = vpop.f32.mrb[0].mxu0
  %1899 = vmatprep.mubr.f32.mxu0 0.0
  %1900 = vmatmul.mubr.f32.gmra.mrb[0].mxu0 %v889
  %v1901 = vpop.f32.mrb[0].mxu0
  %v1902 = vadd.f32 0.0, %v1901
  %v1903 = vpop.f32.mrb[0].mxu0
  %1904 = vmatprep.mubr.f32.mxu0 0.0
  %1905 = vmatmul.mubr.f32.gmra.mrb[0].mxu0 %v892
  %v1906 = vpop.f32.mrb[0].mxu0
  %v1907 = vadd.f32 0.0, %v1906
  %v1908 = vpop.f32.mrb[0].mxu0
  %1909 = vmatprep.mubr.f32.mxu0 0.0
  %1910 = vmatmul.mubr.f32.gmra.mrb[0].mxu0 %v895
  %v1911 = vpop.f32.mrb[0].mxu0
  %v1912 = vadd.f32 0.0, %v1911
  %v1913 = vpop.f32.mrb[0].mxu0
  %1914 = vmatprep.mubr.f32.mxu0 0.0
  %1915 = vmatmul.mubr.f32.gmra.mrb[0].mxu0 %v898
  %v1916 = vpop.f32.mrb[0].mxu0
  %v1917 = vadd.f32 0.0, %v1916
  %v1918 = vpop.f32.mrb[0].mxu0
  %1919 = vmatprep.mubr.f32.mxu0 0.0
  %1920 = vmatmul.mubr.f32.gmra.mrb[0].mxu0 %v901
  %v1921 = vpop.f32.mrb[0].mxu0
  %v1922 = vadd.f32 0.0, %v1921
  %v1923 = vpop.f32.mrb[0].mxu0
  %1924 = vmatprep.mubr.f32.mxu0 0.0
  %1925 = vmatmul.mubr.f32.gmra.mrb[0].mxu0 %v1702
  %v1926 = vpop.f32.mrb[0].mxu0
  %v1927 = vadd.f32 0.0, %v1926
  %v1928 = vpop.f32.mrb[0].mxu0
  %1929 = vmatprep.mubr.f32.mxu0 0.0
  %1930 = vmatmul.mubr.f32.gmra.mrb[0].mxu0 %v1705
  %v1931 = vpop.f32.mrb[0].mxu0
  %v1932 = vadd.f32 0.0, %v1931
  %v1933 = vpop.f32.mrb[0].mxu0
  %1934 = vdwg.mxu0
  %v1935 = vadd.f32 %v1667, %v1777
  %v1936 = vadd.f32 %v1668, %v1782
  %v1937 = vadd.f32 %v1669, %v1787
  %v1938 = vadd.f32 %v1670, %v1792
  %v1939 = vadd.f32 %v1671, %v1797
  %v1940 = vadd.f32 %v1672, %v1802
  %v1941 = vadd.f32 %v1673, %v1807
  %v1942 = vadd.f32 %v1674, %v1812
  %v1943 = vadd.f32 %v1675, %v1817
  %v1944 = vadd.f32 %v1676, %v1822
  %v1945 = vadd.f32 %v1677, %v1827
  %v1946 = vadd.f32 %v1678, %v1832
  %v1947 = vadd.f32 %v1679, %v1837
  %v1948 = vadd.f32 %v1680, %v1842
  %v1949 = vadd.f32 %v1681, %v1847
  %v1950 = vadd.f32 %v1682, %v1852
  %v1951 = vadd.f32 %v1683, %v1857
  %v1952 = vadd.f32 %v1684, %v1862
  %v1953 = vadd.f32 %v1685, %v1867
  %v1954 = vadd.f32 %v1686, %v1872
  %v1955 = vadd.f32 %v1687, %v1877
  %v1956 = vadd.f32 %v1688, %v1882
  %v1957 = vadd.f32 %v1689, %v1887
  %v1958 = vadd.f32 %v1690, %v1892
  %v1959 = vadd.f32 %v1691, %v1897
  %v1960 = vadd.f32 %v1692, %v1902
  %v1961 = vadd.f32 %v1693, %v1907
  %v1962 = vadd.f32 %v1694, %v1912
  %v1963 = vadd.f32 %v1695, %v1917
  %v1964 = vadd.f32 %v1696, %v1922
  %v1965 = vadd.f32 %v1697, %v1927
  %v1966 = vadd.f32 %v1698, %v1932
  %s1967 = scalar_lea.vmem %s1, 48
  %v1968 = vld [vmem:[%s1967] sm:$0x3f]
  %v1970 = vsel %vm155, %v76, 0
  %v1973 = vsel %vm155, %v77, 0
  %v1976 = vsel %vm252, %v1968, 0
  %1978 = vmatprep.subr.mxu0 0.0
  %1979 = vmatpush1.msra.mxu0 %v1976
  %1980 = vmatprep.subr.mxu0 0.0
  %1981 = vmatpush1.msra.mxu0 0.0
  %1982 = vmatprep.subr.mxu0 0.0
  %1983 = vmatpush1.msra.mxu0 0.0
  %1984 = vmatprep.subr.mxu0 0.0
  %1985 = vmatpush1.msra.mxu0 0.0
  %1986 = vmatprep.subr.mxu0 0.0
  %1987 = vmatpush1.msra.mxu0 0.0
  %1988 = vmatprep.subr.mxu0 0.0
  %1989 = vmatpush1.msra.mxu0 0.0
  %1990 = vmatprep.subr.mxu0 0.0
  %1991 = vmatpush1.msra.mxu0 0.0
  %1992 = vmatprep.subr.mxu0 0.0
  %1993 = vmatpush1.msra.mxu0 0.0
  %1994 = vmatprep.subr.mxu0 0.0
  %1995 = vmatpush1.msra.mxu0 0.0
  %1996 = vmatprep.subr.mxu0 0.0
  %1997 = vmatpush1.msra.mxu0 0.0
  %1998 = vmatprep.subr.mxu0 0.0
  %1999 = vmatpush1.msra.mxu0 0.0
  %2000 = vmatprep.subr.mxu0 0.0
  %2001 = vmatpush1.msra.mxu0 0.0
  %2002 = vmatprep.subr.mxu0 0.0
  %2003 = vmatpush1.msra.mxu0 0.0
  %2004 = vmatprep.subr.mxu0 0.0
  %2005 = vmatpush1.msra.mxu0 0.0
  %2006 = vmatprep.subr.mxu0 0.0
  %2007 = vmatpush1.msra.mxu0 0.0
  %2008 = vmatprep.subr.mxu0 0.0
  %2009 = vmatpush1.msra.mxu0 0.0
  %2010 = vmatprep.subr.mxu0 0.0
  %2011 = vmatpush1.msra.mxu0 0.0
  %2012 = vmatprep.subr.mxu0 0.0
  %2013 = vmatpush1.msra.mxu0 0.0
  %2014 = vmatprep.subr.mxu0 0.0
  %2015 = vmatpush1.msra.mxu0 0.0
  %2016 = vmatprep.subr.mxu0 0.0
  %2017 = vmatpush1.msra.mxu0 0.0
  %2018 = vmatprep.subr.mxu0 0.0
  %2019 = vmatpush1.msra.mxu0 0.0
  %2020 = vmatprep.subr.mxu0 0.0
  %2021 = vmatpush1.msra.mxu0 0.0
  %2022 = vmatprep.subr.mxu0 0.0
  %2023 = vmatpush1.msra.mxu0 0.0
  %2024 = vmatprep.subr.mxu0 0.0
  %2025 = vmatpush1.msra.mxu0 0.0
  %2026 = vmatprep.subr.mxu0 0.0
  %2027 = vmatpush1.msra.mxu0 0.0
  %2028 = vmatprep.subr.mxu0 0.0
  %2029 = vmatpush1.msra.mxu0 0.0
  %2030 = vmatprep.subr.mxu0 0.0
  %2031 = vmatpush1.msra.mxu0 0.0
  %2032 = vmatprep.subr.mxu0 0.0
  %2033 = vmatpush1.msra.mxu0 0.0
  %2034 = vmatprep.subr.mxu0 0.0
  %2035 = vmatpush1.msra.mxu0 0.0
  %2036 = vmatprep.subr.mxu0 0.0
  %2037 = vmatpush1.msra.mxu0 0.0
  %2038 = vmatprep.subr.mxu0 0.0
  %2039 = vmatpush1.msra.mxu0 0.0
  %2040 = vmatprep.subr.mxu0 0.0
  %2041 = vmatpush1.msra.mxu0 0.0
  %2042 = vmatprep.mubr.f32.mxu0 0.0
  %2043 = vmatmul.mubr.f32.gmra.mrb[0].mxu0 %v494
  %v2044 = vpop.f32.mrb[0].mxu0
  %v2045 = vadd.f32 0.0, %v2044
  %v2046 = vpop.f32.mrb[0].mxu0
  %2047 = vmatprep.mubr.f32.mxu0 0.0
  %2048 = vmatmul.mubr.f32.gmra.mrb[0].mxu0 %v497
  %v2049 = vpop.f32.mrb[0].mxu0
  %v2050 = vadd.f32 0.0, %v2049
  %v2051 = vpop.f32.mrb[0].mxu0
  %2052 = vmatprep.mubr.f32.mxu0 0.0
  %2053 = vmatmul.mubr.f32.gmra.mrb[0].mxu0 %v500
  %v2054 = vpop.f32.mrb[0].mxu0
  %v2055 = vadd.f32 0.0, %v2054
  %v2056 = vpop.f32.mrb[0].mxu0
  %2057 = vmatprep.mubr.f32.mxu0 0.0
  %2058 = vmatmul.mubr.f32.gmra.mrb[0].mxu0 %v503
  %v2059 = vpop.f32.mrb[0].mxu0
  %v2060 = vadd.f32 0.0, %v2059
  %v2061 = vpop.f32.mrb[0].mxu0
  %2062 = vmatprep.mubr.f32.mxu0 0.0
  %2063 = vmatmul.mubr.f32.gmra.mrb[0].mxu0 %v506
  %v2064 = vpop.f32.mrb[0].mxu0
  %v2065 = vadd.f32 0.0, %v2064
  %v2066 = vpop.f32.mrb[0].mxu0
  %2067 = vmatprep.mubr.f32.mxu0 0.0
  %2068 = vmatmul.mubr.f32.gmra.mrb[0].mxu0 %v509
  %v2069 = vpop.f32.mrb[0].mxu0
  %v2070 = vadd.f32 0.0, %v2069
  %v2071 = vpop.f32.mrb[0].mxu0
  %2072 = vmatprep.mubr.f32.mxu0 0.0
  %2073 = vmatmul.mubr.f32.gmra.mrb[0].mxu0 %v512
  %v2074 = vpop.f32.mrb[0].mxu0
  %v2075 = vadd.f32 0.0, %v2074
  %v2076 = vpop.f32.mrb[0].mxu0
  %2077 = vmatprep.mubr.f32.mxu0 0.0
  %2078 = vmatmul.mubr.f32.gmra.mrb[0].mxu0 %v515
  %v2079 = vpop.f32.mrb[0].mxu0
  %v2080 = vadd.f32 0.0, %v2079
  %v2081 = vpop.f32.mrb[0].mxu0
  %2082 = vmatprep.mubr.f32.mxu0 0.0
  %2083 = vmatmul.mubr.f32.gmra.mrb[0].mxu0 %v518
  %v2084 = vpop.f32.mrb[0].mxu0
  %v2085 = vadd.f32 0.0, %v2084
  %v2086 = vpop.f32.mrb[0].mxu0
  %2087 = vmatprep.mubr.f32.mxu0 0.0
  %2088 = vmatmul.mubr.f32.gmra.mrb[0].mxu0 %v521
  %v2089 = vpop.f32.mrb[0].mxu0
  %v2090 = vadd.f32 0.0, %v2089
  %v2091 = vpop.f32.mrb[0].mxu0
  %2092 = vmatprep.mubr.f32.mxu0 0.0
  %2093 = vmatmul.mubr.f32.gmra.mrb[0].mxu0 %v524
  %v2094 = vpop.f32.mrb[0].mxu0
  %v2095 = vadd.f32 0.0, %v2094
  %v2096 = vpop.f32.mrb[0].mxu0
  %2097 = vmatprep.mubr.f32.mxu0 0.0
  %2098 = vmatmul.mubr.f32.gmra.mrb[0].mxu0 %v527
  %v2099 = vpop.f32.mrb[0].mxu0
  %v2100 = vadd.f32 0.0, %v2099
  %v2101 = vpop.f32.mrb[0].mxu0
  %2102 = vmatprep.mubr.f32.mxu0 0.0
  %2103 = vmatmul.mubr.f32.gmra.mrb[0].mxu0 %v530
  %v2104 = vpop.f32.mrb[0].mxu0
  %v2105 = vadd.f32 0.0, %v2104
  %v2106 = vpop.f32.mrb[0].mxu0
  %2107 = vmatprep.mubr.f32.mxu0 0.0
  %2108 = vmatmul.mubr.f32.gmra.mrb[0].mxu0 %v533
  %v2109 = vpop.f32.mrb[0].mxu0
  %v2110 = vadd.f32 0.0, %v2109
  %v2111 = vpop.f32.mrb[0].mxu0
  %2112 = vmatprep.mubr.f32.mxu0 0.0
  %2113 = vmatmul.mubr.f32.gmra.mrb[0].mxu0 %v536
  %v2114 = vpop.f32.mrb[0].mxu0
  %v2115 = vadd.f32 0.0, %v2114
  %v2116 = vpop.f32.mrb[0].mxu0
  %2117 = vmatprep.mubr.f32.mxu0 0.0
  %2118 = vmatmul.mubr.f32.gmra.mrb[0].mxu0 %v539
  %v2119 = vpop.f32.mrb[0].mxu0
  %v2120 = vadd.f32 0.0, %v2119
  %v2121 = vpop.f32.mrb[0].mxu0
  %2122 = vmatprep.mubr.f32.mxu0 0.0
  %2123 = vmatmul.mubr.f32.gmra.mrb[0].mxu0 %v542
  %v2124 = vpop.f32.mrb[0].mxu0
  %v2125 = vadd.f32 0.0, %v2124
  %v2126 = vpop.f32.mrb[0].mxu0
  %2127 = vmatprep.mubr.f32.mxu0 0.0
  %2128 = vmatmul.mubr.f32.gmra.mrb[0].mxu0 %v545
  %v2129 = vpop.f32.mrb[0].mxu0
  %v2130 = vadd.f32 0.0, %v2129
  %v2131 = vpop.f32.mrb[0].mxu0
  %2132 = vmatprep.mubr.f32.mxu0 0.0
  %2133 = vmatmul.mubr.f32.gmra.mrb[0].mxu0 %v548
  %v2134 = vpop.f32.mrb[0].mxu0
  %v2135 = vadd.f32 0.0, %v2134
  %v2136 = vpop.f32.mrb[0].mxu0
  %2137 = vmatprep.mubr.f32.mxu0 0.0
  %2138 = vmatmul.mubr.f32.gmra.mrb[0].mxu0 %v551
  %v2139 = vpop.f32.mrb[0].mxu0
  %v2140 = vadd.f32 0.0, %v2139
  %v2141 = vpop.f32.mrb[0].mxu0
  %2142 = vmatprep.mubr.f32.mxu0 0.0
  %2143 = vmatmul.mubr.f32.gmra.mrb[0].mxu0 %v554
  %v2144 = vpop.f32.mrb[0].mxu0
  %v2145 = vadd.f32 0.0, %v2144
  %v2146 = vpop.f32.mrb[0].mxu0
  %2147 = vmatprep.mubr.f32.mxu0 0.0
  %2148 = vmatmul.mubr.f32.gmra.mrb[0].mxu0 %v557
  %v2149 = vpop.f32.mrb[0].mxu0
  %v2150 = vadd.f32 0.0, %v2149
  %v2151 = vpop.f32.mrb[0].mxu0
  %2152 = vmatprep.mubr.f32.mxu0 0.0
  %2153 = vmatmul.mubr.f32.gmra.mrb[0].mxu0 %v560
  %v2154 = vpop.f32.mrb[0].mxu0
  %v2155 = vadd.f32 0.0, %v2154
  %v2156 = vpop.f32.mrb[0].mxu0
  %2157 = vmatprep.mubr.f32.mxu0 0.0
  %2158 = vmatmul.mubr.f32.gmra.mrb[0].mxu0 %v563
  %v2159 = vpop.f32.mrb[0].mxu0
  %v2160 = vadd.f32 0.0, %v2159
  %v2161 = vpop.f32.mrb[0].mxu0
  %2162 = vmatprep.mubr.f32.mxu0 0.0
  %2163 = vmatmul.mubr.f32.gmra.mrb[0].mxu0 %v566
  %v2164 = vpop.f32.mrb[0].mxu0
  %v2165 = vadd.f32 0.0, %v2164
  %v2166 = vpop.f32.mrb[0].mxu0
  %2167 = vmatprep.mubr.f32.mxu0 0.0
  %2168 = vmatmul.mubr.f32.gmra.mrb[0].mxu0 %v569
  %v2169 = vpop.f32.mrb[0].mxu0
  %v2170 = vadd.f32 0.0, %v2169
  %v2171 = vpop.f32.mrb[0].mxu0
  %2172 = vmatprep.mubr.f32.mxu0 0.0
  %2173 = vmatmul.mubr.f32.gmra.mrb[0].mxu0 %v572
  %v2174 = vpop.f32.mrb[0].mxu0
  %v2175 = vadd.f32 0.0, %v2174
  %v2176 = vpop.f32.mrb[0].mxu0
  %2177 = vmatprep.mubr.f32.mxu0 0.0
  %2178 = vmatmul.mubr.f32.gmra.mrb[0].mxu0 %v575
  %v2179 = vpop.f32.mrb[0].mxu0
  %v2180 = vadd.f32 0.0, %v2179
  %v2181 = vpop.f32.mrb[0].mxu0
  %2182 = vmatprep.mubr.f32.mxu0 0.0
  %2183 = vmatmul.mubr.f32.gmra.mrb[0].mxu0 %v1166
  %v2184 = vpop.f32.mrb[0].mxu0
  %v2185 = vadd.f32 0.0, %v2184
  %v2186 = vpop.f32.mrb[0].mxu0
  %2187 = vmatprep.mubr.f32.mxu0 0.0
  %2188 = vmatmul.mubr.f32.gmra.mrb[0].mxu0 %v1169
  %v2189 = vpop.f32.mrb[0].mxu0
  %v2190 = vadd.f32 0.0, %v2189
  %v2191 = vpop.f32.mrb[0].mxu0
  %2192 = vmatprep.mubr.f32.mxu0 0.0
  %2193 = vmatmul.mubr.f32.gmra.mrb[0].mxu0 %v1970
  %v2194 = vpop.f32.mrb[0].mxu0
  %v2195 = vadd.f32 0.0, %v2194
  %v2196 = vpop.f32.mrb[0].mxu0
  %2197 = vmatprep.mubr.f32.mxu0 0.0
  %2198 = vmatmul.mubr.f32.gmra.mrb[0].mxu0 %v1973
  %v2199 = vpop.f32.mrb[0].mxu0
  %v2200 = vadd.f32 0.0, %v2199
  %v2201 = vpop.f32.mrb[0].mxu0
  %2202 = vdwg.mxu0
  %v2203 = vadd.f32 %v1935, %v2045
  %v2204 = vadd.f32 %v1936, %v2050
  %v2205 = vadd.f32 %v1937, %v2055
  %v2206 = vadd.f32 %v1938, %v2060
  %v2207 = vadd.f32 %v1939, %v2065
  %v2208 = vadd.f32 %v1940, %v2070
  %v2209 = vadd.f32 %v1941, %v2075
  %v2210 = vadd.f32 %v1942, %v2080
  %v2211 = vadd.f32 %v1943, %v2085
  %v2212 = vadd.f32 %v1944, %v2090
  %v2213 = vadd.f32 %v1945, %v2095
  %v2214 = vadd.f32 %v1946, %v2100
  %v2215 = vadd.f32 %v1947, %v2105
  %v2216 = vadd.f32 %v1948, %v2110
  %v2217 = vadd.f32 %v1949, %v2115
  %v2218 = vadd.f32 %v1950, %v2120
  %v2219 = vadd.f32 %v1951, %v2125
  %v2220 = vadd.f32 %v1952, %v2130
  %v2221 = vadd.f32 %v1953, %v2135
  %v2222 = vadd.f32 %v1954, %v2140
  %v2223 = vadd.f32 %v1955, %v2145
  %v2224 = vadd.f32 %v1956, %v2150
  %v2225 = vadd.f32 %v1957, %v2155
  %v2226 = vadd.f32 %v1958, %v2160
  %v2227 = vadd.f32 %v1959, %v2165
  %v2228 = vadd.f32 %v1960, %v2170
  %v2229 = vadd.f32 %v1961, %v2175
  %v2230 = vadd.f32 %v1962, %v2180
  %v2231 = vadd.f32 %v1963, %v2185
  %v2232 = vadd.f32 %v1964, %v2190
  %v2233 = vadd.f32 %v1965, %v2195
  %v2234 = vadd.f32 %v1966, %v2200
  %s2235 = scalar_lea.vmem %s1, 56
  %v2236 = vld [vmem:[%s2235] sm:$0x3f]
  %v2238 = vsel %vm155, %v113, 0
  %v2241 = vsel %vm155, %v114, 0
  %v2244 = vsel %vm252, %v2236, 0
  %2246 = vmatprep.subr.mxu0 0.0
  %2247 = vmatpush1.msra.mxu0 %v2244
  %2248 = vmatprep.subr.mxu0 0.0
  %2249 = vmatpush1.msra.mxu0 0.0
  %2250 = vmatprep.subr.mxu0 0.0
  %2251 = vmatpush1.msra.mxu0 0.0
  %2252 = vmatprep.subr.mxu0 0.0
  %2253 = vmatpush1.msra.mxu0 0.0
  %2254 = vmatprep.subr.mxu0 0.0
  %2255 = vmatpush1.msra.mxu0 0.0
  %2256 = vmatprep.subr.mxu0 0.0
  %2257 = vmatpush1.msra.mxu0 0.0
  %2258 = vmatprep.subr.mxu0 0.0
  %2259 = vmatpush1.msra.mxu0 0.0
  %2260 = vmatprep.subr.mxu0 0.0
  %2261 = vmatpush1.msra.mxu0 0.0
  %2262 = vmatprep.subr.mxu0 0.0
  %2263 = vmatpush1.msra.mxu0 0.0
  %2264 = vmatprep.subr.mxu0 0.0
  %2265 = vmatpush1.msra.mxu0 0.0
  %2266 = vmatprep.subr.mxu0 0.0
  %2267 = vmatpush1.msra.mxu0 0.0
  %2268 = vmatprep.subr.mxu0 0.0
  %2269 = vmatpush1.msra.mxu0 0.0
  %2270 = vmatprep.subr.mxu0 0.0
  %2271 = vmatpush1.msra.mxu0 0.0
  %2272 = vmatprep.subr.mxu0 0.0
  %2273 = vmatpush1.msra.mxu0 0.0
  %2274 = vmatprep.subr.mxu0 0.0
  %2275 = vmatpush1.msra.mxu0 0.0
  %2276 = vmatprep.subr.mxu0 0.0
  %2277 = vmatpush1.msra.mxu0 0.0
  %2278 = vmatprep.subr.mxu0 0.0
  %2279 = vmatpush1.msra.mxu0 0.0
  %2280 = vmatprep.subr.mxu0 0.0
  %2281 = vmatpush1.msra.mxu0 0.0
  %2282 = vmatprep.subr.mxu0 0.0
  %2283 = vmatpush1.msra.mxu0 0.0
  %2284 = vmatprep.subr.mxu0 0.0
  %2285 = vmatpush1.msra.mxu0 0.0
  %2286 = vmatprep.subr.mxu0 0.0
  %2287 = vmatpush1.msra.mxu0 0.0
  %2288 = vmatprep.subr.mxu0 0.0
  %2289 = vmatpush1.msra.mxu0 0.0
  %2290 = vmatprep.subr.mxu0 0.0
  %2291 = vmatpush1.msra.mxu0 0.0
  %2292 = vmatprep.subr.mxu0 0.0
  %2293 = vmatpush1.msra.mxu0 0.0
  %2294 = vmatprep.subr.mxu0 0.0
  %2295 = vmatpush1.msra.mxu0 0.0
  %2296 = vmatprep.subr.mxu0 0.0
  %2297 = vmatpush1.msra.mxu0 0.0
  %2298 = vmatprep.subr.mxu0 0.0
  %2299 = vmatpush1.msra.mxu0 0.0
  %2300 = vmatprep.subr.mxu0 0.0
  %2301 = vmatpush1.msra.mxu0 0.0
  %2302 = vmatprep.subr.mxu0 0.0
  %2303 = vmatpush1.msra.mxu0 0.0
  %2304 = vmatprep.subr.mxu0 0.0
  %2305 = vmatpush1.msra.mxu0 0.0
  %2306 = vmatprep.subr.mxu0 0.0
  %2307 = vmatpush1.msra.mxu0 0.0
  %2308 = vmatprep.subr.mxu0 0.0
  %2309 = vmatpush1.msra.mxu0 0.0
  %2310 = vmatprep.mubr.f32.mxu0 0.0
  %2311 = vmatmul.mubr.f32.gmra.mrb[0].mxu0 %v169
  %v2312 = vpop.f32.mrb[0].mxu0
  %v2313 = vadd.f32 0.0, %v2312
  %v2314 = vpop.f32.mrb[0].mxu0
  %2315 = vmatprep.mubr.f32.mxu0 0.0
  %2316 = vmatmul.mubr.f32.gmra.mrb[0].mxu0 %v172
  %v2317 = vpop.f32.mrb[0].mxu0
  %v2318 = vadd.f32 0.0, %v2317
  %v2319 = vpop.f32.mrb[0].mxu0
  %2320 = vmatprep.mubr.f32.mxu0 0.0
  %2321 = vmatmul.mubr.f32.gmra.mrb[0].mxu0 %v175
  %v2322 = vpop.f32.mrb[0].mxu0
  %v2323 = vadd.f32 0.0, %v2322
  %v2324 = vpop.f32.mrb[0].mxu0
  %2325 = vmatprep.mubr.f32.mxu0 0.0
  %2326 = vmatmul.mubr.f32.gmra.mrb[0].mxu0 %v178
  %v2327 = vpop.f32.mrb[0].mxu0
  %v2328 = vadd.f32 0.0, %v2327
  %v2329 = vpop.f32.mrb[0].mxu0
  %2330 = vmatprep.mubr.f32.mxu0 0.0
  %2331 = vmatmul.mubr.f32.gmra.mrb[0].mxu0 %v181
  %v2332 = vpop.f32.mrb[0].mxu0
  %v2333 = vadd.f32 0.0, %v2332
  %v2334 = vpop.f32.mrb[0].mxu0
  %2335 = vmatprep.mubr.f32.mxu0 0.0
  %2336 = vmatmul.mubr.f32.gmra.mrb[0].mxu0 %v184
  %v2337 = vpop.f32.mrb[0].mxu0
  %v2338 = vadd.f32 0.0, %v2337
  %v2339 = vpop.f32.mrb[0].mxu0
  %2340 = vmatprep.mubr.f32.mxu0 0.0
  %2341 = vmatmul.mubr.f32.gmra.mrb[0].mxu0 %v187
  %v2342 = vpop.f32.mrb[0].mxu0
  %v2343 = vadd.f32 0.0, %v2342
  %v2344 = vpop.f32.mrb[0].mxu0
  %2345 = vmatprep.mubr.f32.mxu0 0.0
  %2346 = vmatmul.mubr.f32.gmra.mrb[0].mxu0 %v190
  %v2347 = vpop.f32.mrb[0].mxu0
  %v2348 = vadd.f32 0.0, %v2347
  %v2349 = vpop.f32.mrb[0].mxu0
  %2350 = vmatprep.mubr.f32.mxu0 0.0
  %2351 = vmatmul.mubr.f32.gmra.mrb[0].mxu0 %v193
  %v2352 = vpop.f32.mrb[0].mxu0
  %v2353 = vadd.f32 0.0, %v2352
  %v2354 = vpop.f32.mrb[0].mxu0
  %2355 = vmatprep.mubr.f32.mxu0 0.0
  %2356 = vmatmul.mubr.f32.gmra.mrb[0].mxu0 %v196
  %v2357 = vpop.f32.mrb[0].mxu0
  %v2358 = vadd.f32 0.0, %v2357
  %v2359 = vpop.f32.mrb[0].mxu0
  %2360 = vmatprep.mubr.f32.mxu0 0.0
  %2361 = vmatmul.mubr.f32.gmra.mrb[0].mxu0 %v199
  %v2362 = vpop.f32.mrb[0].mxu0
  %v2363 = vadd.f32 0.0, %v2362
  %v2364 = vpop.f32.mrb[0].mxu0
  %2365 = vmatprep.mubr.f32.mxu0 0.0
  %2366 = vmatmul.mubr.f32.gmra.mrb[0].mxu0 %v202
  %v2367 = vpop.f32.mrb[0].mxu0
  %v2368 = vadd.f32 0.0, %v2367
  %v2369 = vpop.f32.mrb[0].mxu0
  %2370 = vmatprep.mubr.f32.mxu0 0.0
  %2371 = vmatmul.mubr.f32.gmra.mrb[0].mxu0 %v205
  %v2372 = vpop.f32.mrb[0].mxu0
  %v2373 = vadd.f32 0.0, %v2372
  %v2374 = vpop.f32.mrb[0].mxu0
  %2375 = vmatprep.mubr.f32.mxu0 0.0
  %2376 = vmatmul.mubr.f32.gmra.mrb[0].mxu0 %v208
  %v2377 = vpop.f32.mrb[0].mxu0
  %v2378 = vadd.f32 0.0, %v2377
  %v2379 = vpop.f32.mrb[0].mxu0
  %2380 = vmatprep.mubr.f32.mxu0 0.0
  %2381 = vmatmul.mubr.f32.gmra.mrb[0].mxu0 %v211
  %v2382 = vpop.f32.mrb[0].mxu0
  %v2383 = vadd.f32 0.0, %v2382
  %v2384 = vpop.f32.mrb[0].mxu0
  %2385 = vmatprep.mubr.f32.mxu0 0.0
  %2386 = vmatmul.mubr.f32.gmra.mrb[0].mxu0 %v214
  %v2387 = vpop.f32.mrb[0].mxu0
  %v2388 = vadd.f32 0.0, %v2387
  %v2389 = vpop.f32.mrb[0].mxu0
  %2390 = vmatprep.mubr.f32.mxu0 0.0
  %2391 = vmatmul.mubr.f32.gmra.mrb[0].mxu0 %v217
  %v2392 = vpop.f32.mrb[0].mxu0
  %v2393 = vadd.f32 0.0, %v2392
  %v2394 = vpop.f32.mrb[0].mxu0
  %2395 = vmatprep.mubr.f32.mxu0 0.0
  %2396 = vmatmul.mubr.f32.gmra.mrb[0].mxu0 %v220
  %v2397 = vpop.f32.mrb[0].mxu0
  %v2398 = vadd.f32 0.0, %v2397
  %v2399 = vpop.f32.mrb[0].mxu0
  %2400 = vmatprep.mubr.f32.mxu0 0.0
  %2401 = vmatmul.mubr.f32.gmra.mrb[0].mxu0 %v223
  %v2402 = vpop.f32.mrb[0].mxu0
  %v2403 = vadd.f32 0.0, %v2402
  %v2404 = vpop.f32.mrb[0].mxu0
  %2405 = vmatprep.mubr.f32.mxu0 0.0
  %2406 = vmatmul.mubr.f32.gmra.mrb[0].mxu0 %v226
  %v2407 = vpop.f32.mrb[0].mxu0
  %v2408 = vadd.f32 0.0, %v2407
  %v2409 = vpop.f32.mrb[0].mxu0
  %2410 = vmatprep.mubr.f32.mxu0 0.0
  %2411 = vmatmul.mubr.f32.gmra.mrb[0].mxu0 %v229
  %v2412 = vpop.f32.mrb[0].mxu0
  %v2413 = vadd.f32 0.0, %v2412
  %v2414 = vpop.f32.mrb[0].mxu0
  %2415 = vmatprep.mubr.f32.mxu0 0.0
  %2416 = vmatmul.mubr.f32.gmra.mrb[0].mxu0 %v232
  %v2417 = vpop.f32.mrb[0].mxu0
  %v2418 = vadd.f32 0.0, %v2417
  %v2419 = vpop.f32.mrb[0].mxu0
  %2420 = vmatprep.mubr.f32.mxu0 0.0
  %2421 = vmatmul.mubr.f32.gmra.mrb[0].mxu0 %v235
  %v2422 = vpop.f32.mrb[0].mxu0
  %v2423 = vadd.f32 0.0, %v2422
  %v2424 = vpop.f32.mrb[0].mxu0
  %2425 = vmatprep.mubr.f32.mxu0 0.0
  %2426 = vmatmul.mubr.f32.gmra.mrb[0].mxu0 %v238
  %v2427 = vpop.f32.mrb[0].mxu0
  %v2428 = vadd.f32 0.0, %v2427
  %v2429 = vpop.f32.mrb[0].mxu0
  %2430 = vmatprep.mubr.f32.mxu0 0.0
  %2431 = vmatmul.mubr.f32.gmra.mrb[0].mxu0 %v241
  %v2432 = vpop.f32.mrb[0].mxu0
  %v2433 = vadd.f32 0.0, %v2432
  %v2434 = vpop.f32.mrb[0].mxu0
  %2435 = vmatprep.mubr.f32.mxu0 0.0
  %2436 = vmatmul.mubr.f32.gmra.mrb[0].mxu0 %v244
  %v2437 = vpop.f32.mrb[0].mxu0
  %v2438 = vadd.f32 0.0, %v2437
  %v2439 = vpop.f32.mrb[0].mxu0
  %2440 = vmatprep.mubr.f32.mxu0 0.0
  %2441 = vmatmul.mubr.f32.gmra.mrb[0].mxu0 %v247
  %v2442 = vpop.f32.mrb[0].mxu0
  %v2443 = vadd.f32 0.0, %v2442
  %v2444 = vpop.f32.mrb[0].mxu0
  %2445 = vmatprep.mubr.f32.mxu0 0.0
  %2446 = vmatmul.mubr.f32.gmra.mrb[0].mxu0 %v250
  %v2447 = vpop.f32.mrb[0].mxu0
  %v2448 = vadd.f32 0.0, %v2447
  %v2449 = vpop.f32.mrb[0].mxu0
  %2450 = vmatprep.mubr.f32.mxu0 0.0
  %2451 = vmatmul.mubr.f32.gmra.mrb[0].mxu0 %v1434
  %v2452 = vpop.f32.mrb[0].mxu0
  %v2453 = vadd.f32 0.0, %v2452
  %v2454 = vpop.f32.mrb[0].mxu0
  %2455 = vmatprep.mubr.f32.mxu0 0.0
  %2456 = vmatmul.mubr.f32.gmra.mrb[0].mxu0 %v1437
  %v2457 = vpop.f32.mrb[0].mxu0
  %v2458 = vadd.f32 0.0, %v2457
  %v2459 = vpop.f32.mrb[0].mxu0
  %2460 = vmatprep.mubr.f32.mxu0 0.0
  %2461 = vmatmul.mubr.f32.gmra.mrb[0].mxu0 %v2238
  %v2462 = vpop.f32.mrb[0].mxu0
  %v2463 = vadd.f32 0.0, %v2462
  %v2464 = vpop.f32.mrb[0].mxu0
  %2465 = vmatprep.mubr.f32.mxu0 0.0
  %2466 = vmatmul.mubr.f32.gmra.mrb[0].mxu0 %v2241
  %v2467 = vpop.f32.mrb[0].mxu0
  %v2468 = vadd.f32 0.0, %v2467
  %v2469 = vpop.f32.mrb[0].mxu0
  %2470 = vdwg.mxu0
  %v2471 = vadd.f32 %v2203, %v2313
  %v2472 = vadd.f32 %v2204, %v2318
  %v2473 = vadd.f32 %v2205, %v2323
  %v2474 = vadd.f32 %v2206, %v2328
  %v2475 = vadd.f32 %v2207, %v2333
  %v2476 = vadd.f32 %v2208, %v2338
  %v2477 = vadd.f32 %v2209, %v2343
  %v2478 = vadd.f32 %v2210, %v2348
  %v2479 = vadd.f32 %v2211, %v2353
  %v2480 = vadd.f32 %v2212, %v2358
  %v2481 = vadd.f32 %v2213, %v2363
  %v2482 = vadd.f32 %v2214, %v2368
  %v2483 = vadd.f32 %v2215, %v2373
  %v2484 = vadd.f32 %v2216, %v2378
  %v2485 = vadd.f32 %v2217, %v2383
  %v2486 = vadd.f32 %v2218, %v2388
  %v2487 = vadd.f32 %v2219, %v2393
  %v2488 = vadd.f32 %v2220, %v2398
  %v2489 = vadd.f32 %v2221, %v2403
  %v2490 = vadd.f32 %v2222, %v2408
  %v2491 = vadd.f32 %v2223, %v2413
  %v2492 = vadd.f32 %v2224, %v2418
  %v2493 = vadd.f32 %v2225, %v2423
  %v2494 = vadd.f32 %v2226, %v2428
  %v2495 = vadd.f32 %v2227, %v2433
  %v2496 = vadd.f32 %v2228, %v2438
  %v2497 = vadd.f32 %v2229, %v2443
  %v2498 = vadd.f32 %v2230, %v2448
  %v2499 = vadd.f32 %v2231, %v2453
  %v2500 = vadd.f32 %v2232, %v2458
  %v2501 = vadd.f32 %v2233, %v2463
  %v2502 = vadd.f32 %v2234, %v2468
  %s2503 = scalar_lea.vmem %s1, 64
  %v2504 = vld [vmem:[%s2503] sm:$0x3f]
  %v2506 = vsel %vm155, %v150, 0
  %v2509 = vsel %vm155, %v151, 0
  %v2512 = vsel %vm252, %v2504, 0
  %2514 = vmatprep.subr.mxu0 0.0
  %2515 = vmatpush1.msra.mxu0 %v2512
  %2516 = vmatprep.subr.mxu0 0.0
  %2517 = vmatpush1.msra.mxu0 0.0
  %2518 = vmatprep.subr.mxu0 0.0
  %2519 = vmatpush1.msra.mxu0 0.0
  %2520 = vmatprep.subr.mxu0 0.0
  %2521 = vmatpush1.msra.mxu0 0.0
  %2522 = vmatprep.subr.mxu0 0.0
  %2523 = vmatpush1.msra.mxu0 0.0
  %2524 = vmatprep.subr.mxu0 0.0
  %2525 = vmatpush1.msra.mxu0 0.0
  %2526 = vmatprep.subr.mxu0 0.0
  %2527 = vmatpush1.msra.mxu0 0.0
  %2528 = vmatprep.subr.mxu0 0.0
  %2529 = vmatpush1.msra.mxu0 0.0
  %2530 = vmatprep.subr.mxu0 0.0
  %2531 = vmatpush1.msra.mxu0 0.0
  %2532 = vmatprep.subr.mxu0 0.0
  %2533 = vmatpush1.msra.mxu0 0.0
  %2534 = vmatprep.subr.mxu0 0.0
  %2535 = vmatpush1.msra.mxu0 0.0
  %2536 = vmatprep.subr.mxu0 0.0
  %2537 = vmatpush1.msra.mxu0 0.0
  %2538 = vmatprep.subr.mxu0 0.0
  %2539 = vmatpush1.msra.mxu0 0.0
  %2540 = vmatprep.subr.mxu0 0.0
  %2541 = vmatpush1.msra.mxu0 0.0
  %2542 = vmatprep.subr.mxu0 0.0
  %2543 = vmatpush1.msra.mxu0 0.0
  %2544 = vmatprep.subr.mxu0 0.0
  %2545 = vmatpush1.msra.mxu0 0.0
  %2546 = vmatprep.subr.mxu0 0.0
  %2547 = vmatpush1.msra.mxu0 0.0
  %2548 = vmatprep.subr.mxu0 0.0
  %2549 = vmatpush1.msra.mxu0 0.0
  %2550 = vmatprep.subr.mxu0 0.0
  %2551 = vmatpush1.msra.mxu0 0.0
  %2552 = vmatprep.subr.mxu0 0.0
  %2553 = vmatpush1.msra.mxu0 0.0
  %2554 = vmatprep.subr.mxu0 0.0
  %2555 = vmatpush1.msra.mxu0 0.0
  %2556 = vmatprep.subr.mxu0 0.0
  %2557 = vmatpush1.msra.mxu0 0.0
  %2558 = vmatprep.subr.mxu0 0.0
  %2559 = vmatpush1.msra.mxu0 0.0
  %2560 = vmatprep.subr.mxu0 0.0
  %2561 = vmatpush1.msra.mxu0 0.0
  %2562 = vmatprep.subr.mxu0 0.0
  %2563 = vmatpush1.msra.mxu0 0.0
  %2564 = vmatprep.subr.mxu0 0.0
  %2565 = vmatpush1.msra.mxu0 0.0
  %2566 = vmatprep.subr.mxu0 0.0
  %2567 = vmatpush1.msra.mxu0 0.0
  %2568 = vmatprep.subr.mxu0 0.0
  %2569 = vmatpush1.msra.mxu0 0.0
  %2570 = vmatprep.subr.mxu0 0.0
  %2571 = vmatpush1.msra.mxu0 0.0
  %2572 = vmatprep.subr.mxu0 0.0
  %2573 = vmatpush1.msra.mxu0 0.0
  %2574 = vmatprep.subr.mxu0 0.0
  %2575 = vmatpush1.msra.mxu0 0.0
  %2576 = vmatprep.subr.mxu0 0.0
  %2577 = vmatpush1.msra.mxu0 0.0
  %2578 = vmatprep.mubr.f32.mxu0 0.0
  %2579 = vmatmul.mubr.f32.gmra.mrb[0].mxu0 %v820
  %v2580 = vpop.f32.mrb[0].mxu0
  %v2581 = vadd.f32 0.0, %v2580
  %v2582 = vpop.f32.mrb[0].mxu0
  %2583 = vmatprep.mubr.f32.mxu0 0.0
  %2584 = vmatmul.mubr.f32.gmra.mrb[0].mxu0 %v823
  %v2585 = vpop.f32.mrb[0].mxu0
  %v2586 = vadd.f32 0.0, %v2585
  %v2587 = vpop.f32.mrb[0].mxu0
  %2588 = vmatprep.mubr.f32.mxu0 0.0
  %2589 = vmatmul.mubr.f32.gmra.mrb[0].mxu0 %v826
  %v2590 = vpop.f32.mrb[0].mxu0
  %v2591 = vadd.f32 0.0, %v2590
  %v2592 = vpop.f32.mrb[0].mxu0
  %2593 = vmatprep.mubr.f32.mxu0 0.0
  %2594 = vmatmul.mubr.f32.gmra.mrb[0].mxu0 %v829
  %v2595 = vpop.f32.mrb[0].mxu0
  %v2596 = vadd.f32 0.0, %v2595
  %v2597 = vpop.f32.mrb[0].mxu0
  %2598 = vmatprep.mubr.f32.mxu0 0.0
  %2599 = vmatmul.mubr.f32.gmra.mrb[0].mxu0 %v832
  %v2600 = vpop.f32.mrb[0].mxu0
  %v2601 = vadd.f32 0.0, %v2600
  %v2602 = vpop.f32.mrb[0].mxu0
  %2603 = vmatprep.mubr.f32.mxu0 0.0
  %2604 = vmatmul.mubr.f32.gmra.mrb[0].mxu0 %v835
  %v2605 = vpop.f32.mrb[0].mxu0
  %v2606 = vadd.f32 0.0, %v2605
  %v2607 = vpop.f32.mrb[0].mxu0
  %2608 = vmatprep.mubr.f32.mxu0 0.0
  %2609 = vmatmul.mubr.f32.gmra.mrb[0].mxu0 %v838
  %v2610 = vpop.f32.mrb[0].mxu0
  %v2611 = vadd.f32 0.0, %v2610
  %v2612 = vpop.f32.mrb[0].mxu0
  %2613 = vmatprep.mubr.f32.mxu0 0.0
  %2614 = vmatmul.mubr.f32.gmra.mrb[0].mxu0 %v841
  %v2615 = vpop.f32.mrb[0].mxu0
  %v2616 = vadd.f32 0.0, %v2615
  %v2617 = vpop.f32.mrb[0].mxu0
  %2618 = vmatprep.mubr.f32.mxu0 0.0
  %2619 = vmatmul.mubr.f32.gmra.mrb[0].mxu0 %v844
  %v2620 = vpop.f32.mrb[0].mxu0
  %v2621 = vadd.f32 0.0, %v2620
  %v2622 = vpop.f32.mrb[0].mxu0
  %2623 = vmatprep.mubr.f32.mxu0 0.0
  %2624 = vmatmul.mubr.f32.gmra.mrb[0].mxu0 %v847
  %v2625 = vpop.f32.mrb[0].mxu0
  %v2626 = vadd.f32 0.0, %v2625
  %v2627 = vpop.f32.mrb[0].mxu0
  %2628 = vmatprep.mubr.f32.mxu0 0.0
  %2629 = vmatmul.mubr.f32.gmra.mrb[0].mxu0 %v850
  %v2630 = vpop.f32.mrb[0].mxu0
  %v2631 = vadd.f32 0.0, %v2630
  %v2632 = vpop.f32.mrb[0].mxu0
  %2633 = vmatprep.mubr.f32.mxu0 0.0
  %2634 = vmatmul.mubr.f32.gmra.mrb[0].mxu0 %v853
  %v2635 = vpop.f32.mrb[0].mxu0
  %v2636 = vadd.f32 0.0, %v2635
  %v2637 = vpop.f32.mrb[0].mxu0
  %2638 = vmatprep.mubr.f32.mxu0 0.0
  %2639 = vmatmul.mubr.f32.gmra.mrb[0].mxu0 %v856
  %v2640 = vpop.f32.mrb[0].mxu0
  %v2641 = vadd.f32 0.0, %v2640
  %v2642 = vpop.f32.mrb[0].mxu0
  %2643 = vmatprep.mubr.f32.mxu0 0.0
  %2644 = vmatmul.mubr.f32.gmra.mrb[0].mxu0 %v859
  %v2645 = vpop.f32.mrb[0].mxu0
  %v2646 = vadd.f32 0.0, %v2645
  %v2647 = vpop.f32.mrb[0].mxu0
  %2648 = vmatprep.mubr.f32.mxu0 0.0
  %2649 = vmatmul.mubr.f32.gmra.mrb[0].mxu0 %v862
  %v2650 = vpop.f32.mrb[0].mxu0
  %v2651 = vadd.f32 0.0, %v2650
  %v2652 = vpop.f32.mrb[0].mxu0
  %2653 = vmatprep.mubr.f32.mxu0 0.0
  %2654 = vmatmul.mubr.f32.gmra.mrb[0].mxu0 %v865
  %v2655 = vpop.f32.mrb[0].mxu0
  %v2656 = vadd.f32 0.0, %v2655
  %v2657 = vpop.f32.mrb[0].mxu0
  %2658 = vmatprep.mubr.f32.mxu0 0.0
  %2659 = vmatmul.mubr.f32.gmra.mrb[0].mxu0 %v868
  %v2660 = vpop.f32.mrb[0].mxu0
  %v2661 = vadd.f32 0.0, %v2660
  %v2662 = vpop.f32.mrb[0].mxu0
  %2663 = vmatprep.mubr.f32.mxu0 0.0
  %2664 = vmatmul.mubr.f32.gmra.mrb[0].mxu0 %v871
  %v2665 = vpop.f32.mrb[0].mxu0
  %v2666 = vadd.f32 0.0, %v2665
  %v2667 = vpop.f32.mrb[0].mxu0
  %2668 = vmatprep.mubr.f32.mxu0 0.0
  %2669 = vmatmul.mubr.f32.gmra.mrb[0].mxu0 %v874
  %v2670 = vpop.f32.mrb[0].mxu0
  %v2671 = vadd.f32 0.0, %v2670
  %v2672 = vpop.f32.mrb[0].mxu0
  %2673 = vmatprep.mubr.f32.mxu0 0.0
  %2674 = vmatmul.mubr.f32.gmra.mrb[0].mxu0 %v877
  %v2675 = vpop.f32.mrb[0].mxu0
  %v2676 = vadd.f32 0.0, %v2675
  %v2677 = vpop.f32.mrb[0].mxu0
  %2678 = vmatprep.mubr.f32.mxu0 0.0
  %2679 = vmatmul.mubr.f32.gmra.mrb[0].mxu0 %v880
  %v2680 = vpop.f32.mrb[0].mxu0
  %v2681 = vadd.f32 0.0, %v2680
  %v2682 = vpop.f32.mrb[0].mxu0
  %2683 = vmatprep.mubr.f32.mxu0 0.0
  %2684 = vmatmul.mubr.f32.gmra.mrb[0].mxu0 %v883
  %v2685 = vpop.f32.mrb[0].mxu0
  %v2686 = vadd.f32 0.0, %v2685
  %v2687 = vpop.f32.mrb[0].mxu0
  %2688 = vmatprep.mubr.f32.mxu0 0.0
  %2689 = vmatmul.mubr.f32.gmra.mrb[0].mxu0 %v886
  %v2690 = vpop.f32.mrb[0].mxu0
  %v2691 = vadd.f32 0.0, %v2690
  %v2692 = vpop.f32.mrb[0].mxu0
  %2693 = vmatprep.mubr.f32.mxu0 0.0
  %2694 = vmatmul.mubr.f32.gmra.mrb[0].mxu0 %v889
  %v2695 = vpop.f32.mrb[0].mxu0
  %v2696 = vadd.f32 0.0, %v2695
  %v2697 = vpop.f32.mrb[0].mxu0
  %2698 = vmatprep.mubr.f32.mxu0 0.0
  %2699 = vmatmul.mubr.f32.gmra.mrb[0].mxu0 %v892
  %v2700 = vpop.f32.mrb[0].mxu0
  %v2701 = vadd.f32 0.0, %v2700
  %v2702 = vpop.f32.mrb[0].mxu0
  %2703 = vmatprep.mubr.f32.mxu0 0.0
  %2704 = vmatmul.mubr.f32.gmra.mrb[0].mxu0 %v895
  %v2705 = vpop.f32.mrb[0].mxu0
  %v2706 = vadd.f32 0.0, %v2705
  %v2707 = vpop.f32.mrb[0].mxu0
  %2708 = vmatprep.mubr.f32.mxu0 0.0
  %2709 = vmatmul.mubr.f32.gmra.mrb[0].mxu0 %v898
  %v2710 = vpop.f32.mrb[0].mxu0
  %v2711 = vadd.f32 0.0, %v2710
  %v2712 = vpop.f32.mrb[0].mxu0
  %2713 = vmatprep.mubr.f32.mxu0 0.0
  %2714 = vmatmul.mubr.f32.gmra.mrb[0].mxu0 %v901
  %v2715 = vpop.f32.mrb[0].mxu0
  %v2716 = vadd.f32 0.0, %v2715
  %v2717 = vpop.f32.mrb[0].mxu0
  %2718 = vmatprep.mubr.f32.mxu0 0.0
  %2719 = vmatmul.mubr.f32.gmra.mrb[0].mxu0 %v1702
  %v2720 = vpop.f32.mrb[0].mxu0
  %v2721 = vadd.f32 0.0, %v2720
  %v2722 = vpop.f32.mrb[0].mxu0
  %2723 = vmatprep.mubr.f32.mxu0 0.0
  %2724 = vmatmul.mubr.f32.gmra.mrb[0].mxu0 %v1705
  %v2725 = vpop.f32.mrb[0].mxu0
  %v2726 = vadd.f32 0.0, %v2725
  %v2727 = vpop.f32.mrb[0].mxu0
  %2728 = vmatprep.mubr.f32.mxu0 0.0
  %2729 = vmatmul.mubr.f32.gmra.mrb[0].mxu0 %v2506
  %v2730 = vpop.f32.mrb[0].mxu0
  %v2731 = vadd.f32 0.0, %v2730
  %v2732 = vpop.f32.mrb[0].mxu0
  %2733 = vmatprep.mubr.f32.mxu0 0.0
  %2734 = vmatmul.mubr.f32.gmra.mrb[0].mxu0 %v2509
  %v2735 = vpop.f32.mrb[0].mxu0
  %v2736 = vadd.f32 0.0, %v2735
  %v2737 = vpop.f32.mrb[0].mxu0
  %2738 = vdwg.mxu0
  %v2739 = vadd.f32 %v2471, %v2581
  %v2740 = vadd.f32 %v2472, %v2586
  %v2741 = vadd.f32 %v2473, %v2591
  %v2742 = vadd.f32 %v2474, %v2596
  %v2743 = vadd.f32 %v2475, %v2601
  %v2744 = vadd.f32 %v2476, %v2606
  %v2745 = vadd.f32 %v2477, %v2611
  %v2746 = vadd.f32 %v2478, %v2616
  %v2747 = vadd.f32 %v2479, %v2621
  %v2748 = vadd.f32 %v2480, %v2626
  %v2749 = vadd.f32 %v2481, %v2631
  %v2750 = vadd.f32 %v2482, %v2636
  %v2751 = vadd.f32 %v2483, %v2641
  %v2752 = vadd.f32 %v2484, %v2646
  %v2753 = vadd.f32 %v2485, %v2651
  %v2754 = vadd.f32 %v2486, %v2656
  %v2755 = vadd.f32 %v2487, %v2661
  %v2756 = vadd.f32 %v2488, %v2666
  %v2757 = vadd.f32 %v2489, %v2671
  %v2758 = vadd.f32 %v2490, %v2676
  %v2759 = vadd.f32 %v2491, %v2681
  %v2760 = vadd.f32 %v2492, %v2686
  %v2761 = vadd.f32 %v2493, %v2691
  %v2762 = vadd.f32 %v2494, %v2696
  %v2763 = vadd.f32 %v2495, %v2701
  %v2764 = vadd.f32 %v2496, %v2706
  %v2765 = vadd.f32 %v2497, %v2711
  %v2766 = vadd.f32 %v2498, %v2716
  %v2767 = vadd.f32 %v2499, %v2721
  %v2768 = vadd.f32 %v2500, %v2726
  %v2769 = vadd.f32 %v2501, %v2731
  %v2770 = vadd.f32 %v2502, %v2736
  %v2771 = vld [vmem:[%s2] sm:$0x1]
  %v2773 = vlaneseq
  %v2774 = vshrl.u32 %v2773, 7
  %v2775 = vsub.s32 0, %v2774
  %v2776 = vrot.slane %v2771, %v2775
  %v2778 = vadd.f32 %v2739, %v2776
  %v2779 = vadd.f32 %v2740, %v2776
  %v2780 = vadd.f32 %v2741, %v2776
  %v2781 = vadd.f32 %v2742, %v2776
  %v2782 = vadd.f32 %v2743, %v2776
  %v2783 = vadd.f32 %v2744, %v2776
  %v2784 = vadd.f32 %v2745, %v2776
  %v2785 = vadd.f32 %v2746, %v2776
  %v2786 = vadd.f32 %v2747, %v2776
  %v2787 = vadd.f32 %v2748, %v2776
  %v2788 = vadd.f32 %v2749, %v2776
  %v2789 = vadd.f32 %v2750, %v2776
  %v2790 = vadd.f32 %v2751, %v2776
  %v2791 = vadd.f32 %v2752, %v2776
  %v2792 = vadd.f32 %v2753, %v2776
  %v2793 = vadd.f32 %v2754, %v2776
  %v2794 = vadd.f32 %v2755, %v2776
  %v2795 = vadd.f32 %v2756, %v2776
  %v2796 = vadd.f32 %v2757, %v2776
  %v2797 = vadd.f32 %v2758, %v2776
  %v2798 = vadd.f32 %v2759, %v2776
  %v2799 = vadd.f32 %v2760, %v2776
  %v2800 = vadd.f32 %v2761, %v2776
  %v2801 = vadd.f32 %v2762, %v2776
  %v2802 = vadd.f32 %v2763, %v2776
  %v2803 = vadd.f32 %v2764, %v2776
  %v2804 = vadd.f32 %v2765, %v2776
  %v2805 = vadd.f32 %v2766, %v2776
  %v2806 = vadd.f32 %v2767, %v2776
  %v2807 = vadd.f32 %v2768, %v2776
  %v2808 = vadd.f32 %v2769, %v2776
  %v2809 = vadd.f32 %v2770, %v2776
  %v2810 = vmax.f32 %v2778, 0.0
  %v2811 = vmax.f32 %v2779, 0.0
  %v2812 = vmax.f32 %v2780, 0.0
  %v2813 = vmax.f32 %v2781, 0.0
  %v2814 = vmax.f32 %v2782, 0.0
  %v2815 = vmax.f32 %v2783, 0.0
  %v2816 = vmax.f32 %v2784, 0.0
  %v2817 = vmax.f32 %v2785, 0.0
  %v2818 = vmax.f32 %v2786, 0.0
  %v2819 = vmax.f32 %v2787, 0.0
  %v2820 = vmax.f32 %v2788, 0.0
  %v2821 = vmax.f32 %v2789, 0.0
  %v2822 = vmax.f32 %v2790, 0.0
  %v2823 = vmax.f32 %v2791, 0.0
  %v2824 = vmax.f32 %v2792, 0.0
  %v2825 = vmax.f32 %v2793, 0.0
  %v2826 = vmax.f32 %v2794, 0.0
  %v2827 = vmax.f32 %v2795, 0.0
  %v2828 = vmax.f32 %v2796, 0.0
  %v2829 = vmax.f32 %v2797, 0.0
  %v2830 = vmax.f32 %v2798, 0.0
  %v2831 = vmax.f32 %v2799, 0.0
  %v2832 = vmax.f32 %v2800, 0.0
  %v2833 = vmax.f32 %v2801, 0.0
  %v2834 = vmax.f32 %v2802, 0.0
  %v2835 = vmax.f32 %v2803, 0.0
  %v2836 = vmax.f32 %v2804, 0.0
  %v2837 = vmax.f32 %v2805, 0.0
  %v2838 = vmax.f32 %v2806, 0.0
  %v2839 = vmax.f32 %v2807, 0.0
  %v2840 = vmax.f32 %v2808, 0.0
  %v2841 = vmax.f32 %v2809, 0.0
  %v2842 = vpack.c.bf16 %v2811, %v2810
  %v2843 = vpack.c.bf16 %v2813, %v2812
  %v2844 = vpack.c.bf16 %v2815, %v2814
  %v2845 = vpack.c.bf16 %v2817, %v2816
  %v2846 = vpack.c.bf16 %v2819, %v2818
  %v2847 = vpack.c.bf16 %v2821, %v2820
  %v2848 = vpack.c.bf16 %v2823, %v2822
  %v2849 = vpack.c.bf16 %v2825, %v2824
  %v2850 = vpack.c.bf16 %v2827, %v2826
  %v2851 = vpack.c.bf16 %v2829, %v2828
  %v2852 = vpack.c.bf16 %v2831, %v2830
  %v2853 = vpack.c.bf16 %v2833, %v2832
  %v2854 = vpack.c.bf16 %v2835, %v2834
  %v2855 = vpack.c.bf16 %v2837, %v2836
  %v2856 = vpack.c.bf16 %v2839, %v2838
  %v2857 = vpack.c.bf16 %v2841, %v2840
  %v2858 = vld [vmem:[%s5] sm:$0xff]
  %v2859 = vld [vmem:[%s5 + $0x8] sm:$0xff]
  %v2860 = vld [vmem:[%s5 + $0x10] sm:$0xff]
  %v2861 = vld [vmem:[%s5 + $0x18] sm:$0xff]
  %v2862 = vld [vmem:[%s5 + $0x20] sm:$0xff]
  %v2863 = vld [vmem:[%s5 + $0x28] sm:$0xff]
  %v2864 = vld [vmem:[%s5 + $0x30] sm:$0xff]
  %v2865 = vld [vmem:[%s5 + $0x38] sm:$0xff]
  %v2874 = vunpack.c.l.b16 %v2858
  %v2875 = vunpack.c.h.b16 %v2858
  %v2876 = vunpack.c.l.b16 %v2859
  %v2877 = vunpack.c.h.b16 %v2859
  %v2878 = vunpack.c.l.b16 %v2860
  %v2879 = vunpack.c.h.b16 %v2860
  %v2880 = vunpack.c.l.b16 %v2861
  %v2881 = vunpack.c.h.b16 %v2861
  %v2882 = vunpack.c.l.b16 %v2862
  %v2883 = vunpack.c.h.b16 %v2862
  %v2884 = vunpack.c.l.b16 %v2863
  %v2885 = vunpack.c.h.b16 %v2863
  %v2886 = vunpack.c.l.b16 %v2864
  %v2887 = vunpack.c.h.b16 %v2864
  %v2888 = vunpack.c.l.b16 %v2865
  %v2889 = vunpack.c.h.b16 %v2865
  %v2890 = vpack.c.b16 %v2876, %v2874
  %v2891 = vpack.c.b16 %v2877, %v2875
  %v2892 = vpack.c.b16 %v2880, %v2878
  %v2893 = vpack.c.b16 %v2881, %v2879
  %v2894 = vpack.c.b16 %v2884, %v2882
  %v2895 = vpack.c.b16 %v2885, %v2883
  %v2896 = vpack.c.b16 %v2888, %v2886
  %v2897 = vpack.c.b16 %v2889, %v2887
  %2906 = vmatprep.subr.bf16.mxu0 0
  %2907 = vmatpush1.bf16.msra.mxu0 %v2842
  %2908 = vmatprep.subr.bf16.mxu0 0
  %2909 = vmatpush1.bf16.msra.mxu0 %v2843
  %2910 = vmatprep.subr.bf16.mxu0 0
  %2911 = vmatpush1.bf16.msra.mxu0 %v2844
  %2912 = vmatprep.subr.bf16.mxu0 0
  %2913 = vmatpush1.bf16.msra.mxu0 %v2845
  %2914 = vmatprep.subr.bf16.mxu0 0
  %2915 = vmatpush1.bf16.msra.mxu0 %v2846
  %2916 = vmatprep.subr.bf16.mxu0 0
  %2917 = vmatpush1.bf16.msra.mxu0 %v2847
  %2918 = vmatprep.subr.bf16.mxu0 0
  %2919 = vmatpush1.bf16.msra.mxu0 %v2848
  %2920 = vmatprep.subr.bf16.mxu0 0
  %2921 = vmatpush1.bf16.msra.mxu0 %v2849
  %2922 = vmatprep.subr.bf16.mxu0 0
  %2923 = vmatpush1.bf16.msra.mxu0 %v2850
  %2924 = vmatprep.subr.bf16.mxu0 0
  %2925 = vmatpush1.bf16.msra.mxu0 %v2851
  %2926 = vmatprep.subr.bf16.mxu0 0
  %2927 = vmatpush1.bf16.msra.mxu0 %v2852
  %2928 = vmatprep.subr.bf16.mxu0 0
  %2929 = vmatpush1.bf16.msra.mxu0 %v2853
  %2930 = vmatprep.subr.bf16.mxu0 0
  %2931 = vmatpush1.bf16.msra.mxu0 %v2854
  %2932 = vmatprep.subr.bf16.mxu0 0
  %2933 = vmatpush1.bf16.msra.mxu0 %v2855
  %2934 = vmatprep.subr.bf16.mxu0 0
  %2935 = vmatpush1.bf16.msra.mxu0 %v2856
  %2936 = vmatprep.subr.bf16.mxu0 0
  %2937 = vmatpush1.bf16.msra.mxu0 %v2857
  %2938 = vmatprep.mubr.bf16.mxu0 %v2891
  %2939 = vmatmul.mubr.bf16.gmra.mrb[0].mxu0 %v2890
  %v2940 = vpop.f32.mrb[0].mxu0
  %v2941 = vadd.f32 0.0, %v2940
  %v2942 = vpop.f32.mrb[0].mxu0
  %v2943 = vpop.f32.mrb[0].mxu0
  %v2944 = vadd.f32 0.0, %v2943
  %v2945 = vpop.f32.mrb[0].mxu0
  %2946 = vmatprep.mubr.bf16.mxu0 %v2893
  %2947 = vmatmul.mubr.bf16.gmra.mrb[0].mxu0 %v2892
  %v2948 = vpop.f32.mrb[0].mxu0
  %v2949 = vadd.f32 0.0, %v2948
  %v2950 = vpop.f32.mrb[0].mxu0
  %v2951 = vpop.f32.mrb[0].mxu0
  %v2952 = vadd.f32 0.0, %v2951
  %v2953 = vpop.f32.mrb[0].mxu0
  %2954 = vmatprep.mubr.bf16.mxu0 %v2895
  %2955 = vmatmul.mubr.bf16.gmra.mrb[0].mxu0 %v2894
  %v2956 = vpop.f32.mrb[0].mxu0
  %v2957 = vadd.f32 0.0, %v2956
  %v2958 = vpop.f32.mrb[0].mxu0
  %v2959 = vpop.f32.mrb[0].mxu0
  %v2960 = vadd.f32 0.0, %v2959
  %v2961 = vpop.f32.mrb[0].mxu0
  %2962 = vmatprep.mubr.bf16.mxu0 %v2897
  %2963 = vmatmul.mubr.bf16.gmra.mrb[0].mxu0 %v2896
  %v2964 = vpop.f32.mrb[0].mxu0
  %v2965 = vadd.f32 0.0, %v2964
  %v2966 = vpop.f32.mrb[0].mxu0
  %v2967 = vpop.f32.mrb[0].mxu0
  %v2968 = vadd.f32 0.0, %v2967
  %v2969 = vpop.f32.mrb[0].mxu0
  %2970 = vdwg.mxu0
  %v2971 = vld [vmem:[%s3] sm:$0xff]
  %v2972 = vld [vmem:[%s3 + $0x8] sm:$0xff]
  %s2973 = scalar_lea.vmem %s5, 64
  %v2974 = vld [vmem:[%s2973] sm:$0xff]
  %v2975 = vld [vmem:[%s2973 + $0x8] sm:$0xff]
  %v2976 = vld [vmem:[%s2973 + $0x10] sm:$0xff]
  %v2977 = vld [vmem:[%s2973 + $0x18] sm:$0xff]
  %v2978 = vld [vmem:[%s2973 + $0x20] sm:$0xff]
  %v2979 = vld [vmem:[%s2973 + $0x28] sm:$0xff]
  %v2980 = vld [vmem:[%s2973 + $0x30] sm:$0xff]
  %v2981 = vld [vmem:[%s2973 + $0x38] sm:$0xff]
  %v2990 = vunpack.c.l.b16 %v2974
  %v2991 = vunpack.c.h.b16 %v2974
  %v2992 = vunpack.c.l.b16 %v2975
  %v2993 = vunpack.c.h.b16 %v2975
  %v2994 = vunpack.c.l.b16 %v2976
  %v2995 = vunpack.c.h.b16 %v2976
  %v2996 = vunpack.c.l.b16 %v2977
  %v2997 = vunpack.c.h.b16 %v2977
  %v2998 = vunpack.c.l.b16 %v2978
  %v2999 = vunpack.c.h.b16 %v2978
  %v3000 = vunpack.c.l.b16 %v2979
  %v3001 = vunpack.c.h.b16 %v2979
  %v3002 = vunpack.c.l.b16 %v2980
  %v3003 = vunpack.c.h.b16 %v2980
  %v3004 = vunpack.c.l.b16 %v2981
  %v3005 = vunpack.c.h.b16 %v2981
  %v3006 = vpack.c.b16 %v2992, %v2990
  %v3007 = vpack.c.b16 %v2993, %v2991
  %v3008 = vpack.c.b16 %v2996, %v2994
  %v3009 = vpack.c.b16 %v2997, %v2995
  %v3010 = vpack.c.b16 %v3000, %v2998
  %v3011 = vpack.c.b16 %v3001, %v2999
  %v3012 = vpack.c.b16 %v3004, %v3002
  %v3013 = vpack.c.b16 %v3005, %v3003
  %3022 = vmatprep.subr.bf16.mxu0 0
  %3023 = vmatpush1.bf16.msra.mxu0 %v2842
  %3024 = vmatprep.subr.bf16.mxu0 0
  %3025 = vmatpush1.bf16.msra.mxu0 %v2843
  %3026 = vmatprep.subr.bf16.mxu0 0
  %3027 = vmatpush1.bf16.msra.mxu0 %v2844
  %3028 = vmatprep.subr.bf16.mxu0 0
  %3029 = vmatpush1.bf16.msra.mxu0 %v2845
  %3030 = vmatprep.subr.bf16.mxu0 0
  %3031 = vmatpush1.bf16.msra.mxu0 %v2846
  %3032 = vmatprep.subr.bf16.mxu0 0
  %3033 = vmatpush1.bf16.msra.mxu0 %v2847
  %3034 = vmatprep.subr.bf16.mxu0 0
  %3035 = vmatpush1.bf16.msra.mxu0 %v2848
  %3036 = vmatprep.subr.bf16.mxu0 0
  %3037 = vmatpush1.bf16.msra.mxu0 %v2849
  %3038 = vmatprep.subr.bf16.mxu0 0
  %3039 = vmatpush1.bf16.msra.mxu0 %v2850
  %3040 = vmatprep.subr.bf16.mxu0 0
  %3041 = vmatpush1.bf16.msra.mxu0 %v2851
  %3042 = vmatprep.subr.bf16.mxu0 0
  %3043 = vmatpush1.bf16.msra.mxu0 %v2852
  %3044 = vmatprep.subr.bf16.mxu0 0
  %3045 = vmatpush1.bf16.msra.mxu0 %v2853
  %3046 = vmatprep.subr.bf16.mxu0 0
  %3047 = vmatpush1.bf16.msra.mxu0 %v2854
  %3048 = vmatprep.subr.bf16.mxu0 0
  %3049 = vmatpush1.bf16.msra.mxu0 %v2855
  %3050 = vmatprep.subr.bf16.mxu0 0
  %3051 = vmatpush1.bf16.msra.mxu0 %v2856
  %3052 = vmatprep.subr.bf16.mxu0 0
  %3053 = vmatpush1.bf16.msra.mxu0 %v2857
  %3054 = vmatprep.mubr.bf16.mxu0 %v3007
  %3055 = vmatmul.mubr.bf16.gmra.mrb[0].mxu0 %v3006
  %v3056 = vpop.f32.mrb[0].mxu0
  %v3057 = vadd.f32 0.0, %v3056
  %v3058 = vpop.f32.mrb[0].mxu0
  %v3059 = vpop.f32.mrb[0].mxu0
  %v3060 = vadd.f32 0.0, %v3059
  %v3061 = vpop.f32.mrb[0].mxu0
  %3062 = vmatprep.mubr.bf16.mxu0 %v3009
  %3063 = vmatmul.mubr.bf16.gmra.mrb[0].mxu0 %v3008
  %v3064 = vpop.f32.mrb[0].mxu0
  %v3065 = vadd.f32 0.0, %v3064
  %v3066 = vpop.f32.mrb[0].mxu0
  %v3067 = vpop.f32.mrb[0].mxu0
  %v3068 = vadd.f32 0.0, %v3067
  %v3069 = vpop.f32.mrb[0].mxu0
  %3070 = vmatprep.mubr.bf16.mxu0 %v3011
  %3071 = vmatmul.mubr.bf16.gmra.mrb[0].mxu0 %v3010
  %v3072 = vpop.f32.mrb[0].mxu0
  %v3073 = vadd.f32 0.0, %v3072
  %v3074 = vpop.f32.mrb[0].mxu0
  %v3075 = vpop.f32.mrb[0].mxu0
  %v3076 = vadd.f32 0.0, %v3075
  %v3077 = vpop.f32.mrb[0].mxu0
  %3078 = vmatprep.mubr.bf16.mxu0 %v3013
  %3079 = vmatmul.mubr.bf16.gmra.mrb[0].mxu0 %v3012
  %v3080 = vpop.f32.mrb[0].mxu0
  %v3081 = vadd.f32 0.0, %v3080
  %v3082 = vpop.f32.mrb[0].mxu0
  %v3083 = vpop.f32.mrb[0].mxu0
  %v3084 = vadd.f32 0.0, %v3083
  %v3085 = vpop.f32.mrb[0].mxu0
  %3086 = vdwg.mxu0
  %s3087 = scalar_lea.vmem %s3, 16
  %v3088 = vld [vmem:[%s3087] sm:$0xff]
  %v3089 = vld [vmem:[%s3087 + $0x8] sm:$0xff]
  %vm3090 = vcmask 130048
  %v3092 = vsel %vm3090, %v3057, 0
  %v3095 = vsel %vm3090, %v3060, 0
  %v3098 = vsel %vm3090, %v3065, 0
  %v3101 = vsel %vm3090, %v3068, 0
  %v3104 = vsel %vm3090, %v3073, 0
  %v3107 = vsel %vm3090, %v3076, 0
  %v3110 = vsel %vm3090, %v3081, 0
  %v3113 = vsel %vm3090, %v3084, 0
  %3115 = vmatprep.subr.mxu0 0.0
  %3116 = vmatpush1.msra.mxu0 %v3088
  %3117 = vmatprep.subr.mxu0 0.0
  %3118 = vmatpush1.msra.mxu0 %v3089
  %3119 = vmatprep.subr.mxu0 0.0
  %3120 = vmatpush1.msra.mxu0 0.0
  %3121 = vmatprep.subr.mxu0 0.0
  %3122 = vmatpush1.msra.mxu0 0.0
  %3123 = vmatprep.subr.mxu0 0.0
  %3124 = vmatpush1.msra.mxu0 0.0
  %3125 = vmatprep.subr.mxu0 0.0
  %3126 = vmatpush1.msra.mxu0 0.0
  %3127 = vmatprep.subr.mxu0 0.0
  %3128 = vmatpush1.msra.mxu0 0.0
  %3129 = vmatprep.subr.mxu0 0.0
  %3130 = vmatpush1.msra.mxu0 0.0
  %3131 = vmatprep.subr.mxu0 0.0
  %3132 = vmatpush1.msra.mxu0 0.0
  %3133 = vmatprep.subr.mxu0 0.0
  %3134 = vmatpush1.msra.mxu0 0.0
  %3135 = vmatprep.subr.mxu0 0.0
  %3136 = vmatpush1.msra.mxu0 0.0
  %3137 = vmatprep.subr.mxu0 0.0
  %3138 = vmatpush1.msra.mxu0 0.0
  %3139 = vmatprep.subr.mxu0 0.0
  %3140 = vmatpush1.msra.mxu0 0.0
  %3141 = vmatprep.subr.mxu0 0.0
  %3142 = vmatpush1.msra.mxu0 0.0
  %3143 = vmatprep.subr.mxu0 0.0
  %3144 = vmatpush1.msra.mxu0 0.0
  %3145 = vmatprep.subr.mxu0 0.0
  %3146 = vmatpush1.msra.mxu0 0.0
  %3147 = vmatprep.subr.mxu0 0.0
  %3148 = vmatpush1.msra.mxu0 0.0
  %3149 = vmatprep.subr.mxu0 0.0
  %3150 = vmatpush1.msra.mxu0 0.0
  %3151 = vmatprep.subr.mxu0 0.0
  %3152 = vmatpush1.msra.mxu0 0.0
  %3153 = vmatprep.subr.mxu0 0.0
  %3154 = vmatpush1.msra.mxu0 0.0
  %3155 = vmatprep.subr.mxu0 0.0
  %3156 = vmatpush1.msra.mxu0 0.0
  %3157 = vmatprep.subr.mxu0 0.0
  %3158 = vmatpush1.msra.mxu0 0.0
  %3159 = vmatprep.subr.mxu0 0.0
  %3160 = vmatpush1.msra.mxu0 0.0
  %3161 = vmatprep.subr.mxu0 0.0
  %3162 = vmatpush1.msra.mxu0 0.0
  %3163 = vmatprep.subr.mxu0 0.0
  %3164 = vmatpush1.msra.mxu0 0.0
  %3165 = vmatprep.subr.mxu0 0.0
  %3166 = vmatpush1.msra.mxu0 0.0
  %3167 = vmatprep.subr.mxu0 0.0
  %3168 = vmatpush1.msra.mxu0 0.0
  %3169 = vmatprep.subr.mxu0 0.0
  %3170 = vmatpush1.msra.mxu0 0.0
  %3171 = vmatprep.subr.mxu0 0.0
  %3172 = vmatpush1.msra.mxu0 0.0
  %3173 = vmatprep.subr.mxu0 0.0
  %3174 = vmatpush1.msra.mxu0 0.0
  %3175 = vmatprep.subr.mxu0 0.0
  %3176 = vmatpush1.msra.mxu0 0.0
  %3177 = vmatprep.subr.mxu0 0.0
  %3178 = vmatpush1.msra.mxu0 0.0
  %3179 = vmatprep.mubr.f32.mxu0 0.0
  %3180 = vmatmul.mubr.f32.gmra.mrb[0].mxu0 %v3092
  %v3181 = vpop.f32.mrb[0].mxu0
  %v3182 = vadd.f32 0.0, %v3181
  %v3183 = vpop.f32.mrb[0].mxu0
  %3184 = vmatprep.mubr.f32.mxu0 0.0
  %3185 = vmatmul.mubr.f32.gmra.mrb[0].mxu0 %v3095
  %v3186 = vpop.f32.mrb[0].mxu0
  %v3187 = vadd.f32 0.0, %v3186
  %v3188 = vpop.f32.mrb[0].mxu0
  %3189 = vmatprep.mubr.f32.mxu0 0.0
  %3190 = vmatmul.mubr.f32.gmra.mrb[0].mxu0 %v3098
  %v3191 = vpop.f32.mrb[0].mxu0
  %v3192 = vadd.f32 0.0, %v3191
  %v3193 = vpop.f32.mrb[0].mxu0
  %3194 = vmatprep.mubr.f32.mxu0 0.0
  %3195 = vmatmul.mubr.f32.gmra.mrb[0].mxu0 %v3101
  %v3196 = vpop.f32.mrb[0].mxu0
  %v3197 = vadd.f32 0.0, %v3196
  %v3198 = vpop.f32.mrb[0].mxu0
  %3199 = vmatprep.mubr.f32.mxu0 0.0
  %3200 = vmatmul.mubr.f32.gmra.mrb[0].mxu0 %v3104
  %v3201 = vpop.f32.mrb[0].mxu0
  %v3202 = vadd.f32 0.0, %v3201
  %v3203 = vpop.f32.mrb[0].mxu0
  %3204 = vmatprep.mubr.f32.mxu0 0.0
  %3205 = vmatmul.mubr.f32.gmra.mrb[0].mxu0 %v3107
  %v3206 = vpop.f32.mrb[0].mxu0
  %v3207 = vadd.f32 0.0, %v3206
  %v3208 = vpop.f32.mrb[0].mxu0
  %3209 = vmatprep.mubr.f32.mxu0 0.0
  %3210 = vmatmul.mubr.f32.gmra.mrb[0].mxu0 %v3110
  %v3211 = vpop.f32.mrb[0].mxu0
  %v3212 = vadd.f32 0.0, %v3211
  %v3213 = vpop.f32.mrb[0].mxu0
  %3214 = vmatprep.mubr.f32.mxu0 0.0
  %3215 = vmatmul.mubr.f32.gmra.mrb[0].mxu0 %v3113
  %v3216 = vpop.f32.mrb[0].mxu0
  %v3217 = vadd.f32 0.0, %v3216
  %v3218 = vpop.f32.mrb[0].mxu0
  %3219 = vdwg.mxu0
  %v3221 = vsel %vm3090, %v2941, 0
  %v3224 = vsel %vm3090, %v2944, 0
  %v3227 = vsel %vm3090, %v2949, 0
  %v3230 = vsel %vm3090, %v2952, 0
  %v3233 = vsel %vm3090, %v2957, 0
  %v3236 = vsel %vm3090, %v2960, 0
  %v3239 = vsel %vm3090, %v2965, 0
  %v3242 = vsel %vm3090, %v2968, 0
  %3244 = vmatprep.subr.mxu0 0.0
  %3245 = vmatpush1.msra.mxu0 %v2971
  %3246 = vmatprep.subr.mxu0 0.0
  %3247 = vmatpush1.msra.mxu0 %v2972
  %3248 = vmatprep.subr.mxu0 0.0
  %3249 = vmatpush1.msra.mxu0 0.0
  %3250 = vmatprep.subr.mxu0 0.0
  %3251 = vmatpush1.msra.mxu0 0.0
  %3252 = vmatprep.subr.mxu0 0.0
  %3253 = vmatpush1.msra.mxu0 0.0
  %3254 = vmatprep.subr.mxu0 0.0
  %3255 = vmatpush1.msra.mxu0 0.0
  %3256 = vmatprep.subr.mxu0 0.0
  %3257 = vmatpush1.msra.mxu0 0.0
  %3258 = vmatprep.subr.mxu0 0.0
  %3259 = vmatpush1.msra.mxu0 0.0
  %3260 = vmatprep.subr.mxu0 0.0
  %3261 = vmatpush1.msra.mxu0 0.0
  %3262 = vmatprep.subr.mxu0 0.0
  %3263 = vmatpush1.msra.mxu0 0.0
  %3264 = vmatprep.subr.mxu0 0.0
  %3265 = vmatpush1.msra.mxu0 0.0
  %3266 = vmatprep.subr.mxu0 0.0
  %3267 = vmatpush1.msra.mxu0 0.0
  %3268 = vmatprep.subr.mxu0 0.0
  %3269 = vmatpush1.msra.mxu0 0.0
  %3270 = vmatprep.subr.mxu0 0.0
  %3271 = vmatpush1.msra.mxu0 0.0
  %3272 = vmatprep.subr.mxu0 0.0
  %3273 = vmatpush1.msra.mxu0 0.0
  %3274 = vmatprep.subr.mxu0 0.0
  %3275 = vmatpush1.msra.mxu0 0.0
  %3276 = vmatprep.subr.mxu0 0.0
  %3277 = vmatpush1.msra.mxu0 0.0
  %3278 = vmatprep.subr.mxu0 0.0
  %3279 = vmatpush1.msra.mxu0 0.0
  %3280 = vmatprep.subr.mxu0 0.0
  %3281 = vmatpush1.msra.mxu0 0.0
  %3282 = vmatprep.subr.mxu0 0.0
  %3283 = vmatpush1.msra.mxu0 0.0
  %3284 = vmatprep.subr.mxu0 0.0
  %3285 = vmatpush1.msra.mxu0 0.0
  %3286 = vmatprep.subr.mxu0 0.0
  %3287 = vmatpush1.msra.mxu0 0.0
  %3288 = vmatprep.subr.mxu0 0.0
  %3289 = vmatpush1.msra.mxu0 0.0
  %3290 = vmatprep.subr.mxu0 0.0
  %3291 = vmatpush1.msra.mxu0 0.0
  %3292 = vmatprep.subr.mxu0 0.0
  %3293 = vmatpush1.msra.mxu0 0.0
  %3294 = vmatprep.subr.mxu0 0.0
  %3295 = vmatpush1.msra.mxu0 0.0
  %3296 = vmatprep.subr.mxu0 0.0
  %3297 = vmatpush1.msra.mxu0 0.0
  %3298 = vmatprep.subr.mxu0 0.0
  %3299 = vmatpush1.msra.mxu0 0.0
  %3300 = vmatprep.subr.mxu0 0.0
  %3301 = vmatpush1.msra.mxu0 0.0
  %3302 = vmatprep.subr.mxu0 0.0
  %3303 = vmatpush1.msra.mxu0 0.0
  %3304 = vmatprep.subr.mxu0 0.0
  %3305 = vmatpush1.msra.mxu0 0.0
  %3306 = vmatprep.subr.mxu0 0.0
  %3307 = vmatpush1.msra.mxu0 0.0
  %3308 = vmatprep.mubr.f32.mxu0 0.0
  %3309 = vmatmul.mubr.f32.gmra.mrb[0].mxu0 %v3221
  %v3310 = vpop.f32.mrb[0].mxu0
  %v3311 = vadd.f32 %v3182, %v3310
  %v3312 = vpop.f32.mrb[0].mxu0
  %3313 = vmatprep.mubr.f32.mxu0 0.0
  %3314 = vmatmul.mubr.f32.gmra.mrb[0].mxu0 %v3224
  %v3315 = vpop.f32.mrb[0].mxu0
  %v3316 = vadd.f32 %v3187, %v3315
  %v3317 = vpop.f32.mrb[0].mxu0
  %3318 = vmatprep.mubr.f32.mxu0 0.0
  %3319 = vmatmul.mubr.f32.gmra.mrb[0].mxu0 %v3227
  %v3320 = vpop.f32.mrb[0].mxu0
  %v3321 = vadd.f32 %v3192, %v3320
  %v3322 = vpop.f32.mrb[0].mxu0
  %3323 = vmatprep.mubr.f32.mxu0 0.0
  %3324 = vmatmul.mubr.f32.gmra.mrb[0].mxu0 %v3230
  %v3325 = vpop.f32.mrb[0].mxu0
  %v3326 = vadd.f32 %v3197, %v3325
  %v3327 = vpop.f32.mrb[0].mxu0
  %3328 = vmatprep.mubr.f32.mxu0 0.0
  %3329 = vmatmul.mubr.f32.gmra.mrb[0].mxu0 %v3233
  %v3330 = vpop.f32.mrb[0].mxu0
  %v3331 = vadd.f32 %v3202, %v3330
  %v3332 = vpop.f32.mrb[0].mxu0
  %3333 = vmatprep.mubr.f32.mxu0 0.0
  %3334 = vmatmul.mubr.f32.gmra.mrb[0].mxu0 %v3236
  %v3335 = vpop.f32.mrb[0].mxu0
  %v3336 = vadd.f32 %v3207, %v3335
  %v3337 = vpop.f32.mrb[0].mxu0
  %3338 = vmatprep.mubr.f32.mxu0 0.0
  %3339 = vmatmul.mubr.f32.gmra.mrb[0].mxu0 %v3239
  %v3340 = vpop.f32.mrb[0].mxu0
  %v3341 = vadd.f32 %v3212, %v3340
  %v3342 = vpop.f32.mrb[0].mxu0
  %3343 = vmatprep.mubr.f32.mxu0 0.0
  %3344 = vmatmul.mubr.f32.gmra.mrb[0].mxu0 %v3242
  %v3345 = vpop.f32.mrb[0].mxu0
  %v3346 = vadd.f32 %v3217, %v3345
  %v3347 = vpop.f32.mrb[0].mxu0
  %3348 = vdwg.mxu0
  %s3349 = scalar_lea.vmem %s5, 128
  %v3350 = vld [vmem:[%s3349] sm:$0xff]
  %v3351 = vld [vmem:[%s3349 + $0x8] sm:$0xff]
  %v3352 = vld [vmem:[%s3349 + $0x10] sm:$0xff]
  %v3353 = vld [vmem:[%s3349 + $0x18] sm:$0xff]
  %v3354 = vld [vmem:[%s3349 + $0x20] sm:$0xff]
  %v3355 = vld [vmem:[%s3349 + $0x28] sm:$0xff]
  %v3356 = vld [vmem:[%s3349 + $0x30] sm:$0xff]
  %v3357 = vld [vmem:[%s3349 + $0x38] sm:$0xff]
  %v3366 = vunpack.c.l.b16 %v3350
  %v3367 = vunpack.c.h.b16 %v3350
  %v3368 = vunpack.c.l.b16 %v3351
  %v3369 = vunpack.c.h.b16 %v3351
  %v3370 = vunpack.c.l.b16 %v3352
  %v3371 = vunpack.c.h.b16 %v3352
  %v3372 = vunpack.c.l.b16 %v3353
  %v3373 = vunpack.c.h.b16 %v3353
  %v3374 = vunpack.c.l.b16 %v3354
  %v3375 = vunpack.c.h.b16 %v3354
  %v3376 = vunpack.c.l.b16 %v3355
  %v3377 = vunpack.c.h.b16 %v3355
  %v3378 = vunpack.c.l.b16 %v3356
  %v3379 = vunpack.c.h.b16 %v3356
  %v3380 = vunpack.c.l.b16 %v3357
  %v3381 = vunpack.c.h.b16 %v3357
  %v3382 = vpack.c.b16 %v3368, %v3366
  %v3383 = vpack.c.b16 %v3369, %v3367
  %v3384 = vpack.c.b16 %v3372, %v3370
  %v3385 = vpack.c.b16 %v3373, %v3371
  %v3386 = vpack.c.b16 %v3376, %v3374
  %v3387 = vpack.c.b16 %v3377, %v3375
  %v3388 = vpack.c.b16 %v3380, %v3378
  %v3389 = vpack.c.b16 %v3381, %v3379
  %3398 = vmatprep.subr.bf16.mxu0 0
  %3399 = vmatpush1.bf16.msra.mxu0 %v2842
  %3400 = vmatprep.subr.bf16.mxu0 0
  %3401 = vmatpush1.bf16.msra.mxu0 %v2843
  %3402 = vmatprep.subr.bf16.mxu0 0
  %3403 = vmatpush1.bf16.msra.mxu0 %v2844
  %3404 = vmatprep.subr.bf16.mxu0 0
  %3405 = vmatpush1.bf16.msra.mxu0 %v2845
  %3406 = vmatprep.subr.bf16.mxu0 0
  %3407 = vmatpush1.bf16.msra.mxu0 %v2846
  %3408 = vmatprep.subr.bf16.mxu0 0
  %3409 = vmatpush1.bf16.msra.mxu0 %v2847
  %3410 = vmatprep.subr.bf16.mxu0 0
  %3411 = vmatpush1.bf16.msra.mxu0 %v2848
  %3412 = vmatprep.subr.bf16.mxu0 0
  %3413 = vmatpush1.bf16.msra.mxu0 %v2849
  %3414 = vmatprep.subr.bf16.mxu0 0
  %3415 = vmatpush1.bf16.msra.mxu0 %v2850
  %3416 = vmatprep.subr.bf16.mxu0 0
  %3417 = vmatpush1.bf16.msra.mxu0 %v2851
  %3418 = vmatprep.subr.bf16.mxu0 0
  %3419 = vmatpush1.bf16.msra.mxu0 %v2852
  %3420 = vmatprep.subr.bf16.mxu0 0
  %3421 = vmatpush1.bf16.msra.mxu0 %v2853
  %3422 = vmatprep.subr.bf16.mxu0 0
  %3423 = vmatpush1.bf16.msra.mxu0 %v2854
  %3424 = vmatprep.subr.bf16.mxu0 0
  %3425 = vmatpush1.bf16.msra.mxu0 %v2855
  %3426 = vmatprep.subr.bf16.mxu0 0
  %3427 = vmatpush1.bf16.msra.mxu0 %v2856
  %3428 = vmatprep.subr.bf16.mxu0 0
  %3429 = vmatpush1.bf16.msra.mxu0 %v2857
  %3430 = vmatprep.mubr.bf16.mxu0 %v3383
  %3431 = vmatmul.mubr.bf16.gmra.mrb[0].mxu0 %v3382
  %v3432 = vpop.f32.mrb[0].mxu0
  %v3433 = vadd.f32 0.0, %v3432
  %v3434 = vpop.f32.mrb[0].mxu0
  %v3435 = vpop.f32.mrb[0].mxu0
  %v3436 = vadd.f32 0.0, %v3435
  %v3437 = vpop.f32.mrb[0].mxu0
  %3438 = vmatprep.mubr.bf16.mxu0 %v3385
  %3439 = vmatmul.mubr.bf16.gmra.mrb[0].mxu0 %v3384
  %v3440 = vpop.f32.mrb[0].mxu0
  %v3441 = vadd.f32 0.0, %v3440
  %v3442 = vpop.f32.mrb[0].mxu0
  %v3443 = vpop.f32.mrb[0].mxu0
  %v3444 = vadd.f32 0.0, %v3443
  %v3445 = vpop.f32.mrb[0].mxu0
  %3446 = vmatprep.mubr.bf16.mxu0 %v3387
  %3447 = vmatmul.mubr.bf16.gmra.mrb[0].mxu0 %v3386
  %v3448 = vpop.f32.mrb[0].mxu0
  %v3449 = vadd.f32 0.0, %v3448
  %v3450 = vpop.f32.mrb[0].mxu0
  %v3451 = vpop.f32.mrb[0].mxu0
  %v3452 = vadd.f32 0.0, %v3451
  %v3453 = vpop.f32.mrb[0].mxu0
  %3454 = vmatprep.mubr.bf16.mxu0 %v3389
  %3455 = vmatmul.mubr.bf16.gmra.mrb[0].mxu0 %v3388
  %v3456 = vpop.f32.mrb[0].mxu0
  %v3457 = vadd.f32 0.0, %v3456
  %v3458 = vpop.f32.mrb[0].mxu0
  %v3459 = vpop.f32.mrb[0].mxu0
  %v3460 = vadd.f32 0.0, %v3459
  %v3461 = vpop.f32.mrb[0].mxu0
  %3462 = vdwg.mxu0
  %s3463 = scalar_lea.vmem %s3, 32
  %v3464 = vld [vmem:[%s3463] sm:$0xff]
  %v3465 = vld [vmem:[%s3463 + $0x8] sm:$0xff]
  %v3467 = vsel %vm3090, %v3433, 0
  %v3470 = vsel %vm3090, %v3436, 0
  %v3473 = vsel %vm3090, %v3441, 0
  %v3476 = vsel %vm3090, %v3444, 0
  %v3479 = vsel %vm3090, %v3449, 0
  %v3482 = vsel %vm3090, %v3452, 0
  %v3485 = vsel %vm3090, %v3457, 0
  %v3488 = vsel %vm3090, %v3460, 0
  %3490 = vmatprep.subr.mxu0 0.0
  %3491 = vmatpush1.msra.mxu0 %v3464
  %3492 = vmatprep.subr.mxu0 0.0
  %3493 = vmatpush1.msra.mxu0 %v3465
  %3494 = vmatprep.subr.mxu0 0.0
  %3495 = vmatpush1.msra.mxu0 0.0
  %3496 = vmatprep.subr.mxu0 0.0
  %3497 = vmatpush1.msra.mxu0 0.0
  %3498 = vmatprep.subr.mxu0 0.0
  %3499 = vmatpush1.msra.mxu0 0.0
  %3500 = vmatprep.subr.mxu0 0.0
  %3501 = vmatpush1.msra.mxu0 0.0
  %3502 = vmatprep.subr.mxu0 0.0
  %3503 = vmatpush1.msra.mxu0 0.0
  %3504 = vmatprep.subr.mxu0 0.0
  %3505 = vmatpush1.msra.mxu0 0.0
  %3506 = vmatprep.subr.mxu0 0.0
  %3507 = vmatpush1.msra.mxu0 0.0
  %3508 = vmatprep.subr.mxu0 0.0
  %3509 = vmatpush1.msra.mxu0 0.0
  %3510 = vmatprep.subr.mxu0 0.0
  %3511 = vmatpush1.msra.mxu0 0.0
  %3512 = vmatprep.subr.mxu0 0.0
  %3513 = vmatpush1.msra.mxu0 0.0
  %3514 = vmatprep.subr.mxu0 0.0
  %3515 = vmatpush1.msra.mxu0 0.0
  %3516 = vmatprep.subr.mxu0 0.0
  %3517 = vmatpush1.msra.mxu0 0.0
  %3518 = vmatprep.subr.mxu0 0.0
  %3519 = vmatpush1.msra.mxu0 0.0
  %3520 = vmatprep.subr.mxu0 0.0
  %3521 = vmatpush1.msra.mxu0 0.0
  %3522 = vmatprep.subr.mxu0 0.0
  %3523 = vmatpush1.msra.mxu0 0.0
  %3524 = vmatprep.subr.mxu0 0.0
  %3525 = vmatpush1.msra.mxu0 0.0
  %3526 = vmatprep.subr.mxu0 0.0
  %3527 = vmatpush1.msra.mxu0 0.0
  %3528 = vmatprep.subr.mxu0 0.0
  %3529 = vmatpush1.msra.mxu0 0.0
  %3530 = vmatprep.subr.mxu0 0.0
  %3531 = vmatpush1.msra.mxu0 0.0
  %3532 = vmatprep.subr.mxu0 0.0
  %3533 = vmatpush1.msra.mxu0 0.0
  %3534 = vmatprep.subr.mxu0 0.0
  %3535 = vmatpush1.msra.mxu0 0.0
  %3536 = vmatprep.subr.mxu0 0.0
  %3537 = vmatpush1.msra.mxu0 0.0
  %3538 = vmatprep.subr.mxu0 0.0
  %3539 = vmatpush1.msra.mxu0 0.0
  %3540 = vmatprep.subr.mxu0 0.0
  %3541 = vmatpush1.msra.mxu0 0.0
  %3542 = vmatprep.subr.mxu0 0.0
  %3543 = vmatpush1.msra.mxu0 0.0
  %3544 = vmatprep.subr.mxu0 0.0
  %3545 = vmatpush1.msra.mxu0 0.0
  %3546 = vmatprep.subr.mxu0 0.0
  %3547 = vmatpush1.msra.mxu0 0.0
  %3548 = vmatprep.subr.mxu0 0.0
  %3549 = vmatpush1.msra.mxu0 0.0
  %3550 = vmatprep.subr.mxu0 0.0
  %3551 = vmatpush1.msra.mxu0 0.0
  %3552 = vmatprep.subr.mxu0 0.0
  %3553 = vmatpush1.msra.mxu0 0.0
  %3554 = vmatprep.mubr.f32.mxu0 0.0
  %3555 = vmatmul.mubr.f32.gmra.mrb[0].mxu0 %v3467
  %v3556 = vpop.f32.mrb[0].mxu0
  %v3557 = vadd.f32 0.0, %v3556
  %v3558 = vpop.f32.mrb[0].mxu0
  %3559 = vmatprep.mubr.f32.mxu0 0.0
  %3560 = vmatmul.mubr.f32.gmra.mrb[0].mxu0 %v3470
  %v3561 = vpop.f32.mrb[0].mxu0
  %v3562 = vadd.f32 0.0, %v3561
  %v3563 = vpop.f32.mrb[0].mxu0
  %3564 = vmatprep.mubr.f32.mxu0 0.0
  %3565 = vmatmul.mubr.f32.gmra.mrb[0].mxu0 %v3473
  %v3566 = vpop.f32.mrb[0].mxu0
  %v3567 = vadd.f32 0.0, %v3566
  %v3568 = vpop.f32.mrb[0].mxu0
  %3569 = vmatprep.mubr.f32.mxu0 0.0
  %3570 = vmatmul.mubr.f32.gmra.mrb[0].mxu0 %v3476
  %v3571 = vpop.f32.mrb[0].mxu0
  %v3572 = vadd.f32 0.0, %v3571
  %v3573 = vpop.f32.mrb[0].mxu0
  %3574 = vmatprep.mubr.f32.mxu0 0.0
  %3575 = vmatmul.mubr.f32.gmra.mrb[0].mxu0 %v3479
  %v3576 = vpop.f32.mrb[0].mxu0
  %v3577 = vadd.f32 0.0, %v3576
  %v3578 = vpop.f32.mrb[0].mxu0
  %3579 = vmatprep.mubr.f32.mxu0 0.0
  %3580 = vmatmul.mubr.f32.gmra.mrb[0].mxu0 %v3482
  %v3581 = vpop.f32.mrb[0].mxu0
  %v3582 = vadd.f32 0.0, %v3581
  %v3583 = vpop.f32.mrb[0].mxu0
  %3584 = vmatprep.mubr.f32.mxu0 0.0
  %3585 = vmatmul.mubr.f32.gmra.mrb[0].mxu0 %v3485
  %v3586 = vpop.f32.mrb[0].mxu0
  %v3587 = vadd.f32 0.0, %v3586
  %v3588 = vpop.f32.mrb[0].mxu0
  %3589 = vmatprep.mubr.f32.mxu0 0.0
  %3590 = vmatmul.mubr.f32.gmra.mrb[0].mxu0 %v3488
  %v3591 = vpop.f32.mrb[0].mxu0
  %v3592 = vadd.f32 0.0, %v3591
  %v3593 = vpop.f32.mrb[0].mxu0
  %3594 = vdwg.mxu0
  %v3595 = vadd.f32 %v3311, %v3557
  %v3596 = vadd.f32 %v3316, %v3562
  %v3597 = vadd.f32 %v3321, %v3567
  %v3598 = vadd.f32 %v3326, %v3572
  %v3599 = vadd.f32 %v3331, %v3577
  %v3600 = vadd.f32 %v3336, %v3582
  %v3601 = vadd.f32 %v3341, %v3587
  %v3602 = vadd.f32 %v3346, %v3592
  %s3603 = scalar_lea.vmem %s5, 192
  %v3604 = vld [vmem:[%s3603] sm:$0xff]
  %v3605 = vld [vmem:[%s3603 + $0x8] sm:$0xff]
  %v3606 = vld [vmem:[%s3603 + $0x10] sm:$0xff]
  %v3607 = vld [vmem:[%s3603 + $0x18] sm:$0xff]
  %v3608 = vld [vmem:[%s3603 + $0x20] sm:$0xff]
  %v3609 = vld [vmem:[%s3603 + $0x28] sm:$0xff]
  %v3610 = vld [vmem:[%s3603 + $0x30] sm:$0xff]
  %v3611 = vld [vmem:[%s3603 + $0x38] sm:$0xff]
  %v3620 = vunpack.c.l.b16 %v3604
  %v3621 = vunpack.c.h.b16 %v3604
  %v3622 = vunpack.c.l.b16 %v3605
  %v3623 = vunpack.c.h.b16 %v3605
  %v3624 = vunpack.c.l.b16 %v3606
  %v3625 = vunpack.c.h.b16 %v3606
  %v3626 = vunpack.c.l.b16 %v3607
  %v3627 = vunpack.c.h.b16 %v3607
  %v3628 = vunpack.c.l.b16 %v3608
  %v3629 = vunpack.c.h.b16 %v3608
  %v3630 = vunpack.c.l.b16 %v3609
  %v3631 = vunpack.c.h.b16 %v3609
  %v3632 = vunpack.c.l.b16 %v3610
  %v3633 = vunpack.c.h.b16 %v3610
  %v3634 = vunpack.c.l.b16 %v3611
  %v3635 = vunpack.c.h.b16 %v3611
  %v3636 = vpack.c.b16 %v3622, %v3620
  %v3637 = vpack.c.b16 %v3623, %v3621
  %v3638 = vpack.c.b16 %v3626, %v3624
  %v3639 = vpack.c.b16 %v3627, %v3625
  %v3640 = vpack.c.b16 %v3630, %v3628
  %v3641 = vpack.c.b16 %v3631, %v3629
  %v3642 = vpack.c.b16 %v3634, %v3632
  %v3643 = vpack.c.b16 %v3635, %v3633
  %3652 = vmatprep.subr.bf16.mxu0 0
  %3653 = vmatpush1.bf16.msra.mxu0 %v2842
  %3654 = vmatprep.subr.bf16.mxu0 0
  %3655 = vmatpush1.bf16.msra.mxu0 %v2843
  %3656 = vmatprep.subr.bf16.mxu0 0
  %3657 = vmatpush1.bf16.msra.mxu0 %v2844
  %3658 = vmatprep.subr.bf16.mxu0 0
  %3659 = vmatpush1.bf16.msra.mxu0 %v2845
  %3660 = vmatprep.subr.bf16.mxu0 0
  %3661 = vmatpush1.bf16.msra.mxu0 %v2846
  %3662 = vmatprep.subr.bf16.mxu0 0
  %3663 = vmatpush1.bf16.msra.mxu0 %v2847
  %3664 = vmatprep.subr.bf16.mxu0 0
  %3665 = vmatpush1.bf16.msra.mxu0 %v2848
  %3666 = vmatprep.subr.bf16.mxu0 0
  %3667 = vmatpush1.bf16.msra.mxu0 %v2849
  %3668 = vmatprep.subr.bf16.mxu0 0
  %3669 = vmatpush1.bf16.msra.mxu0 %v2850
  %3670 = vmatprep.subr.bf16.mxu0 0
  %3671 = vmatpush1.bf16.msra.mxu0 %v2851
  %3672 = vmatprep.subr.bf16.mxu0 0
  %3673 = vmatpush1.bf16.msra.mxu0 %v2852
  %3674 = vmatprep.subr.bf16.mxu0 0
  %3675 = vmatpush1.bf16.msra.mxu0 %v2853
  %3676 = vmatprep.subr.bf16.mxu0 0
  %3677 = vmatpush1.bf16.msra.mxu0 %v2854
  %3678 = vmatprep.subr.bf16.mxu0 0
  %3679 = vmatpush1.bf16.msra.mxu0 %v2855
  %3680 = vmatprep.subr.bf16.mxu0 0
  %3681 = vmatpush1.bf16.msra.mxu0 %v2856
  %3682 = vmatprep.subr.bf16.mxu0 0
  %3683 = vmatpush1.bf16.msra.mxu0 %v2857
  %3684 = vmatprep.mubr.bf16.mxu0 %v3637
  %3685 = vmatmul.mubr.bf16.gmra.mrb[0].mxu0 %v3636
  %v3686 = vpop.f32.mrb[0].mxu0
  %v3687 = vadd.f32 0.0, %v3686
  %v3688 = vpop.f32.mrb[0].mxu0
  %v3689 = vpop.f32.mrb[0].mxu0
  %v3690 = vadd.f32 0.0, %v3689
  %v3691 = vpop.f32.mrb[0].mxu0
  %3692 = vmatprep.mubr.bf16.mxu0 %v3639
  %3693 = vmatmul.mubr.bf16.gmra.mrb[0].mxu0 %v3638
  %v3694 = vpop.f32.mrb[0].mxu0
  %v3695 = vadd.f32 0.0, %v3694
  %v3696 = vpop.f32.mrb[0].mxu0
  %v3697 = vpop.f32.mrb[0].mxu0
  %v3698 = vadd.f32 0.0, %v3697
  %v3699 = vpop.f32.mrb[0].mxu0
  %3700 = vmatprep.mubr.bf16.mxu0 %v3641
  %3701 = vmatmul.mubr.bf16.gmra.mrb[0].mxu0 %v3640
  %v3702 = vpop.f32.mrb[0].mxu0
  %v3703 = vadd.f32 0.0, %v3702
  %v3704 = vpop.f32.mrb[0].mxu0
  %v3705 = vpop.f32.mrb[0].mxu0
  %v3706 = vadd.f32 0.0, %v3705
  %v3707 = vpop.f32.mrb[0].mxu0
  %3708 = vmatprep.mubr.bf16.mxu0 %v3643
  %3709 = vmatmul.mubr.bf16.gmra.mrb[0].mxu0 %v3642
  %v3710 = vpop.f32.mrb[0].mxu0
  %v3711 = vadd.f32 0.0, %v3710
  %v3712 = vpop.f32.mrb[0].mxu0
  %v3713 = vpop.f32.mrb[0].mxu0
  %v3714 = vadd.f32 0.0, %v3713
  %v3715 = vpop.f32.mrb[0].mxu0
  %3716 = vdwg.mxu0
  %s3717 = scalar_lea.vmem %s3, 48
  %v3718 = vld [vmem:[%s3717] sm:$0xff]
  %v3719 = vld [vmem:[%s3717 + $0x8] sm:$0xff]
  %v3721 = vsel %vm3090, %v3687, 0
  %v3724 = vsel %vm3090, %v3690, 0
  %v3727 = vsel %vm3090, %v3695, 0
  %v3730 = vsel %vm3090, %v3698, 0
  %v3733 = vsel %vm3090, %v3703, 0
  %v3736 = vsel %vm3090, %v3706, 0
  %v3739 = vsel %vm3090, %v3711, 0
  %v3742 = vsel %vm3090, %v3714, 0
  %3744 = vmatprep.subr.mxu0 0.0
  %3745 = vmatpush1.msra.mxu0 %v3718
  %3746 = vmatprep.subr.mxu0 0.0
  %3747 = vmatpush1.msra.mxu0 %v3719
  %3748 = vmatprep.subr.mxu0 0.0
  %3749 = vmatpush1.msra.mxu0 0.0
  %3750 = vmatprep.subr.mxu0 0.0
  %3751 = vmatpush1.msra.mxu0 0.0
  %3752 = vmatprep.subr.mxu0 0.0
  %3753 = vmatpush1.msra.mxu0 0.0
  %3754 = vmatprep.subr.mxu0 0.0
  %3755 = vmatpush1.msra.mxu0 0.0
  %3756 = vmatprep.subr.mxu0 0.0
  %3757 = vmatpush1.msra.mxu0 0.0
  %3758 = vmatprep.subr.mxu0 0.0
  %3759 = vmatpush1.msra.mxu0 0.0
  %3760 = vmatprep.subr.mxu0 0.0
  %3761 = vmatpush1.msra.mxu0 0.0
  %3762 = vmatprep.subr.mxu0 0.0
  %3763 = vmatpush1.msra.mxu0 0.0
  %3764 = vmatprep.subr.mxu0 0.0
  %3765 = vmatpush1.msra.mxu0 0.0
  %3766 = vmatprep.subr.mxu0 0.0
  %3767 = vmatpush1.msra.mxu0 0.0
  %3768 = vmatprep.subr.mxu0 0.0
  %3769 = vmatpush1.msra.mxu0 0.0
  %3770 = vmatprep.subr.mxu0 0.0
  %3771 = vmatpush1.msra.mxu0 0.0
  %3772 = vmatprep.subr.mxu0 0.0
  %3773 = vmatpush1.msra.mxu0 0.0
  %3774 = vmatprep.subr.mxu0 0.0
  %3775 = vmatpush1.msra.mxu0 0.0
  %3776 = vmatprep.subr.mxu0 0.0
  %3777 = vmatpush1.msra.mxu0 0.0
  %3778 = vmatprep.subr.mxu0 0.0
  %3779 = vmatpush1.msra.mxu0 0.0
  %3780 = vmatprep.subr.mxu0 0.0
  %3781 = vmatpush1.msra.mxu0 0.0
  %3782 = vmatprep.subr.mxu0 0.0
  %3783 = vmatpush1.msra.mxu0 0.0
  %3784 = vmatprep.subr.mxu0 0.0
  %3785 = vmatpush1.msra.mxu0 0.0
  %3786 = vmatprep.subr.mxu0 0.0
  %3787 = vmatpush1.msra.mxu0 0.0
  %3788 = vmatprep.subr.mxu0 0.0
  %3789 = vmatpush1.msra.mxu0 0.0
  %3790 = vmatprep.subr.mxu0 0.0
  %3791 = vmatpush1.msra.mxu0 0.0
  %3792 = vmatprep.subr.mxu0 0.0
  %3793 = vmatpush1.msra.mxu0 0.0
  %3794 = vmatprep.subr.mxu0 0.0
  %3795 = vmatpush1.msra.mxu0 0.0
  %3796 = vmatprep.subr.mxu0 0.0
  %3797 = vmatpush1.msra.mxu0 0.0
  %3798 = vmatprep.subr.mxu0 0.0
  %3799 = vmatpush1.msra.mxu0 0.0
  %3800 = vmatprep.subr.mxu0 0.0
  %3801 = vmatpush1.msra.mxu0 0.0
  %3802 = vmatprep.subr.mxu0 0.0
  %3803 = vmatpush1.msra.mxu0 0.0
  %3804 = vmatprep.subr.mxu0 0.0
  %3805 = vmatpush1.msra.mxu0 0.0
  %3806 = vmatprep.subr.mxu0 0.0
  %3807 = vmatpush1.msra.mxu0 0.0
  %3808 = vmatprep.mubr.f32.mxu0 0.0
  %3809 = vmatmul.mubr.f32.gmra.mrb[0].mxu0 %v3721
  %v3810 = vpop.f32.mrb[0].mxu0
  %v3811 = vadd.f32 0.0, %v3810
  %v3812 = vpop.f32.mrb[0].mxu0
  %3813 = vmatprep.mubr.f32.mxu0 0.0
  %3814 = vmatmul.mubr.f32.gmra.mrb[0].mxu0 %v3724
  %v3815 = vpop.f32.mrb[0].mxu0
  %v3816 = vadd.f32 0.0, %v3815
  %v3817 = vpop.f32.mrb[0].mxu0
  %3818 = vmatprep.mubr.f32.mxu0 0.0
  %3819 = vmatmul.mubr.f32.gmra.mrb[0].mxu0 %v3727
  %v3820 = vpop.f32.mrb[0].mxu0
  %v3821 = vadd.f32 0.0, %v3820
  %v3822 = vpop.f32.mrb[0].mxu0
  %3823 = vmatprep.mubr.f32.mxu0 0.0
  %3824 = vmatmul.mubr.f32.gmra.mrb[0].mxu0 %v3730
  %v3825 = vpop.f32.mrb[0].mxu0
  %v3826 = vadd.f32 0.0, %v3825
  %v3827 = vpop.f32.mrb[0].mxu0
  %3828 = vmatprep.mubr.f32.mxu0 0.0
  %3829 = vmatmul.mubr.f32.gmra.mrb[0].mxu0 %v3733
  %v3830 = vpop.f32.mrb[0].mxu0
  %v3831 = vadd.f32 0.0, %v3830
  %v3832 = vpop.f32.mrb[0].mxu0
  %3833 = vmatprep.mubr.f32.mxu0 0.0
  %3834 = vmatmul.mubr.f32.gmra.mrb[0].mxu0 %v3736
  %v3835 = vpop.f32.mrb[0].mxu0
  %v3836 = vadd.f32 0.0, %v3835
  %v3837 = vpop.f32.mrb[0].mxu0
  %3838 = vmatprep.mubr.f32.mxu0 0.0
  %3839 = vmatmul.mubr.f32.gmra.mrb[0].mxu0 %v3739
  %v3840 = vpop.f32.mrb[0].mxu0
  %v3841 = vadd.f32 0.0, %v3840
  %v3842 = vpop.f32.mrb[0].mxu0
  %3843 = vmatprep.mubr.f32.mxu0 0.0
  %3844 = vmatmul.mubr.f32.gmra.mrb[0].mxu0 %v3742
  %v3845 = vpop.f32.mrb[0].mxu0
  %v3846 = vadd.f32 0.0, %v3845
  %v3847 = vpop.f32.mrb[0].mxu0
  %3848 = vdwg.mxu0
  %v3849 = vadd.f32 %v3595, %v3811
  %v3850 = vadd.f32 %v3596, %v3816
  %v3851 = vadd.f32 %v3597, %v3821
  %v3852 = vadd.f32 %v3598, %v3826
  %v3853 = vadd.f32 %v3599, %v3831
  %v3854 = vadd.f32 %v3600, %v3836
  %v3855 = vadd.f32 %v3601, %v3841
  %v3856 = vadd.f32 %v3602, %v3846
  %s3857 = scalar_lea.vmem %s5, 256
  %v3858 = vld [vmem:[%s3857] sm:$0xff]
  %v3859 = vld [vmem:[%s3857 + $0x8] sm:$0xff]
  %v3860 = vld [vmem:[%s3857 + $0x10] sm:$0xff]
  %v3861 = vld [vmem:[%s3857 + $0x18] sm:$0xff]
  %v3862 = vld [vmem:[%s3857 + $0x20] sm:$0xff]
  %v3863 = vld [vmem:[%s3857 + $0x28] sm:$0xff]
  %v3864 = vld [vmem:[%s3857 + $0x30] sm:$0xff]
  %v3865 = vld [vmem:[%s3857 + $0x38] sm:$0xff]
  %v3874 = vunpack.c.l.b16 %v3858
  %v3875 = vunpack.c.h.b16 %v3858
  %v3876 = vunpack.c.l.b16 %v3859
  %v3877 = vunpack.c.h.b16 %v3859
  %v3878 = vunpack.c.l.b16 %v3860
  %v3879 = vunpack.c.h.b16 %v3860
  %v3880 = vunpack.c.l.b16 %v3861
  %v3881 = vunpack.c.h.b16 %v3861
  %v3882 = vunpack.c.l.b16 %v3862
  %v3883 = vunpack.c.h.b16 %v3862
  %v3884 = vunpack.c.l.b16 %v3863
  %v3885 = vunpack.c.h.b16 %v3863
  %v3886 = vunpack.c.l.b16 %v3864
  %v3887 = vunpack.c.h.b16 %v3864
  %v3888 = vunpack.c.l.b16 %v3865
  %v3889 = vunpack.c.h.b16 %v3865
  %v3890 = vpack.c.b16 %v3876, %v3874
  %v3891 = vpack.c.b16 %v3877, %v3875
  %v3892 = vpack.c.b16 %v3880, %v3878
  %v3893 = vpack.c.b16 %v3881, %v3879
  %v3894 = vpack.c.b16 %v3884, %v3882
  %v3895 = vpack.c.b16 %v3885, %v3883
  %v3896 = vpack.c.b16 %v3888, %v3886
  %v3897 = vpack.c.b16 %v3889, %v3887
  %3906 = vmatprep.subr.bf16.mxu0 0
  %3907 = vmatpush1.bf16.msra.mxu0 %v2842
  %3908 = vmatprep.subr.bf16.mxu0 0
  %3909 = vmatpush1.bf16.msra.mxu0 %v2843
  %3910 = vmatprep.subr.bf16.mxu0 0
  %3911 = vmatpush1.bf16.msra.mxu0 %v2844
  %3912 = vmatprep.subr.bf16.mxu0 0
  %3913 = vmatpush1.bf16.msra.mxu0 %v2845
  %3914 = vmatprep.subr.bf16.mxu0 0
  %3915 = vmatpush1.bf16.msra.mxu0 %v2846
  %3916 = vmatprep.subr.bf16.mxu0 0
  %3917 = vmatpush1.bf16.msra.mxu0 %v2847
  %3918 = vmatprep.subr.bf16.mxu0 0
  %3919 = vmatpush1.bf16.msra.mxu0 %v2848
  %3920 = vmatprep.subr.bf16.mxu0 0
  %3921 = vmatpush1.bf16.msra.mxu0 %v2849
  %3922 = vmatprep.subr.bf16.mxu0 0
  %3923 = vmatpush1.bf16.msra.mxu0 %v2850
  %3924 = vmatprep.subr.bf16.mxu0 0
  %3925 = vmatpush1.bf16.msra.mxu0 %v2851
  %3926 = vmatprep.subr.bf16.mxu0 0
  %3927 = vmatpush1.bf16.msra.mxu0 %v2852
  %3928 = vmatprep.subr.bf16.mxu0 0
  %3929 = vmatpush1.bf16.msra.mxu0 %v2853
  %3930 = vmatprep.subr.bf16.mxu0 0
  %3931 = vmatpush1.bf16.msra.mxu0 %v2854
  %3932 = vmatprep.subr.bf16.mxu0 0
  %3933 = vmatpush1.bf16.msra.mxu0 %v2855
  %3934 = vmatprep.subr.bf16.mxu0 0
  %3935 = vmatpush1.bf16.msra.mxu0 %v2856
  %3936 = vmatprep.subr.bf16.mxu0 0
  %3937 = vmatpush1.bf16.msra.mxu0 %v2857
  %3938 = vmatprep.mubr.bf16.mxu0 %v3891
  %3939 = vmatmul.mubr.bf16.gmra.mrb[0].mxu0 %v3890
  %v3940 = vpop.f32.mrb[0].mxu0
  %v3941 = vadd.f32 0.0, %v3940
  %v3942 = vpop.f32.mrb[0].mxu0
  %v3943 = vpop.f32.mrb[0].mxu0
  %v3944 = vadd.f32 0.0, %v3943
  %v3945 = vpop.f32.mrb[0].mxu0
  %3946 = vmatprep.mubr.bf16.mxu0 %v3893
  %3947 = vmatmul.mubr.bf16.gmra.mrb[0].mxu0 %v3892
  %v3948 = vpop.f32.mrb[0].mxu0
  %v3949 = vadd.f32 0.0, %v3948
  %v3950 = vpop.f32.mrb[0].mxu0
  %v3951 = vpop.f32.mrb[0].mxu0
  %v3952 = vadd.f32 0.0, %v3951
  %v3953 = vpop.f32.mrb[0].mxu0
  %3954 = vmatprep.mubr.bf16.mxu0 %v3895
  %3955 = vmatmul.mubr.bf16.gmra.mrb[0].mxu0 %v3894
  %v3956 = vpop.f32.mrb[0].mxu0
  %v3957 = vadd.f32 0.0, %v3956
  %v3958 = vpop.f32.mrb[0].mxu0
  %v3959 = vpop.f32.mrb[0].mxu0
  %v3960 = vadd.f32 0.0, %v3959
  %v3961 = vpop.f32.mrb[0].mxu0
  %3962 = vmatprep.mubr.bf16.mxu0 %v3897
  %3963 = vmatmul.mubr.bf16.gmra.mrb[0].mxu0 %v3896
  %v3964 = vpop.f32.mrb[0].mxu0
  %v3965 = vadd.f32 0.0, %v3964
  %v3966 = vpop.f32.mrb[0].mxu0
  %v3967 = vpop.f32.mrb[0].mxu0
  %v3968 = vadd.f32 0.0, %v3967
  %v3969 = vpop.f32.mrb[0].mxu0
  %3970 = vdwg.mxu0
  %s3971 = scalar_lea.vmem %s3, 64
  %v3972 = vld [vmem:[%s3971] sm:$0xff]
  %v3973 = vld [vmem:[%s3971 + $0x8] sm:$0xff]
  %v3975 = vsel %vm3090, %v3941, 0
  %v3978 = vsel %vm3090, %v3944, 0
  %v3981 = vsel %vm3090, %v3949, 0
  %v3984 = vsel %vm3090, %v3952, 0
  %v3987 = vsel %vm3090, %v3957, 0
  %v3990 = vsel %vm3090, %v3960, 0
  %v3993 = vsel %vm3090, %v3965, 0
  %v3996 = vsel %vm3090, %v3968, 0
  %3998 = vmatprep.subr.mxu0 0.0
  %3999 = vmatpush1.msra.mxu0 %v3972
  %4000 = vmatprep.subr.mxu0 0.0
  %4001 = vmatpush1.msra.mxu0 %v3973
  %4002 = vmatprep.subr.mxu0 0.0
  %4003 = vmatpush1.msra.mxu0 0.0
  %4004 = vmatprep.subr.mxu0 0.0
  %4005 = vmatpush1.msra.mxu0 0.0
  %4006 = vmatprep.subr.mxu0 0.0
  %4007 = vmatpush1.msra.mxu0 0.0
  %4008 = vmatprep.subr.mxu0 0.0
  %4009 = vmatpush1.msra.mxu0 0.0
  %4010 = vmatprep.subr.mxu0 0.0
  %4011 = vmatpush1.msra.mxu0 0.0
  %4012 = vmatprep.subr.mxu0 0.0
  %4013 = vmatpush1.msra.mxu0 0.0
  %4014 = vmatprep.subr.mxu0 0.0
  %4015 = vmatpush1.msra.mxu0 0.0
  %4016 = vmatprep.subr.mxu0 0.0
  %4017 = vmatpush1.msra.mxu0 0.0
  %4018 = vmatprep.subr.mxu0 0.0
  %4019 = vmatpush1.msra.mxu0 0.0
  %4020 = vmatprep.subr.mxu0 0.0
  %4021 = vmatpush1.msra.mxu0 0.0
  %4022 = vmatprep.subr.mxu0 0.0
  %4023 = vmatpush1.msra.mxu0 0.0
  %4024 = vmatprep.subr.mxu0 0.0
  %4025 = vmatpush1.msra.mxu0 0.0
  %4026 = vmatprep.subr.mxu0 0.0
  %4027 = vmatpush1.msra.mxu0 0.0
  %4028 = vmatprep.subr.mxu0 0.0
  %4029 = vmatpush1.msra.mxu0 0.0
  %4030 = vmatprep.subr.mxu0 0.0
  %4031 = vmatpush1.msra.mxu0 0.0
  %4032 = vmatprep.subr.mxu0 0.0
  %4033 = vmatpush1.msra.mxu0 0.0
  %4034 = vmatprep.subr.mxu0 0.0
  %4035 = vmatpush1.msra.mxu0 0.0
  %4036 = vmatprep.subr.mxu0 0.0
  %4037 = vmatpush1.msra.mxu0 0.0
  %4038 = vmatprep.subr.mxu0 0.0
  %4039 = vmatpush1.msra.mxu0 0.0
  %4040 = vmatprep.subr.mxu0 0.0
  %4041 = vmatpush1.msra.mxu0 0.0
  %4042 = vmatprep.subr.mxu0 0.0
  %4043 = vmatpush1.msra.mxu0 0.0
  %4044 = vmatprep.subr.mxu0 0.0
  %4045 = vmatpush1.msra.mxu0 0.0
  %4046 = vmatprep.subr.mxu0 0.0
  %4047 = vmatpush1.msra.mxu0 0.0
  %4048 = vmatprep.subr.mxu0 0.0
  %4049 = vmatpush1.msra.mxu0 0.0
  %4050 = vmatprep.subr.mxu0 0.0
  %4051 = vmatpush1.msra.mxu0 0.0
  %4052 = vmatprep.subr.mxu0 0.0
  %4053 = vmatpush1.msra.mxu0 0.0
  %4054 = vmatprep.subr.mxu0 0.0
  %4055 = vmatpush1.msra.mxu0 0.0
  %4056 = vmatprep.subr.mxu0 0.0
  %4057 = vmatpush1.msra.mxu0 0.0
  %4058 = vmatprep.subr.mxu0 0.0
  %4059 = vmatpush1.msra.mxu0 0.0
  %4060 = vmatprep.subr.mxu0 0.0
  %4061 = vmatpush1.msra.mxu0 0.0
  %4062 = vmatprep.mubr.f32.mxu0 0.0
  %4063 = vmatmul.mubr.f32.gmra.mrb[0].mxu0 %v3975
  %v4064 = vpop.f32.mrb[0].mxu0
  %v4065 = vadd.f32 0.0, %v4064
  %v4066 = vpop.f32.mrb[0].mxu0
  %4067 = vmatprep.mubr.f32.mxu0 0.0
  %4068 = vmatmul.mubr.f32.gmra.mrb[0].mxu0 %v3978
  %v4069 = vpop.f32.mrb[0].mxu0
  %v4070 = vadd.f32 0.0, %v4069
  %v4071 = vpop.f32.mrb[0].mxu0
  %4072 = vmatprep.mubr.f32.mxu0 0.0
  %4073 = vmatmul.mubr.f32.gmra.mrb[0].mxu0 %v3981
  %v4074 = vpop.f32.mrb[0].mxu0
  %v4075 = vadd.f32 0.0, %v4074
  %v4076 = vpop.f32.mrb[0].mxu0
  %4077 = vmatprep.mubr.f32.mxu0 0.0
  %4078 = vmatmul.mubr.f32.gmra.mrb[0].mxu0 %v3984
  %v4079 = vpop.f32.mrb[0].mxu0
  %v4080 = vadd.f32 0.0, %v4079
  %v4081 = vpop.f32.mrb[0].mxu0
  %4082 = vmatprep.mubr.f32.mxu0 0.0
  %4083 = vmatmul.mubr.f32.gmra.mrb[0].mxu0 %v3987
  %v4084 = vpop.f32.mrb[0].mxu0
  %v4085 = vadd.f32 0.0, %v4084
  %v4086 = vpop.f32.mrb[0].mxu0
  %4087 = vmatprep.mubr.f32.mxu0 0.0
  %4088 = vmatmul.mubr.f32.gmra.mrb[0].mxu0 %v3990
  %v4089 = vpop.f32.mrb[0].mxu0
  %v4090 = vadd.f32 0.0, %v4089
  %v4091 = vpop.f32.mrb[0].mxu0
  %4092 = vmatprep.mubr.f32.mxu0 0.0
  %4093 = vmatmul.mubr.f32.gmra.mrb[0].mxu0 %v3993
  %v4094 = vpop.f32.mrb[0].mxu0
  %v4095 = vadd.f32 0.0, %v4094
  %v4096 = vpop.f32.mrb[0].mxu0
  %4097 = vmatprep.mubr.f32.mxu0 0.0
  %4098 = vmatmul.mubr.f32.gmra.mrb[0].mxu0 %v3996
  %v4099 = vpop.f32.mrb[0].mxu0
  %v4100 = vadd.f32 0.0, %v4099
  %v4101 = vpop.f32.mrb[0].mxu0
  %4102 = vdwg.mxu0
  %v4103 = vadd.f32 %v3849, %v4065
  %v4104 = vadd.f32 %v3850, %v4070
  %v4105 = vadd.f32 %v3851, %v4075
  %v4106 = vadd.f32 %v3852, %v4080
  %v4107 = vadd.f32 %v3853, %v4085
  %v4108 = vadd.f32 %v3854, %v4090
  %v4109 = vadd.f32 %v3855, %v4095
  %v4110 = vadd.f32 %v3856, %v4100
  %s4111 = scalar_lea.vmem %s5, 320
  %v4112 = vld [vmem:[%s4111] sm:$0xff]
  %v4113 = vld [vmem:[%s4111 + $0x8] sm:$0xff]
  %v4114 = vld [vmem:[%s4111 + $0x10] sm:$0xff]
  %v4115 = vld [vmem:[%s4111 + $0x18] sm:$0xff]
  %v4116 = vld [vmem:[%s4111 + $0x20] sm:$0xff]
  %v4117 = vld [vmem:[%s4111 + $0x28] sm:$0xff]
  %v4118 = vld [vmem:[%s4111 + $0x30] sm:$0xff]
  %v4119 = vld [vmem:[%s4111 + $0x38] sm:$0xff]
  %v4128 = vunpack.c.l.b16 %v4112
  %v4129 = vunpack.c.h.b16 %v4112
  %v4130 = vunpack.c.l.b16 %v4113
  %v4131 = vunpack.c.h.b16 %v4113
  %v4132 = vunpack.c.l.b16 %v4114
  %v4133 = vunpack.c.h.b16 %v4114
  %v4134 = vunpack.c.l.b16 %v4115
  %v4135 = vunpack.c.h.b16 %v4115
  %v4136 = vunpack.c.l.b16 %v4116
  %v4137 = vunpack.c.h.b16 %v4116
  %v4138 = vunpack.c.l.b16 %v4117
  %v4139 = vunpack.c.h.b16 %v4117
  %v4140 = vunpack.c.l.b16 %v4118
  %v4141 = vunpack.c.h.b16 %v4118
  %v4142 = vunpack.c.l.b16 %v4119
  %v4143 = vunpack.c.h.b16 %v4119
  %v4144 = vpack.c.b16 %v4130, %v4128
  %v4145 = vpack.c.b16 %v4131, %v4129
  %v4146 = vpack.c.b16 %v4134, %v4132
  %v4147 = vpack.c.b16 %v4135, %v4133
  %v4148 = vpack.c.b16 %v4138, %v4136
  %v4149 = vpack.c.b16 %v4139, %v4137
  %v4150 = vpack.c.b16 %v4142, %v4140
  %v4151 = vpack.c.b16 %v4143, %v4141
  %4160 = vmatprep.subr.bf16.mxu0 0
  %4161 = vmatpush1.bf16.msra.mxu0 %v2842
  %4162 = vmatprep.subr.bf16.mxu0 0
  %4163 = vmatpush1.bf16.msra.mxu0 %v2843
  %4164 = vmatprep.subr.bf16.mxu0 0
  %4165 = vmatpush1.bf16.msra.mxu0 %v2844
  %4166 = vmatprep.subr.bf16.mxu0 0
  %4167 = vmatpush1.bf16.msra.mxu0 %v2845
  %4168 = vmatprep.subr.bf16.mxu0 0
  %4169 = vmatpush1.bf16.msra.mxu0 %v2846
  %4170 = vmatprep.subr.bf16.mxu0 0
  %4171 = vmatpush1.bf16.msra.mxu0 %v2847
  %4172 = vmatprep.subr.bf16.mxu0 0
  %4173 = vmatpush1.bf16.msra.mxu0 %v2848
  %4174 = vmatprep.subr.bf16.mxu0 0
  %4175 = vmatpush1.bf16.msra.mxu0 %v2849
  %4176 = vmatprep.subr.bf16.mxu0 0
  %4177 = vmatpush1.bf16.msra.mxu0 %v2850
  %4178 = vmatprep.subr.bf16.mxu0 0
  %4179 = vmatpush1.bf16.msra.mxu0 %v2851
  %4180 = vmatprep.subr.bf16.mxu0 0
  %4181 = vmatpush1.bf16.msra.mxu0 %v2852
  %4182 = vmatprep.subr.bf16.mxu0 0
  %4183 = vmatpush1.bf16.msra.mxu0 %v2853
  %4184 = vmatprep.subr.bf16.mxu0 0
  %4185 = vmatpush1.bf16.msra.mxu0 %v2854
  %4186 = vmatprep.subr.bf16.mxu0 0
  %4187 = vmatpush1.bf16.msra.mxu0 %v2855
  %4188 = vmatprep.subr.bf16.mxu0 0
  %4189 = vmatpush1.bf16.msra.mxu0 %v2856
  %4190 = vmatprep.subr.bf16.mxu0 0
  %4191 = vmatpush1.bf16.msra.mxu0 %v2857
  %4192 = vmatprep.mubr.bf16.mxu0 %v4145
  %4193 = vmatmul.mubr.bf16.gmra.mrb[0].mxu0 %v4144
  %v4194 = vpop.f32.mrb[0].mxu0
  %v4195 = vadd.f32 0.0, %v4194
  %v4196 = vpop.f32.mrb[0].mxu0
  %v4197 = vpop.f32.mrb[0].mxu0
  %v4198 = vadd.f32 0.0, %v4197
  %v4199 = vpop.f32.mrb[0].mxu0
  %4200 = vmatprep.mubr.bf16.mxu0 %v4147
  %4201 = vmatmul.mubr.bf16.gmra.mrb[0].mxu0 %v4146
  %v4202 = vpop.f32.mrb[0].mxu0
  %v4203 = vadd.f32 0.0, %v4202
  %v4204 = vpop.f32.mrb[0].mxu0
  %v4205 = vpop.f32.mrb[0].mxu0
  %v4206 = vadd.f32 0.0, %v4205
  %v4207 = vpop.f32.mrb[0].mxu0
  %4208 = vmatprep.mubr.bf16.mxu0 %v4149
  %4209 = vmatmul.mubr.bf16.gmra.mrb[0].mxu0 %v4148
  %v4210 = vpop.f32.mrb[0].mxu0
  %v4211 = vadd.f32 0.0, %v4210
  %v4212 = vpop.f32.mrb[0].mxu0
  %v4213 = vpop.f32.mrb[0].mxu0
  %v4214 = vadd.f32 0.0, %v4213
  %v4215 = vpop.f32.mrb[0].mxu0
  %4216 = vmatprep.mubr.bf16.mxu0 %v4151
  %4217 = vmatmul.mubr.bf16.gmra.mrb[0].mxu0 %v4150
  %v4218 = vpop.f32.mrb[0].mxu0
  %v4219 = vadd.f32 0.0, %v4218
  %v4220 = vpop.f32.mrb[0].mxu0
  %v4221 = vpop.f32.mrb[0].mxu0
  %v4222 = vadd.f32 0.0, %v4221
  %v4223 = vpop.f32.mrb[0].mxu0
  %4224 = vdwg.mxu0
  %s4225 = scalar_lea.vmem %s3, 80
  %v4226 = vld [vmem:[%s4225] sm:$0xff]
  %v4227 = vld [vmem:[%s4225 + $0x8] sm:$0xff]
  %v4229 = vsel %vm3090, %v4195, 0
  %v4232 = vsel %vm3090, %v4198, 0
  %v4235 = vsel %vm3090, %v4203, 0
  %v4238 = vsel %vm3090, %v4206, 0
  %v4241 = vsel %vm3090, %v4211, 0
  %v4244 = vsel %vm3090, %v4214, 0
  %v4247 = vsel %vm3090, %v4219, 0
  %v4250 = vsel %vm3090, %v4222, 0
  %4252 = vmatprep.subr.mxu0 0.0
  %4253 = vmatpush1.msra.mxu0 %v4226
  %4254 = vmatprep.subr.mxu0 0.0
  %4255 = vmatpush1.msra.mxu0 %v4227
  %4256 = vmatprep.subr.mxu0 0.0
  %4257 = vmatpush1.msra.mxu0 0.0
  %4258 = vmatprep.subr.mxu0 0.0
  %4259 = vmatpush1.msra.mxu0 0.0
  %4260 = vmatprep.subr.mxu0 0.0
  %4261 = vmatpush1.msra.mxu0 0.0
  %4262 = vmatprep.subr.mxu0 0.0
  %4263 = vmatpush1.msra.mxu0 0.0
  %4264 = vmatprep.subr.mxu0 0.0
  %4265 = vmatpush1.msra.mxu0 0.0
  %4266 = vmatprep.subr.mxu0 0.0
  %4267 = vmatpush1.msra.mxu0 0.0
  %4268 = vmatprep.subr.mxu0 0.0
  %4269 = vmatpush1.msra.mxu0 0.0
  %4270 = vmatprep.subr.mxu0 0.0
  %4271 = vmatpush1.msra.mxu0 0.0
  %4272 = vmatprep.subr.mxu0 0.0
  %4273 = vmatpush1.msra.mxu0 0.0
  %4274 = vmatprep.subr.mxu0 0.0
  %4275 = vmatpush1.msra.mxu0 0.0
  %4276 = vmatprep.subr.mxu0 0.0
  %4277 = vmatpush1.msra.mxu0 0.0
  %4278 = vmatprep.subr.mxu0 0.0
  %4279 = vmatpush1.msra.mxu0 0.0
  %4280 = vmatprep.subr.mxu0 0.0
  %4281 = vmatpush1.msra.mxu0 0.0
  %4282 = vmatprep.subr.mxu0 0.0
  %4283 = vmatpush1.msra.mxu0 0.0
  %4284 = vmatprep.subr.mxu0 0.0
  %4285 = vmatpush1.msra.mxu0 0.0
  %4286 = vmatprep.subr.mxu0 0.0
  %4287 = vmatpush1.msra.mxu0 0.0
  %4288 = vmatprep.subr.mxu0 0.0
  %4289 = vmatpush1.msra.mxu0 0.0
  %4290 = vmatprep.subr.mxu0 0.0
  %4291 = vmatpush1.msra.mxu0 0.0
  %4292 = vmatprep.subr.mxu0 0.0
  %4293 = vmatpush1.msra.mxu0 0.0
  %4294 = vmatprep.subr.mxu0 0.0
  %4295 = vmatpush1.msra.mxu0 0.0
  %4296 = vmatprep.subr.mxu0 0.0
  %4297 = vmatpush1.msra.mxu0 0.0
  %4298 = vmatprep.subr.mxu0 0.0
  %4299 = vmatpush1.msra.mxu0 0.0
  %4300 = vmatprep.subr.mxu0 0.0
  %4301 = vmatpush1.msra.mxu0 0.0
  %4302 = vmatprep.subr.mxu0 0.0
  %4303 = vmatpush1.msra.mxu0 0.0
  %4304 = vmatprep.subr.mxu0 0.0
  %4305 = vmatpush1.msra.mxu0 0.0
  %4306 = vmatprep.subr.mxu0 0.0
  %4307 = vmatpush1.msra.mxu0 0.0
  %4308 = vmatprep.subr.mxu0 0.0
  %4309 = vmatpush1.msra.mxu0 0.0
  %4310 = vmatprep.subr.mxu0 0.0
  %4311 = vmatpush1.msra.mxu0 0.0
  %4312 = vmatprep.subr.mxu0 0.0
  %4313 = vmatpush1.msra.mxu0 0.0
  %4314 = vmatprep.subr.mxu0 0.0
  %4315 = vmatpush1.msra.mxu0 0.0
  %4316 = vmatprep.mubr.f32.mxu0 0.0
  %4317 = vmatmul.mubr.f32.gmra.mrb[0].mxu0 %v4229
  %v4318 = vpop.f32.mrb[0].mxu0
  %v4319 = vadd.f32 0.0, %v4318
  %v4320 = vpop.f32.mrb[0].mxu0
  %4321 = vmatprep.mubr.f32.mxu0 0.0
  %4322 = vmatmul.mubr.f32.gmra.mrb[0].mxu0 %v4232
  %v4323 = vpop.f32.mrb[0].mxu0
  %v4324 = vadd.f32 0.0, %v4323
  %v4325 = vpop.f32.mrb[0].mxu0
  %4326 = vmatprep.mubr.f32.mxu0 0.0
  %4327 = vmatmul.mubr.f32.gmra.mrb[0].mxu0 %v4235
  %v4328 = vpop.f32.mrb[0].mxu0
  %v4329 = vadd.f32 0.0, %v4328
  %v4330 = vpop.f32.mrb[0].mxu0
  %4331 = vmatprep.mubr.f32.mxu0 0.0
  %4332 = vmatmul.mubr.f32.gmra.mrb[0].mxu0 %v4238
  %v4333 = vpop.f32.mrb[0].mxu0
  %v4334 = vadd.f32 0.0, %v4333
  %v4335 = vpop.f32.mrb[0].mxu0
  %4336 = vmatprep.mubr.f32.mxu0 0.0
  %4337 = vmatmul.mubr.f32.gmra.mrb[0].mxu0 %v4241
  %v4338 = vpop.f32.mrb[0].mxu0
  %v4339 = vadd.f32 0.0, %v4338
  %v4340 = vpop.f32.mrb[0].mxu0
  %4341 = vmatprep.mubr.f32.mxu0 0.0
  %4342 = vmatmul.mubr.f32.gmra.mrb[0].mxu0 %v4244
  %v4343 = vpop.f32.mrb[0].mxu0
  %v4344 = vadd.f32 0.0, %v4343
  %v4345 = vpop.f32.mrb[0].mxu0
  %4346 = vmatprep.mubr.f32.mxu0 0.0
  %4347 = vmatmul.mubr.f32.gmra.mrb[0].mxu0 %v4247
  %v4348 = vpop.f32.mrb[0].mxu0
  %v4349 = vadd.f32 0.0, %v4348
  %v4350 = vpop.f32.mrb[0].mxu0
  %4351 = vmatprep.mubr.f32.mxu0 0.0
  %4352 = vmatmul.mubr.f32.gmra.mrb[0].mxu0 %v4250
  %v4353 = vpop.f32.mrb[0].mxu0
  %v4354 = vadd.f32 0.0, %v4353
  %v4355 = vpop.f32.mrb[0].mxu0
  %4356 = vdwg.mxu0
  %v4357 = vadd.f32 %v4103, %v4319
  %v4358 = vadd.f32 %v4104, %v4324
  %v4359 = vadd.f32 %v4105, %v4329
  %v4360 = vadd.f32 %v4106, %v4334
  %v4361 = vadd.f32 %v4107, %v4339
  %v4362 = vadd.f32 %v4108, %v4344
  %v4363 = vadd.f32 %v4109, %v4349
  %v4364 = vadd.f32 %v4110, %v4354
  %s4365 = scalar_lea.vmem %s5, 384
  %v4366 = vld [vmem:[%s4365] sm:$0xff]
  %v4367 = vld [vmem:[%s4365 + $0x8] sm:$0xff]
  %v4368 = vld [vmem:[%s4365 + $0x10] sm:$0xff]
  %v4369 = vld [vmem:[%s4365 + $0x18] sm:$0xff]
  %v4370 = vld [vmem:[%s4365 + $0x20] sm:$0xff]
  %v4371 = vld [vmem:[%s4365 + $0x28] sm:$0xff]
  %v4372 = vld [vmem:[%s4365 + $0x30] sm:$0xff]
  %v4373 = vld [vmem:[%s4365 + $0x38] sm:$0xff]
  %v4382 = vunpack.c.l.b16 %v4366
  %v4383 = vunpack.c.h.b16 %v4366
  %v4384 = vunpack.c.l.b16 %v4367
  %v4385 = vunpack.c.h.b16 %v4367
  %v4386 = vunpack.c.l.b16 %v4368
  %v4387 = vunpack.c.h.b16 %v4368
  %v4388 = vunpack.c.l.b16 %v4369
  %v4389 = vunpack.c.h.b16 %v4369
  %v4390 = vunpack.c.l.b16 %v4370
  %v4391 = vunpack.c.h.b16 %v4370
  %v4392 = vunpack.c.l.b16 %v4371
  %v4393 = vunpack.c.h.b16 %v4371
  %v4394 = vunpack.c.l.b16 %v4372
  %v4395 = vunpack.c.h.b16 %v4372
  %v4396 = vunpack.c.l.b16 %v4373
  %v4397 = vunpack.c.h.b16 %v4373
  %v4398 = vpack.c.b16 %v4384, %v4382
  %v4399 = vpack.c.b16 %v4385, %v4383
  %v4400 = vpack.c.b16 %v4388, %v4386
  %v4401 = vpack.c.b16 %v4389, %v4387
  %v4402 = vpack.c.b16 %v4392, %v4390
  %v4403 = vpack.c.b16 %v4393, %v4391
  %v4404 = vpack.c.b16 %v4396, %v4394
  %v4405 = vpack.c.b16 %v4397, %v4395
  %4414 = vmatprep.subr.bf16.mxu0 0
  %4415 = vmatpush1.bf16.msra.mxu0 %v2842
  %4416 = vmatprep.subr.bf16.mxu0 0
  %4417 = vmatpush1.bf16.msra.mxu0 %v2843
  %4418 = vmatprep.subr.bf16.mxu0 0
  %4419 = vmatpush1.bf16.msra.mxu0 %v2844
  %4420 = vmatprep.subr.bf16.mxu0 0
  %4421 = vmatpush1.bf16.msra.mxu0 %v2845
  %4422 = vmatprep.subr.bf16.mxu0 0
  %4423 = vmatpush1.bf16.msra.mxu0 %v2846
  %4424 = vmatprep.subr.bf16.mxu0 0
  %4425 = vmatpush1.bf16.msra.mxu0 %v2847
  %4426 = vmatprep.subr.bf16.mxu0 0
  %4427 = vmatpush1.bf16.msra.mxu0 %v2848
  %4428 = vmatprep.subr.bf16.mxu0 0
  %4429 = vmatpush1.bf16.msra.mxu0 %v2849
  %4430 = vmatprep.subr.bf16.mxu0 0
  %4431 = vmatpush1.bf16.msra.mxu0 %v2850
  %4432 = vmatprep.subr.bf16.mxu0 0
  %4433 = vmatpush1.bf16.msra.mxu0 %v2851
  %4434 = vmatprep.subr.bf16.mxu0 0
  %4435 = vmatpush1.bf16.msra.mxu0 %v2852
  %4436 = vmatprep.subr.bf16.mxu0 0
  %4437 = vmatpush1.bf16.msra.mxu0 %v2853
  %4438 = vmatprep.subr.bf16.mxu0 0
  %4439 = vmatpush1.bf16.msra.mxu0 %v2854
  %4440 = vmatprep.subr.bf16.mxu0 0
  %4441 = vmatpush1.bf16.msra.mxu0 %v2855
  %4442 = vmatprep.subr.bf16.mxu0 0
  %4443 = vmatpush1.bf16.msra.mxu0 %v2856
  %4444 = vmatprep.subr.bf16.mxu0 0
  %4445 = vmatpush1.bf16.msra.mxu0 %v2857
  %4446 = vmatprep.mubr.bf16.mxu0 %v4399
  %4447 = vmatmul.mubr.bf16.gmra.mrb[0].mxu0 %v4398
  %v4448 = vpop.f32.mrb[0].mxu0
  %v4449 = vadd.f32 0.0, %v4448
  %v4450 = vpop.f32.mrb[0].mxu0
  %v4451 = vpop.f32.mrb[0].mxu0
  %v4452 = vadd.f32 0.0, %v4451
  %v4453 = vpop.f32.mrb[0].mxu0
  %4454 = vmatprep.mubr.bf16.mxu0 %v4401
  %4455 = vmatmul.mubr.bf16.gmra.mrb[0].mxu0 %v4400
  %v4456 = vpop.f32.mrb[0].mxu0
  %v4457 = vadd.f32 0.0, %v4456
  %v4458 = vpop.f32.mrb[0].mxu0
  %v4459 = vpop.f32.mrb[0].mxu0
  %v4460 = vadd.f32 0.0, %v4459
  %v4461 = vpop.f32.mrb[0].mxu0
  %4462 = vmatprep.mubr.bf16.mxu0 %v4403
  %4463 = vmatmul.mubr.bf16.gmra.mrb[0].mxu0 %v4402
  %v4464 = vpop.f32.mrb[0].mxu0
  %v4465 = vadd.f32 0.0, %v4464
  %v4466 = vpop.f32.mrb[0].mxu0
  %v4467 = vpop.f32.mrb[0].mxu0
  %v4468 = vadd.f32 0.0, %v4467
  %v4469 = vpop.f32.mrb[0].mxu0
  %4470 = vmatprep.mubr.bf16.mxu0 %v4405
  %4471 = vmatmul.mubr.bf16.gmra.mrb[0].mxu0 %v4404
  %v4472 = vpop.f32.mrb[0].mxu0
  %v4473 = vadd.f32 0.0, %v4472
  %v4474 = vpop.f32.mrb[0].mxu0
  %v4475 = vpop.f32.mrb[0].mxu0
  %v4476 = vadd.f32 0.0, %v4475
  %v4477 = vpop.f32.mrb[0].mxu0
  %4478 = vdwg.mxu0
  %s4479 = scalar_lea.vmem %s3, 96
  %v4480 = vld [vmem:[%s4479] sm:$0xff]
  %v4481 = vld [vmem:[%s4479 + $0x8] sm:$0xff]
  %v4483 = vsel %vm3090, %v4449, 0
  %v4486 = vsel %vm3090, %v4452, 0
  %v4489 = vsel %vm3090, %v4457, 0
  %v4492 = vsel %vm3090, %v4460, 0
  %v4495 = vsel %vm3090, %v4465, 0
  %v4498 = vsel %vm3090, %v4468, 0
  %v4501 = vsel %vm3090, %v4473, 0
  %v4504 = vsel %vm3090, %v4476, 0
  %4506 = vmatprep.subr.mxu0 0.0
  %4507 = vmatpush1.msra.mxu0 %v4480
  %4508 = vmatprep.subr.mxu0 0.0
  %4509 = vmatpush1.msra.mxu0 %v4481
  %4510 = vmatprep.subr.mxu0 0.0
  %4511 = vmatpush1.msra.mxu0 0.0
  %4512 = vmatprep.subr.mxu0 0.0
  %4513 = vmatpush1.msra.mxu0 0.0
  %4514 = vmatprep.subr.mxu0 0.0
  %4515 = vmatpush1.msra.mxu0 0.0
  %4516 = vmatprep.subr.mxu0 0.0
  %4517 = vmatpush1.msra.mxu0 0.0
  %4518 = vmatprep.subr.mxu0 0.0
  %4519 = vmatpush1.msra.mxu0 0.0
  %4520 = vmatprep.subr.mxu0 0.0
  %4521 = vmatpush1.msra.mxu0 0.0
  %4522 = vmatprep.subr.mxu0 0.0
  %4523 = vmatpush1.msra.mxu0 0.0
  %4524 = vmatprep.subr.mxu0 0.0
  %4525 = vmatpush1.msra.mxu0 0.0
  %4526 = vmatprep.subr.mxu0 0.0
  %4527 = vmatpush1.msra.mxu0 0.0
  %4528 = vmatprep.subr.mxu0 0.0
  %4529 = vmatpush1.msra.mxu0 0.0
  %4530 = vmatprep.subr.mxu0 0.0
  %4531 = vmatpush1.msra.mxu0 0.0
  %4532 = vmatprep.subr.mxu0 0.0
  %4533 = vmatpush1.msra.mxu0 0.0
  %4534 = vmatprep.subr.mxu0 0.0
  %4535 = vmatpush1.msra.mxu0 0.0
  %4536 = vmatprep.subr.mxu0 0.0
  %4537 = vmatpush1.msra.mxu0 0.0
  %4538 = vmatprep.subr.mxu0 0.0
  %4539 = vmatpush1.msra.mxu0 0.0
  %4540 = vmatprep.subr.mxu0 0.0
  %4541 = vmatpush1.msra.mxu0 0.0
  %4542 = vmatprep.subr.mxu0 0.0
  %4543 = vmatpush1.msra.mxu0 0.0
  %4544 = vmatprep.subr.mxu0 0.0
  %4545 = vmatpush1.msra.mxu0 0.0
  %4546 = vmatprep.subr.mxu0 0.0
  %4547 = vmatpush1.msra.mxu0 0.0
  %4548 = vmatprep.subr.mxu0 0.0
  %4549 = vmatpush1.msra.mxu0 0.0
  %4550 = vmatprep.subr.mxu0 0.0
  %4551 = vmatpush1.msra.mxu0 0.0
  %4552 = vmatprep.subr.mxu0 0.0
  %4553 = vmatpush1.msra.mxu0 0.0
  %4554 = vmatprep.subr.mxu0 0.0
  %4555 = vmatpush1.msra.mxu0 0.0
  %4556 = vmatprep.subr.mxu0 0.0
  %4557 = vmatpush1.msra.mxu0 0.0
  %4558 = vmatprep.subr.mxu0 0.0
  %4559 = vmatpush1.msra.mxu0 0.0
  %4560 = vmatprep.subr.mxu0 0.0
  %4561 = vmatpush1.msra.mxu0 0.0
  %4562 = vmatprep.subr.mxu0 0.0
  %4563 = vmatpush1.msra.mxu0 0.0
  %4564 = vmatprep.subr.mxu0 0.0
  %4565 = vmatpush1.msra.mxu0 0.0
  %4566 = vmatprep.subr.mxu0 0.0
  %4567 = vmatpush1.msra.mxu0 0.0
  %4568 = vmatprep.subr.mxu0 0.0
  %4569 = vmatpush1.msra.mxu0 0.0
  %4570 = vmatprep.mubr.f32.mxu0 0.0
  %4571 = vmatmul.mubr.f32.gmra.mrb[0].mxu0 %v4483
  %v4572 = vpop.f32.mrb[0].mxu0
  %v4573 = vadd.f32 0.0, %v4572
  %v4574 = vpop.f32.mrb[0].mxu0
  %4575 = vmatprep.mubr.f32.mxu0 0.0
  %4576 = vmatmul.mubr.f32.gmra.mrb[0].mxu0 %v4486
  %v4577 = vpop.f32.mrb[0].mxu0
  %v4578 = vadd.f32 0.0, %v4577
  %v4579 = vpop.f32.mrb[0].mxu0
  %4580 = vmatprep.mubr.f32.mxu0 0.0
  %4581 = vmatmul.mubr.f32.gmra.mrb[0].mxu0 %v4489
  %v4582 = vpop.f32.mrb[0].mxu0
  %v4583 = vadd.f32 0.0, %v4582
  %v4584 = vpop.f32.mrb[0].mxu0
  %4585 = vmatprep.mubr.f32.mxu0 0.0
  %4586 = vmatmul.mubr.f32.gmra.mrb[0].mxu0 %v4492
  %v4587 = vpop.f32.mrb[0].mxu0
  %v4588 = vadd.f32 0.0, %v4587
  %v4589 = vpop.f32.mrb[0].mxu0
  %4590 = vmatprep.mubr.f32.mxu0 0.0
  %4591 = vmatmul.mubr.f32.gmra.mrb[0].mxu0 %v4495
  %v4592 = vpop.f32.mrb[0].mxu0
  %v4593 = vadd.f32 0.0, %v4592
  %v4594 = vpop.f32.mrb[0].mxu0
  %4595 = vmatprep.mubr.f32.mxu0 0.0
  %4596 = vmatmul.mubr.f32.gmra.mrb[0].mxu0 %v4498
  %v4597 = vpop.f32.mrb[0].mxu0
  %v4598 = vadd.f32 0.0, %v4597
  %v4599 = vpop.f32.mrb[0].mxu0
  %4600 = vmatprep.mubr.f32.mxu0 0.0
  %4601 = vmatmul.mubr.f32.gmra.mrb[0].mxu0 %v4501
  %v4602 = vpop.f32.mrb[0].mxu0
  %v4603 = vadd.f32 0.0, %v4602
  %v4604 = vpop.f32.mrb[0].mxu0
  %4605 = vmatprep.mubr.f32.mxu0 0.0
  %4606 = vmatmul.mubr.f32.gmra.mrb[0].mxu0 %v4504
  %v4607 = vpop.f32.mrb[0].mxu0
  %v4608 = vadd.f32 0.0, %v4607
  %v4609 = vpop.f32.mrb[0].mxu0
  %4610 = vdwg.mxu0
  %v4611 = vadd.f32 %v4357, %v4573
  %v4612 = vadd.f32 %v4358, %v4578
  %v4613 = vadd.f32 %v4359, %v4583
  %v4614 = vadd.f32 %v4360, %v4588
  %v4615 = vadd.f32 %v4361, %v4593
  %v4616 = vadd.f32 %v4362, %v4598
  %v4617 = vadd.f32 %v4363, %v4603
  %v4618 = vadd.f32 %v4364, %v4608
  %s4619 = scalar_lea.vmem %s5, 448
  %v4620 = vld [vmem:[%s4619] sm:$0xff]
  %v4621 = vld [vmem:[%s4619 + $0x8] sm:$0xff]
  %v4622 = vld [vmem:[%s4619 + $0x10] sm:$0xff]
  %v4623 = vld [vmem:[%s4619 + $0x18] sm:$0xff]
  %v4624 = vld [vmem:[%s4619 + $0x20] sm:$0xff]
  %v4625 = vld [vmem:[%s4619 + $0x28] sm:$0xff]
  %v4626 = vld [vmem:[%s4619 + $0x30] sm:$0xff]
  %v4627 = vld [vmem:[%s4619 + $0x38] sm:$0xff]
  %v4636 = vunpack.c.l.b16 %v4620
  %v4637 = vunpack.c.h.b16 %v4620
  %v4638 = vunpack.c.l.b16 %v4621
  %v4639 = vunpack.c.h.b16 %v4621
  %v4640 = vunpack.c.l.b16 %v4622
  %v4641 = vunpack.c.h.b16 %v4622
  %v4642 = vunpack.c.l.b16 %v4623
  %v4643 = vunpack.c.h.b16 %v4623
  %v4644 = vunpack.c.l.b16 %v4624
  %v4645 = vunpack.c.h.b16 %v4624
  %v4646 = vunpack.c.l.b16 %v4625
  %v4647 = vunpack.c.h.b16 %v4625
  %v4648 = vunpack.c.l.b16 %v4626
  %v4649 = vunpack.c.h.b16 %v4626
  %v4650 = vunpack.c.l.b16 %v4627
  %v4651 = vunpack.c.h.b16 %v4627
  %v4652 = vpack.c.b16 %v4638, %v4636
  %v4653 = vpack.c.b16 %v4639, %v4637
  %v4654 = vpack.c.b16 %v4642, %v4640
  %v4655 = vpack.c.b16 %v4643, %v4641
  %v4656 = vpack.c.b16 %v4646, %v4644
  %v4657 = vpack.c.b16 %v4647, %v4645
  %v4658 = vpack.c.b16 %v4650, %v4648
  %v4659 = vpack.c.b16 %v4651, %v4649
  %4668 = vmatprep.subr.bf16.mxu0 0
  %4669 = vmatpush1.bf16.msra.mxu0 %v2842
  %4670 = vmatprep.subr.bf16.mxu0 0
  %4671 = vmatpush1.bf16.msra.mxu0 %v2843
  %4672 = vmatprep.subr.bf16.mxu0 0
  %4673 = vmatpush1.bf16.msra.mxu0 %v2844
  %4674 = vmatprep.subr.bf16.mxu0 0
  %4675 = vmatpush1.bf16.msra.mxu0 %v2845
  %4676 = vmatprep.subr.bf16.mxu0 0
  %4677 = vmatpush1.bf16.msra.mxu0 %v2846
  %4678 = vmatprep.subr.bf16.mxu0 0
  %4679 = vmatpush1.bf16.msra.mxu0 %v2847
  %4680 = vmatprep.subr.bf16.mxu0 0
  %4681 = vmatpush1.bf16.msra.mxu0 %v2848
  %4682 = vmatprep.subr.bf16.mxu0 0
  %4683 = vmatpush1.bf16.msra.mxu0 %v2849
  %4684 = vmatprep.subr.bf16.mxu0 0
  %4685 = vmatpush1.bf16.msra.mxu0 %v2850
  %4686 = vmatprep.subr.bf16.mxu0 0
  %4687 = vmatpush1.bf16.msra.mxu0 %v2851
  %4688 = vmatprep.subr.bf16.mxu0 0
  %4689 = vmatpush1.bf16.msra.mxu0 %v2852
  %4690 = vmatprep.subr.bf16.mxu0 0
  %4691 = vmatpush1.bf16.msra.mxu0 %v2853
  %4692 = vmatprep.subr.bf16.mxu0 0
  %4693 = vmatpush1.bf16.msra.mxu0 %v2854
  %4694 = vmatprep.subr.bf16.mxu0 0
  %4695 = vmatpush1.bf16.msra.mxu0 %v2855
  %4696 = vmatprep.subr.bf16.mxu0 0
  %4697 = vmatpush1.bf16.msra.mxu0 %v2856
  %4698 = vmatprep.subr.bf16.mxu0 0
  %4699 = vmatpush1.bf16.msra.mxu0 %v2857
  %4700 = vmatprep.mubr.bf16.mxu0 %v4653
  %4701 = vmatmul.mubr.bf16.gmra.mrb[0].mxu0 %v4652
  %v4702 = vpop.f32.mrb[0].mxu0
  %v4703 = vadd.f32 0.0, %v4702
  %v4704 = vpop.f32.mrb[0].mxu0
  %v4705 = vpop.f32.mrb[0].mxu0
  %v4706 = vadd.f32 0.0, %v4705
  %v4707 = vpop.f32.mrb[0].mxu0
  %4708 = vmatprep.mubr.bf16.mxu0 %v4655
  %4709 = vmatmul.mubr.bf16.gmra.mrb[0].mxu0 %v4654
  %v4710 = vpop.f32.mrb[0].mxu0
  %v4711 = vadd.f32 0.0, %v4710
  %v4712 = vpop.f32.mrb[0].mxu0
  %v4713 = vpop.f32.mrb[0].mxu0
  %v4714 = vadd.f32 0.0, %v4713
  %v4715 = vpop.f32.mrb[0].mxu0
  %4716 = vmatprep.mubr.bf16.mxu0 %v4657
  %4717 = vmatmul.mubr.bf16.gmra.mrb[0].mxu0 %v4656
  %v4718 = vpop.f32.mrb[0].mxu0
  %v4719 = vadd.f32 0.0, %v4718
  %v4720 = vpop.f32.mrb[0].mxu0
  %v4721 = vpop.f32.mrb[0].mxu0
  %v4722 = vadd.f32 0.0, %v4721
  %v4723 = vpop.f32.mrb[0].mxu0
  %4724 = vmatprep.mubr.bf16.mxu0 %v4659
  %4725 = vmatmul.mubr.bf16.gmra.mrb[0].mxu0 %v4658
  %v4726 = vpop.f32.mrb[0].mxu0
  %v4727 = vadd.f32 0.0, %v4726
  %v4728 = vpop.f32.mrb[0].mxu0
  %v4729 = vpop.f32.mrb[0].mxu0
  %v4730 = vadd.f32 0.0, %v4729
  %v4731 = vpop.f32.mrb[0].mxu0
  %4732 = vdwg.mxu0
  %s4733 = scalar_lea.vmem %s3, 112
  %v4734 = vld [vmem:[%s4733] sm:$0xff]
  %v4735 = vld [vmem:[%s4733 + $0x8] sm:$0xff]
  %v4737 = vsel %vm3090, %v4703, 0
  %v4740 = vsel %vm3090, %v4706, 0
  %v4743 = vsel %vm3090, %v4711, 0
  %v4746 = vsel %vm3090, %v4714, 0
  %v4749 = vsel %vm3090, %v4719, 0
  %v4752 = vsel %vm3090, %v4722, 0
  %v4755 = vsel %vm3090, %v4727, 0
  %v4758 = vsel %vm3090, %v4730, 0
  %4760 = vmatprep.subr.mxu0 0.0
  %4761 = vmatpush1.msra.mxu0 %v4734
  %4762 = vmatprep.subr.mxu0 0.0
  %4763 = vmatpush1.msra.mxu0 %v4735
  %4764 = vmatprep.subr.mxu0 0.0
  %4765 = vmatpush1.msra.mxu0 0.0
  %4766 = vmatprep.subr.mxu0 0.0
  %4767 = vmatpush1.msra.mxu0 0.0
  %4768 = vmatprep.subr.mxu0 0.0
  %4769 = vmatpush1.msra.mxu0 0.0
  %4770 = vmatprep.subr.mxu0 0.0
  %4771 = vmatpush1.msra.mxu0 0.0
  %4772 = vmatprep.subr.mxu0 0.0
  %4773 = vmatpush1.msra.mxu0 0.0
  %4774 = vmatprep.subr.mxu0 0.0
  %4775 = vmatpush1.msra.mxu0 0.0
  %4776 = vmatprep.subr.mxu0 0.0
  %4777 = vmatpush1.msra.mxu0 0.0
  %4778 = vmatprep.subr.mxu0 0.0
  %4779 = vmatpush1.msra.mxu0 0.0
  %4780 = vmatprep.subr.mxu0 0.0
  %4781 = vmatpush1.msra.mxu0 0.0
  %4782 = vmatprep.subr.mxu0 0.0
  %4783 = vmatpush1.msra.mxu0 0.0
  %4784 = vmatprep.subr.mxu0 0.0
  %4785 = vmatpush1.msra.mxu0 0.0
  %4786 = vmatprep.subr.mxu0 0.0
  %4787 = vmatpush1.msra.mxu0 0.0
  %4788 = vmatprep.subr.mxu0 0.0
  %4789 = vmatpush1.msra.mxu0 0.0
  %4790 = vmatprep.subr.mxu0 0.0
  %4791 = vmatpush1.msra.mxu0 0.0
  %4792 = vmatprep.subr.mxu0 0.0
  %4793 = vmatpush1.msra.mxu0 0.0
  %4794 = vmatprep.subr.mxu0 0.0
  %4795 = vmatpush1.msra.mxu0 0.0
  %4796 = vmatprep.subr.mxu0 0.0
  %4797 = vmatpush1.msra.mxu0 0.0
  %4798 = vmatprep.subr.mxu0 0.0
  %4799 = vmatpush1.msra.mxu0 0.0
  %4800 = vmatprep.subr.mxu0 0.0
  %4801 = vmatpush1.msra.mxu0 0.0
  %4802 = vmatprep.subr.mxu0 0.0
  %4803 = vmatpush1.msra.mxu0 0.0
  %4804 = vmatprep.subr.mxu0 0.0
  %4805 = vmatpush1.msra.mxu0 0.0
  %4806 = vmatprep.subr.mxu0 0.0
  %4807 = vmatpush1.msra.mxu0 0.0
  %4808 = vmatprep.subr.mxu0 0.0
  %4809 = vmatpush1.msra.mxu0 0.0
  %4810 = vmatprep.subr.mxu0 0.0
  %4811 = vmatpush1.msra.mxu0 0.0
  %4812 = vmatprep.subr.mxu0 0.0
  %4813 = vmatpush1.msra.mxu0 0.0
  %4814 = vmatprep.subr.mxu0 0.0
  %4815 = vmatpush1.msra.mxu0 0.0
  %4816 = vmatprep.subr.mxu0 0.0
  %4817 = vmatpush1.msra.mxu0 0.0
  %4818 = vmatprep.subr.mxu0 0.0
  %4819 = vmatpush1.msra.mxu0 0.0
  %4820 = vmatprep.subr.mxu0 0.0
  %4821 = vmatpush1.msra.mxu0 0.0
  %4822 = vmatprep.subr.mxu0 0.0
  %4823 = vmatpush1.msra.mxu0 0.0
  %4824 = vmatprep.mubr.f32.mxu0 0.0
  %4825 = vmatmul.mubr.f32.gmra.mrb[0].mxu0 %v4737
  %v4826 = vpop.f32.mrb[0].mxu0
  %v4827 = vadd.f32 0.0, %v4826
  %v4828 = vpop.f32.mrb[0].mxu0
  %4829 = vmatprep.mubr.f32.mxu0 0.0
  %4830 = vmatmul.mubr.f32.gmra.mrb[0].mxu0 %v4740
  %v4831 = vpop.f32.mrb[0].mxu0
  %v4832 = vadd.f32 0.0, %v4831
  %v4833 = vpop.f32.mrb[0].mxu0
  %4834 = vmatprep.mubr.f32.mxu0 0.0
  %4835 = vmatmul.mubr.f32.gmra.mrb[0].mxu0 %v4743
  %v4836 = vpop.f32.mrb[0].mxu0
  %v4837 = vadd.f32 0.0, %v4836
  %v4838 = vpop.f32.mrb[0].mxu0
  %4839 = vmatprep.mubr.f32.mxu0 0.0
  %4840 = vmatmul.mubr.f32.gmra.mrb[0].mxu0 %v4746
  %v4841 = vpop.f32.mrb[0].mxu0
  %v4842 = vadd.f32 0.0, %v4841
  %v4843 = vpop.f32.mrb[0].mxu0
  %4844 = vmatprep.mubr.f32.mxu0 0.0
  %4845 = vmatmul.mubr.f32.gmra.mrb[0].mxu0 %v4749
  %v4846 = vpop.f32.mrb[0].mxu0
  %v4847 = vadd.f32 0.0, %v4846
  %v4848 = vpop.f32.mrb[0].mxu0
  %4849 = vmatprep.mubr.f32.mxu0 0.0
  %4850 = vmatmul.mubr.f32.gmra.mrb[0].mxu0 %v4752
  %v4851 = vpop.f32.mrb[0].mxu0
  %v4852 = vadd.f32 0.0, %v4851
  %v4853 = vpop.f32.mrb[0].mxu0
  %4854 = vmatprep.mubr.f32.mxu0 0.0
  %4855 = vmatmul.mubr.f32.gmra.mrb[0].mxu0 %v4755
  %v4856 = vpop.f32.mrb[0].mxu0
  %v4857 = vadd.f32 0.0, %v4856
  %v4858 = vpop.f32.mrb[0].mxu0
  %4859 = vmatprep.mubr.f32.mxu0 0.0
  %4860 = vmatmul.mubr.f32.gmra.mrb[0].mxu0 %v4758
  %v4861 = vpop.f32.mrb[0].mxu0
  %v4862 = vadd.f32 0.0, %v4861
  %v4863 = vpop.f32.mrb[0].mxu0
  %4864 = vdwg.mxu0
  %v4865 = vadd.f32 %v4611, %v4827
  %v4866 = vadd.f32 %v4612, %v4832
  %v4867 = vadd.f32 %v4613, %v4837
  %v4868 = vadd.f32 %v4614, %v4842
  %v4869 = vadd.f32 %v4615, %v4847
  %v4870 = vadd.f32 %v4616, %v4852
  %v4871 = vadd.f32 %v4617, %v4857
  %v4872 = vadd.f32 %v4618, %v4862
  %s4873 = scalar_lea.vmem %s5, 512
  %v4874 = vld [vmem:[%s4873] sm:$0xff]
  %v4875 = vld [vmem:[%s4873 + $0x8] sm:$0xff]
  %v4876 = vld [vmem:[%s4873 + $0x10] sm:$0xff]
  %v4877 = vld [vmem:[%s4873 + $0x18] sm:$0xff]
  %v4878 = vld [vmem:[%s4873 + $0x20] sm:$0xff]
  %v4879 = vld [vmem:[%s4873 + $0x28] sm:$0xff]
  %v4880 = vld [vmem:[%s4873 + $0x30] sm:$0xff]
  %v4881 = vld [vmem:[%s4873 + $0x38] sm:$0xff]
  %v4890 = vunpack.c.l.b16 %v4874
  %v4891 = vunpack.c.h.b16 %v4874
  %v4892 = vunpack.c.l.b16 %v4875
  %v4893 = vunpack.c.h.b16 %v4875
  %v4894 = vunpack.c.l.b16 %v4876
  %v4895 = vunpack.c.h.b16 %v4876
  %v4896 = vunpack.c.l.b16 %v4877
  %v4897 = vunpack.c.h.b16 %v4877
  %v4898 = vunpack.c.l.b16 %v4878
  %v4899 = vunpack.c.h.b16 %v4878
  %v4900 = vunpack.c.l.b16 %v4879
  %v4901 = vunpack.c.h.b16 %v4879
  %v4902 = vunpack.c.l.b16 %v4880
  %v4903 = vunpack.c.h.b16 %v4880
  %v4904 = vunpack.c.l.b16 %v4881
  %v4905 = vunpack.c.h.b16 %v4881
  %v4906 = vpack.c.b16 %v4892, %v4890
  %v4907 = vpack.c.b16 %v4893, %v4891
  %v4908 = vpack.c.b16 %v4896, %v4894
  %v4909 = vpack.c.b16 %v4897, %v4895
  %v4910 = vpack.c.b16 %v4900, %v4898
  %v4911 = vpack.c.b16 %v4901, %v4899
  %v4912 = vpack.c.b16 %v4904, %v4902
  %v4913 = vpack.c.b16 %v4905, %v4903
  %4922 = vmatprep.subr.bf16.mxu0 0
  %4923 = vmatpush1.bf16.msra.mxu0 %v2842
  %4924 = vmatprep.subr.bf16.mxu0 0
  %4925 = vmatpush1.bf16.msra.mxu0 %v2843
  %4926 = vmatprep.subr.bf16.mxu0 0
  %4927 = vmatpush1.bf16.msra.mxu0 %v2844
  %4928 = vmatprep.subr.bf16.mxu0 0
  %4929 = vmatpush1.bf16.msra.mxu0 %v2845
  %4930 = vmatprep.subr.bf16.mxu0 0
  %4931 = vmatpush1.bf16.msra.mxu0 %v2846
  %4932 = vmatprep.subr.bf16.mxu0 0
  %4933 = vmatpush1.bf16.msra.mxu0 %v2847
  %4934 = vmatprep.subr.bf16.mxu0 0
  %4935 = vmatpush1.bf16.msra.mxu0 %v2848
  %4936 = vmatprep.subr.bf16.mxu0 0
  %4937 = vmatpush1.bf16.msra.mxu0 %v2849
  %4938 = vmatprep.subr.bf16.mxu0 0
  %4939 = vmatpush1.bf16.msra.mxu0 %v2850
  %4940 = vmatprep.subr.bf16.mxu0 0
  %4941 = vmatpush1.bf16.msra.mxu0 %v2851
  %4942 = vmatprep.subr.bf16.mxu0 0
  %4943 = vmatpush1.bf16.msra.mxu0 %v2852
  %4944 = vmatprep.subr.bf16.mxu0 0
  %4945 = vmatpush1.bf16.msra.mxu0 %v2853
  %4946 = vmatprep.subr.bf16.mxu0 0
  %4947 = vmatpush1.bf16.msra.mxu0 %v2854
  %4948 = vmatprep.subr.bf16.mxu0 0
  %4949 = vmatpush1.bf16.msra.mxu0 %v2855
  %4950 = vmatprep.subr.bf16.mxu0 0
  %4951 = vmatpush1.bf16.msra.mxu0 %v2856
  %4952 = vmatprep.subr.bf16.mxu0 0
  %4953 = vmatpush1.bf16.msra.mxu0 %v2857
  %4954 = vmatprep.mubr.bf16.mxu0 %v4907
  %4955 = vmatmul.mubr.bf16.gmra.mrb[0].mxu0 %v4906
  %v4956 = vpop.f32.mrb[0].mxu0
  %v4957 = vadd.f32 0.0, %v4956
  %v4958 = vpop.f32.mrb[0].mxu0
  %v4959 = vpop.f32.mrb[0].mxu0
  %v4960 = vadd.f32 0.0, %v4959
  %v4961 = vpop.f32.mrb[0].mxu0
  %4962 = vmatprep.mubr.bf16.mxu0 %v4909
  %4963 = vmatmul.mubr.bf16.gmra.mrb[0].mxu0 %v4908
  %v4964 = vpop.f32.mrb[0].mxu0
  %v4965 = vadd.f32 0.0, %v4964
  %v4966 = vpop.f32.mrb[0].mxu0
  %v4967 = vpop.f32.mrb[0].mxu0
  %v4968 = vadd.f32 0.0, %v4967
  %v4969 = vpop.f32.mrb[0].mxu0
  %4970 = vmatprep.mubr.bf16.mxu0 %v4911
  %4971 = vmatmul.mubr.bf16.gmra.mrb[0].mxu0 %v4910
  %v4972 = vpop.f32.mrb[0].mxu0
  %v4973 = vadd.f32 0.0, %v4972
  %v4974 = vpop.f32.mrb[0].mxu0
  %v4975 = vpop.f32.mrb[0].mxu0
  %v4976 = vadd.f32 0.0, %v4975
  %v4977 = vpop.f32.mrb[0].mxu0
  %4978 = vmatprep.mubr.bf16.mxu0 %v4913
  %4979 = vmatmul.mubr.bf16.gmra.mrb[0].mxu0 %v4912
  %v4980 = vpop.f32.mrb[0].mxu0
  %v4981 = vadd.f32 0.0, %v4980
  %v4982 = vpop.f32.mrb[0].mxu0
  %v4983 = vpop.f32.mrb[0].mxu0
  %v4984 = vadd.f32 0.0, %v4983
  %v4985 = vpop.f32.mrb[0].mxu0
  %4986 = vdwg.mxu0
  %s4987 = scalar_lea.vmem %s3, 128
  %v4988 = vld [vmem:[%s4987] sm:$0xff]
  %v4989 = vld [vmem:[%s4987 + $0x8] sm:$0xff]
  %v4991 = vsel %vm3090, %v4957, 0
  %v4994 = vsel %vm3090, %v4960, 0
  %v4997 = vsel %vm3090, %v4965, 0
  %v5000 = vsel %vm3090, %v4968, 0
  %v5003 = vsel %vm3090, %v4973, 0
  %v5006 = vsel %vm3090, %v4976, 0
  %v5009 = vsel %vm3090, %v4981, 0
  %v5012 = vsel %vm3090, %v4984, 0
  %5014 = vmatprep.subr.mxu0 0.0
  %5015 = vmatpush1.msra.mxu0 %v4988
  %5016 = vmatprep.subr.mxu0 0.0
  %5017 = vmatpush1.msra.mxu0 %v4989
  %5018 = vmatprep.subr.mxu0 0.0
  %5019 = vmatpush1.msra.mxu0 0.0
  %5020 = vmatprep.subr.mxu0 0.0
  %5021 = vmatpush1.msra.mxu0 0.0
  %5022 = vmatprep.subr.mxu0 0.0
  %5023 = vmatpush1.msra.mxu0 0.0
  %5024 = vmatprep.subr.mxu0 0.0
  %5025 = vmatpush1.msra.mxu0 0.0
  %5026 = vmatprep.subr.mxu0 0.0
  %5027 = vmatpush1.msra.mxu0 0.0
  %5028 = vmatprep.subr.mxu0 0.0
  %5029 = vmatpush1.msra.mxu0 0.0
  %5030 = vmatprep.subr.mxu0 0.0
  %5031 = vmatpush1.msra.mxu0 0.0
  %5032 = vmatprep.subr.mxu0 0.0
  %5033 = vmatpush1.msra.mxu0 0.0
  %5034 = vmatprep.subr.mxu0 0.0
  %5035 = vmatpush1.msra.mxu0 0.0
  %5036 = vmatprep.subr.mxu0 0.0
  %5037 = vmatpush1.msra.mxu0 0.0
  %5038 = vmatprep.subr.mxu0 0.0
  %5039 = vmatpush1.msra.mxu0 0.0
  %5040 = vmatprep.subr.mxu0 0.0
  %5041 = vmatpush1.msra.mxu0 0.0
  %5042 = vmatprep.subr.mxu0 0.0
  %5043 = vmatpush1.msra.mxu0 0.0
  %5044 = vmatprep.subr.mxu0 0.0
  %5045 = vmatpush1.msra.mxu0 0.0
  %5046 = vmatprep.subr.mxu0 0.0
  %5047 = vmatpush1.msra.mxu0 0.0
  %5048 = vmatprep.subr.mxu0 0.0
  %5049 = vmatpush1.msra.mxu0 0.0
  %5050 = vmatprep.subr.mxu0 0.0
  %5051 = vmatpush1.msra.mxu0 0.0
  %5052 = vmatprep.subr.mxu0 0.0
  %5053 = vmatpush1.msra.mxu0 0.0
  %5054 = vmatprep.subr.mxu0 0.0
  %5055 = vmatpush1.msra.mxu0 0.0
  %5056 = vmatprep.subr.mxu0 0.0
  %5057 = vmatpush1.msra.mxu0 0.0
  %5058 = vmatprep.subr.mxu0 0.0
  %5059 = vmatpush1.msra.mxu0 0.0
  %5060 = vmatprep.subr.mxu0 0.0
  %5061 = vmatpush1.msra.mxu0 0.0
  %5062 = vmatprep.subr.mxu0 0.0
  %5063 = vmatpush1.msra.mxu0 0.0
  %5064 = vmatprep.subr.mxu0 0.0
  %5065 = vmatpush1.msra.mxu0 0.0
  %5066 = vmatprep.subr.mxu0 0.0
  %5067 = vmatpush1.msra.mxu0 0.0
  %5068 = vmatprep.subr.mxu0 0.0
  %5069 = vmatpush1.msra.mxu0 0.0
  %5070 = vmatprep.subr.mxu0 0.0
  %5071 = vmatpush1.msra.mxu0 0.0
  %5072 = vmatprep.subr.mxu0 0.0
  %5073 = vmatpush1.msra.mxu0 0.0
  %5074 = vmatprep.subr.mxu0 0.0
  %5075 = vmatpush1.msra.mxu0 0.0
  %5076 = vmatprep.subr.mxu0 0.0
  %5077 = vmatpush1.msra.mxu0 0.0
  %5078 = vmatprep.mubr.f32.mxu0 0.0
  %5079 = vmatmul.mubr.f32.gmra.mrb[0].mxu0 %v4991
  %v5080 = vpop.f32.mrb[0].mxu0
  %v5081 = vadd.f32 0.0, %v5080
  %v5082 = vpop.f32.mrb[0].mxu0
  %5083 = vmatprep.mubr.f32.mxu0 0.0
  %5084 = vmatmul.mubr.f32.gmra.mrb[0].mxu0 %v4994
  %v5085 = vpop.f32.mrb[0].mxu0
  %v5086 = vadd.f32 0.0, %v5085
  %v5087 = vpop.f32.mrb[0].mxu0
  %5088 = vmatprep.mubr.f32.mxu0 0.0
  %5089 = vmatmul.mubr.f32.gmra.mrb[0].mxu0 %v4997
  %v5090 = vpop.f32.mrb[0].mxu0
  %v5091 = vadd.f32 0.0, %v5090
  %v5092 = vpop.f32.mrb[0].mxu0
  %5093 = vmatprep.mubr.f32.mxu0 0.0
  %5094 = vmatmul.mubr.f32.gmra.mrb[0].mxu0 %v5000
  %v5095 = vpop.f32.mrb[0].mxu0
  %v5096 = vadd.f32 0.0, %v5095
  %v5097 = vpop.f32.mrb[0].mxu0
  %5098 = vmatprep.mubr.f32.mxu0 0.0
  %5099 = vmatmul.mubr.f32.gmra.mrb[0].mxu0 %v5003
  %v5100 = vpop.f32.mrb[0].mxu0
  %v5101 = vadd.f32 0.0, %v5100
  %v5102 = vpop.f32.mrb[0].mxu0
  %5103 = vmatprep.mubr.f32.mxu0 0.0
  %5104 = vmatmul.mubr.f32.gmra.mrb[0].mxu0 %v5006
  %v5105 = vpop.f32.mrb[0].mxu0
  %v5106 = vadd.f32 0.0, %v5105
  %v5107 = vpop.f32.mrb[0].mxu0
  %5108 = vmatprep.mubr.f32.mxu0 0.0
  %5109 = vmatmul.mubr.f32.gmra.mrb[0].mxu0 %v5009
  %v5110 = vpop.f32.mrb[0].mxu0
  %v5111 = vadd.f32 0.0, %v5110
  %v5112 = vpop.f32.mrb[0].mxu0
  %5113 = vmatprep.mubr.f32.mxu0 0.0
  %5114 = vmatmul.mubr.f32.gmra.mrb[0].mxu0 %v5012
  %v5115 = vpop.f32.mrb[0].mxu0
  %v5116 = vadd.f32 0.0, %v5115
  %v5117 = vpop.f32.mrb[0].mxu0
  %5118 = vdwg.mxu0
  %v5119 = vadd.f32 %v4865, %v5081
  %v5120 = vadd.f32 %v4866, %v5086
  %v5121 = vadd.f32 %v4867, %v5091
  %v5122 = vadd.f32 %v4868, %v5096
  %v5123 = vadd.f32 %v4869, %v5101
  %v5124 = vadd.f32 %v4870, %v5106
  %v5125 = vadd.f32 %v4871, %v5111
  %v5126 = vadd.f32 %v4872, %v5116
  %v5127 = vld [vmem:[%s4] sm:$0x1]
  %v5129 = vlaneseq
  %v5130 = vshrl.u32 %v5129, 7
  %v5131 = vsub.s32 0, %v5130
  %v5132 = vrot.slane %v5127, %v5131
  %v5134 = vadd.f32 %v5119, %v5132
  %v5135 = vadd.f32 %v5120, %v5132
  %v5136 = vadd.f32 %v5121, %v5132
  %v5137 = vadd.f32 %v5122, %v5132
  %v5138 = vadd.f32 %v5123, %v5132
  %v5139 = vadd.f32 %v5124, %v5132
  %v5140 = vadd.f32 %v5125, %v5132
  %v5141 = vadd.f32 %v5126, %v5132
  %v5142 = vmax.f32 %v5134, 0.0
  %v5143 = vmax.f32 %v5135, 0.0
  %v5144 = vmax.f32 %v5136, 0.0
  %v5145 = vmax.f32 %v5137, 0.0
  %v5146 = vmax.f32 %v5138, 0.0
  %v5147 = vmax.f32 %v5139, 0.0
  %v5148 = vmax.f32 %v5140, 0.0
  %v5149 = vmax.f32 %v5141, 0.0
  %v5150 = vmul.f32 %v5142, %v5142
  %v5151 = vmul.f32 %v5143, %v5143
  %v5152 = vmul.f32 %v5144, %v5144
  %v5153 = vmul.f32 %v5145, %v5145
  %v5154 = vmul.f32 %v5146, %v5146
  %v5155 = vmul.f32 %v5147, %v5147
  %v5156 = vmul.f32 %v5148, %v5148
  %v5157 = vmul.f32 %v5149, %v5149
  %v5158 = vld [vmem:[%s6] sm:$0xff]
  %v5159 = vld [vmem:[%s6 + $0x8] sm:$0xf]
  %v5160 = vld [vmem:[%s7] sm:$0xff]
  %v5161 = vld [vmem:[%s7 + $0x8] sm:$0xf]
  %vm5162 = vcmask 261120
  %v5164 = vsel %vm5162, %v5160, 0
  %v5167 = vsel %vm5162, %v5161, 0
  %v5170 = vsel %vm5162, %v5150, 0
  %v5173 = vsel %vm5162, %v5151, 0
  %v5176 = vsel %vm5162, %v5152, 0
  %v5179 = vsel %vm5162, %v5153, 0
  %v5182 = vsel %vm5162, %v5154, 0
  %v5185 = vsel %vm5162, %v5155, 0
  %v5188 = vsel %vm5162, %v5156, 0
  %v5191 = vsel %vm5162, %v5157, 0
  %5193 = vmatprep.subr.mxu0 0.0
  %5194 = vmatpush1.xpose.msra.mxu0 %v5170
  %5195 = vmatprep.subr.mxu0 0.0
  %5196 = vmatpush1.xpose.msra.mxu0 %v5173
  %5197 = vmatprep.subr.mxu0 0.0
  %5198 = vmatpush1.xpose.msra.mxu0 %v5176
  %5199 = vmatprep.subr.mxu0 0.0
  %5200 = vmatpush1.xpose.msra.mxu0 %v5179
  %5201 = vmatprep.subr.mxu0 0.0
  %5202 = vmatpush1.xpose.msra.mxu0 %v5182
  %5203 = vmatprep.subr.mxu0 0.0
  %5204 = vmatpush1.xpose.msra.mxu0 %v5185
  %5205 = vmatprep.subr.mxu0 0.0
  %5206 = vmatpush1.xpose.msra.mxu0 %v5188
  %5207 = vmatprep.subr.mxu0 0.0
  %5208 = vmatpush1.xpose.msra.mxu0 %v5191
  %5209 = vmatprep.subr.mxu0 0.0
  %5210 = vmatpush1.xpose.msra.mxu0 0.0
  %5211 = vmatprep.subr.mxu0 0.0
  %5212 = vmatpush1.xpose.msra.mxu0 0.0
  %5213 = vmatprep.subr.mxu0 0.0
  %5214 = vmatpush1.xpose.msra.mxu0 0.0
  %5215 = vmatprep.subr.mxu0 0.0
  %5216 = vmatpush1.xpose.msra.mxu0 0.0
  %5217 = vmatprep.subr.mxu0 0.0
  %5218 = vmatpush1.xpose.msra.mxu0 0.0
  %5219 = vmatprep.subr.mxu0 0.0
  %5220 = vmatpush1.xpose.msra.mxu0 0.0
  %5221 = vmatprep.subr.mxu0 0.0
  %5222 = vmatpush1.xpose.msra.mxu0 0.0
  %5223 = vmatprep.subr.mxu0 0.0
  %5224 = vmatpush1.xpose.msra.mxu0 0.0
  %5225 = vmatprep.subr.mxu0 0.0
  %5226 = vmatpush1.xpose.msra.mxu0 0.0
  %5227 = vmatprep.subr.mxu0 0.0
  %5228 = vmatpush1.xpose.msra.mxu0 0.0
  %5229 = vmatprep.subr.mxu0 0.0
  %5230 = vmatpush1.xpose.msra.mxu0 0.0
  %5231 = vmatprep.subr.mxu0 0.0
  %5232 = vmatpush1.xpose.msra.mxu0 0.0
  %5233 = vmatprep.subr.mxu0 0.0
  %5234 = vmatpush1.xpose.msra.mxu0 0.0
  %5235 = vmatprep.subr.mxu0 0.0
  %5236 = vmatpush1.xpose.msra.mxu0 0.0
  %5237 = vmatprep.subr.mxu0 0.0
  %5238 = vmatpush1.xpose.msra.mxu0 0.0
  %5239 = vmatprep.subr.mxu0 0.0
  %5240 = vmatpush1.xpose.msra.mxu0 0.0
  %5241 = vmatprep.subr.mxu0 0.0
  %5242 = vmatpush1.xpose.msra.mxu0 0.0
  %5243 = vmatprep.subr.mxu0 0.0
  %5244 = vmatpush1.xpose.msra.mxu0 0.0
  %5245 = vmatprep.subr.mxu0 0.0
  %5246 = vmatpush1.xpose.msra.mxu0 0.0
  %5247 = vmatprep.subr.mxu0 0.0
  %5248 = vmatpush1.xpose.msra.mxu0 0.0
  %5249 = vmatprep.subr.mxu0 0.0
  %5250 = vmatpush1.xpose.msra.mxu0 0.0
  %5251 = vmatprep.subr.mxu0 0.0
  %5252 = vmatpush1.xpose.msra.mxu0 0.0
  %5253 = vmatprep.subr.mxu0 0.0
  %5254 = vmatpush1.xpose.msra.mxu0 0.0
  %5255 = vmatprep.subr.mxu0 0.0
  %5256 = vmatpush1.xpose.msra.mxu0 0.0
  %5257 = vmatprep.mubr.f32.mxu0 0.0
  %5258 = vmatmul.mubr.f32.gmra.mrb[0].mxu0 %v5164
  %v5259 = vpop.f32.mrb[0].mxu0
  %v5260 = vadd.f32 0.0, %v5259
  %v5261 = vpop.f32.mrb[0].mxu0
  %5262 = vmatprep.mubr.f32.mxu0 0.0
  %5263 = vmatmul.mubr.f32.gmra.mrb[0].mxu0 %v5167
  %v5264 = vpop.f32.mrb[0].mxu0
  %v5265 = vadd.f32 0.0, %v5264
  %v5266 = vpop.f32.mrb[0].mxu0
  %5267 = vdwg.mxu0
  %v5269 = vsel %vm5162, %v5158, 0
  %v5272 = vsel %vm5162, %v5159, 0
  %v5275 = vsel %vm5162, %v5142, 0
  %v5278 = vsel %vm5162, %v5143, 0
  %v5281 = vsel %vm5162, %v5144, 0
  %v5284 = vsel %vm5162, %v5145, 0
  %v5287 = vsel %vm5162, %v5146, 0
  %v5290 = vsel %vm5162, %v5147, 0
  %v5293 = vsel %vm5162, %v5148, 0
  %v5296 = vsel %vm5162, %v5149, 0
  %5298 = vmatprep.subr.mxu0 0.0
  %5299 = vmatpush1.xpose.msra.mxu0 %v5275
  %5300 = vmatprep.subr.mxu0 0.0
  %5301 = vmatpush1.xpose.msra.mxu0 %v5278
  %5302 = vmatprep.subr.mxu0 0.0
  %5303 = vmatpush1.xpose.msra.mxu0 %v5281
  %5304 = vmatprep.subr.mxu0 0.0
  %5305 = vmatpush1.xpose.msra.mxu0 %v5284
  %5306 = vmatprep.subr.mxu0 0.0
  %5307 = vmatpush1.xpose.msra.mxu0 %v5287
  %5308 = vmatprep.subr.mxu0 0.0
  %5309 = vmatpush1.xpose.msra.mxu0 %v5290
  %5310 = vmatprep.subr.mxu0 0.0
  %5311 = vmatpush1.xpose.msra.mxu0 %v5293
  %5312 = vmatprep.subr.mxu0 0.0
  %5313 = vmatpush1.xpose.msra.mxu0 %v5296
  %5314 = vmatprep.subr.mxu0 0.0
  %5315 = vmatpush1.xpose.msra.mxu0 0.0
  %5316 = vmatprep.subr.mxu0 0.0
  %5317 = vmatpush1.xpose.msra.mxu0 0.0
  %5318 = vmatprep.subr.mxu0 0.0
  %5319 = vmatpush1.xpose.msra.mxu0 0.0
  %5320 = vmatprep.subr.mxu0 0.0
  %5321 = vmatpush1.xpose.msra.mxu0 0.0
  %5322 = vmatprep.subr.mxu0 0.0
  %5323 = vmatpush1.xpose.msra.mxu0 0.0
  %5324 = vmatprep.subr.mxu0 0.0
  %5325 = vmatpush1.xpose.msra.mxu0 0.0
  %5326 = vmatprep.subr.mxu0 0.0
  %5327 = vmatpush1.xpose.msra.mxu0 0.0
  %5328 = vmatprep.subr.mxu0 0.0
  %5329 = vmatpush1.xpose.msra.mxu0 0.0
  %5330 = vmatprep.subr.mxu0 0.0
  %5331 = vmatpush1.xpose.msra.mxu0 0.0
  %5332 = vmatprep.subr.mxu0 0.0
  %5333 = vmatpush1.xpose.msra.mxu0 0.0
  %5334 = vmatprep.subr.mxu0 0.0
  %5335 = vmatpush1.xpose.msra.mxu0 0.0
  %5336 = vmatprep.subr.mxu0 0.0
  %5337 = vmatpush1.xpose.msra.mxu0 0.0
  %5338 = vmatprep.subr.mxu0 0.0
  %5339 = vmatpush1.xpose.msra.mxu0 0.0
  %5340 = vmatprep.subr.mxu0 0.0
  %5341 = vmatpush1.xpose.msra.mxu0 0.0
  %5342 = vmatprep.subr.mxu0 0.0
  %5343 = vmatpush1.xpose.msra.mxu0 0.0
  %5344 = vmatprep.subr.mxu0 0.0
  %5345 = vmatpush1.xpose.msra.mxu0 0.0
  %5346 = vmatprep.subr.mxu0 0.0
  %5347 = vmatpush1.xpose.msra.mxu0 0.0
  %5348 = vmatprep.subr.mxu0 0.0
  %5349 = vmatpush1.xpose.msra.mxu0 0.0
  %5350 = vmatprep.subr.mxu0 0.0
  %5351 = vmatpush1.xpose.msra.mxu0 0.0
  %5352 = vmatprep.subr.mxu0 0.0
  %5353 = vmatpush1.xpose.msra.mxu0 0.0
  %5354 = vmatprep.subr.mxu0 0.0
  %5355 = vmatpush1.xpose.msra.mxu0 0.0
  %5356 = vmatprep.subr.mxu0 0.0
  %5357 = vmatpush1.xpose.msra.mxu0 0.0
  %5358 = vmatprep.subr.mxu0 0.0
  %5359 = vmatpush1.xpose.msra.mxu0 0.0
  %5360 = vmatprep.subr.mxu0 0.0
  %5361 = vmatpush1.xpose.msra.mxu0 0.0
  %5362 = vmatprep.mubr.f32.mxu0 0.0
  %5363 = vmatmul.mubr.f32.gmra.mrb[0].mxu0 %v5269
  %v5364 = vpop.f32.mrb[0].mxu0
  %v5365 = vadd.f32 %v5260, %v5364
  %v5366 = vpop.f32.mrb[0].mxu0
  %5367 = vmatprep.mubr.f32.mxu0 0.0
  %5368 = vmatmul.mubr.f32.gmra.mrb[0].mxu0 %v5272
  %v5369 = vpop.f32.mrb[0].mxu0
  %v5370 = vadd.f32 %v5265, %v5369
  %v5371 = vpop.f32.mrb[0].mxu0
  %5372 = vdwg.mxu0
  %v5373 = vld [vmem:[%s8] sm:$0xff]
  %v5374 = vld [vmem:[%s8 + $0x8] sm:$0xf]
  %5376 = vset.pattern.permute.xlu0 0
  %5377 = vperm.xlu0 %5376, %v5373
  %v5378 = vpop.permute.xlu0 %5377
  %5381 = vset.pattern.permute.xlu0 0
  %5382 = vperm.xlu0 %5381, %v5374
  %v5383 = vpop.permute.xlu0 %5382
  %v5385 = vadd.f32 %v5365, %v5378
  %v5386 = vadd.f32 %v5370, %v5383
  %v5387 = vmax.f32 %v5385, 0.0
  %v5388 = vmax.f32 %v5386, 0.0
  %v5389 = vrsqrt.pop %v5387
  %v5390 = vmul.f32 %v5387, %v5389
  %vm5391 = vcmp.eq.f32.partialorder %v5387, inf
  %v5392 = vsel %vm5391, %v5387, %v5390
  %vm5393 = vcmp.eq.f32.partialorder %v5387, 0.0
  %v5394 = vand.u32 %v5387, 2147483648
  %v5395 = vsel %vm5393, %v5394, %v5392
  %v5396 = vrsqrt.pop %v5388
  %v5397 = vmul.f32 %v5388, %v5396
  %vm5398 = vcmp.eq.f32.partialorder %v5388, inf
  %v5399 = vsel %vm5398, %v5388, %v5397
  %vm5400 = vcmp.eq.f32.partialorder %v5388, 0.0
  %v5401 = vand.u32 %v5388, 2147483648
  %v5402 = vsel %vm5400, %v5401, %v5399
  %vm5403 = vcmask 523264
  %v5404 = vsel %vm5403, %v5395, inf
  %5405 = vmin.xlane.f32.xlu0 %v5404
  %v5406 = vpop.xlane.xlu0 %5405
  %vm5407 = vcmask 519168
  %v5408 = vsel %vm5407, %v5402, inf
  %5409 = vmin.xlane.f32.xlu0 %v5408
  %v5410 = vpop.xlane.xlu0 %5409
  %v5411 = vadd.f32 %v5406, 1.0
  %v5412 = vadd.f32 %v5410, 1.0
  %v5413 = vlog2.pop %v5411
  %v5414 = vmul.f32 %v5413, 0.6931472
  %v5415 = vlog2.pop %v5412
  %v5416 = vmul.f32 %v5415, 0.6931472
  %v5417 = vadd.f32 %v5406, 0.0001
  %v5418 = vadd.f32 %v5410, 0.0001
  %v5419 = vlog2.pop %v5417
  %v5420 = vmul.f32 %v5419, 0.6931472
  %v5421 = vlog2.pop %v5418
  %v5422 = vmul.f32 %v5421, 0.6931472
  %v5423 = vsub.f32 %v5414, %v5420
  %v5424 = vsub.f32 %v5416, %v5422
  %v5425 = vld [vmem:[%s9] sm:$0xff]
  %v5426 = vld [vmem:[%s9 + $0x8] sm:$0xf]
  %v5427 = vmul.f32 %v5423, %v5425
  %v5428 = vmul.f32 %v5424, %v5426
  %v5429 = vsel %vm155, %v5427, 0.0
  %vm5430 = vcmask 44032
  %v5431 = vsel %vm5430, %v5428, 0.0
  %v5432 = vadd.f32 %v5429, %v5431
  %v5433 = vrot.slane %v5432, 4
  %v5434 = vadd.f32 %v5432, %v5433
  %v5435 = vrot.slane %v5434, 2
  %v5436 = vadd.f32 %v5434, %v5435
  %v5437 = vrot.slane %v5436, 1
  %v5438 = vadd.f32 %v5436, %v5437
  %vm5439 = vcmask 40960
  %5440 = vst.msk [vmem:[%s12] sm:$0x1] %vm5439, %v5438
  %v5441 = vlaneseq
  %v5442 = vshrl.u32 %v5441, 7
  %v5443 = vadd.s32 %v5442, 8
  %v5444 = vlaneseq
  %v5445 = vand.u32 %v5444, 127
  %vm5446 = vcmp.eq.s32.totalorder %v5442, %v5445
  %vm5447 = vcmp.eq.s32.totalorder %v5443, %v5445
  %v5448 = vsel %vm5446, 1, 0
  %v5449 = vsel %vm5447, 1, 0
  %v5450 = vcvt.s32.f32 %v5448
  %v5451 = vcvt.s32.f32 %v5449
  %v5452 = vmul.f32 %v5406, %v5450
  %v5453 = vmul.f32 %v5410, %v5451
  %vm5454 = vcmask 97280
  %v5455 = vsel %vm5454, %v5452, 0.0
  %vm5456 = vcmask 93184
  %v5457 = vsel %vm5456, %v5453, 0.0
  %v5458 = vadd.f32 %v5455, %v5457
  %v5459 = vrot.slane %v5458, 4
  %v5460 = vadd.f32 %v5458, %v5459
  %v5461 = vrot.slane %v5460, 2
  %v5462 = vadd.f32 %v5460, %v5461
  %v5463 = vrot.slane %v5462, 1
  %v5464 = vadd.f32 %v5462, %v5463
  %vm5465 = vcmask 90112
  %5466 = vst.msk [vmem:[%s11] sm:$0x1] %vm5465, %v5464
  %v5467 = vadd.f32 %v5395, 1.0
  %v5468 = vadd.f32 %v5402, 1.0
  %v5469 = vlog2.pop %v5467
  %v5470 = vmul.f32 %v5469, 0.6931472
  %v5471 = vlog2.pop %v5468
  %v5472 = vmul.f32 %v5471, 0.6931472
  %v5473 = vadd.f32 %v5395, 0.0001
  %v5474 = vadd.f32 %v5402, 0.0001
  %v5475 = vlog2.pop %v5473
  %v5476 = vmul.f32 %v5475, 0.6931472
  %v5477 = vlog2.pop %v5474
  %v5478 = vmul.f32 %v5477, 0.6931472
  %v5479 = vsub.f32 %v5470, %v5476
  %v5480 = vsub.f32 %v5472, %v5478
  %v5481 = vpack.c.bf16 %v5480, %v5479
  %v5482 = vld [vmem:[%s10] sm:$0xff]
  %v5483 = vld [vmem:[%s10 + $0x8] sm:$0xff]
  %v5484 = vld [vmem:[%s10 + $0x10] sm:$0xff]
  %v5485 = vld [vmem:[%s10 + $0x18] sm:$0xff]
  %v5486 = vld [vmem:[%s10 + $0x20] sm:$0xff]
  %v5487 = vld [vmem:[%s10 + $0x28] sm:$0xff]
  %v5488 = vld [vmem:[%s10 + $0x30] sm:$0xff]
  %v5489 = vld [vmem:[%s10 + $0x38] sm:$0xff]
  %v5498 = vunpack.c.l.b16 %v5482
  %v5499 = vunpack.c.h.b16 %v5482
  %v5500 = vunpack.c.l.b16 %v5483
  %v5501 = vunpack.c.h.b16 %v5483
  %v5502 = vunpack.c.l.b16 %v5484
  %v5503 = vunpack.c.h.b16 %v5484
  %v5504 = vunpack.c.l.b16 %v5485
  %v5505 = vunpack.c.h.b16 %v5485
  %v5506 = vunpack.c.l.b16 %v5486
  %v5507 = vunpack.c.h.b16 %v5486
  %v5508 = vunpack.c.l.b16 %v5487
  %v5509 = vunpack.c.h.b16 %v5487
  %v5510 = vunpack.c.l.b16 %v5488
  %v5511 = vunpack.c.h.b16 %v5488
  %v5512 = vunpack.c.l.b16 %v5489
  %v5513 = vunpack.c.h.b16 %v5489
  %v5514 = vpack.c.b16 %v5500, %v5498
  %v5515 = vpack.c.b16 %v5501, %v5499
  %v5516 = vpack.c.b16 %v5504, %v5502
  %v5517 = vpack.c.b16 %v5505, %v5503
  %v5518 = vpack.c.b16 %v5508, %v5506
  %v5519 = vpack.c.b16 %v5509, %v5507
  %v5520 = vpack.c.b16 %v5512, %v5510
  %v5521 = vpack.c.b16 %v5513, %v5511
  %v5531 = vsel %vm5403, %v5481, 0
  %5533 = vmatprep.subr.bf16.mxu0 %v5515
  %5534 = vmatpush1.bf16.msra.mxu0 %v5514
  %5535 = vmatprep.subr.bf16.mxu0 %v5517
  %5536 = vmatpush1.bf16.msra.mxu0 %v5516
  %5537 = vmatprep.subr.bf16.mxu0 %v5519
  %5538 = vmatpush1.bf16.msra.mxu0 %v5518
  %5539 = vmatprep.subr.bf16.mxu0 %v5521
  %5540 = vmatpush1.bf16.msra.mxu0 %v5520
  %5541 = vmatprep.subr.bf16.mxu0 0
  %5542 = vmatpush1.bf16.msra.mxu0 0
  %5543 = vmatprep.subr.bf16.mxu0 0
  %5544 = vmatpush1.bf16.msra.mxu0 0
  %5545 = vmatprep.subr.bf16.mxu0 0
  %5546 = vmatpush1.bf16.msra.mxu0 0
  %5547 = vmatprep.subr.bf16.mxu0 0
  %5548 = vmatpush1.bf16.msra.mxu0 0
  %5549 = vmatprep.subr.bf16.mxu0 0
  %5550 = vmatpush1.bf16.msra.mxu0 0
  %5551 = vmatprep.subr.bf16.mxu0 0
  %5552 = vmatpush1.bf16.msra.mxu0 0
  %5553 = vmatprep.subr.bf16.mxu0 0
  %5554 = vmatpush1.bf16.msra.mxu0 0
  %5555 = vmatprep.subr.bf16.mxu0 0
  %5556 = vmatpush1.bf16.msra.mxu0 0
  %5557 = vmatprep.subr.bf16.mxu0 0
  %5558 = vmatpush1.bf16.msra.mxu0 0
  %5559 = vmatprep.subr.bf16.mxu0 0
  %5560 = vmatpush1.bf16.msra.mxu0 0
  %5561 = vmatprep.subr.bf16.mxu0 0
  %5562 = vmatpush1.bf16.msra.mxu0 0
  %5563 = vmatprep.subr.bf16.mxu0 0
  %5564 = vmatpush1.bf16.msra.mxu0 0
  %5565 = vmatprep.mubr.bf16.mxu0 0
  %5566 = vmatmul.mubr.bf16.gmra.mrb[0].mxu0 %v5531
  %v5567 = vpop.f32.mrb[0].mxu0
  %v5568 = vadd.f32 0.0, %v5567
  %v5569 = vpop.f32.mrb[0].mxu0
  %v5570 = vadd.f32 0.0, %v5569
  %v5571 = vpop.f32.mrb[0].mxu0
  %v5572 = vadd.f32 0.0, %v5571
  %v5573 = vpop.f32.mrb[0].mxu0
  %v5574 = vadd.f32 0.0, %v5573
  %5575 = vdwg.mxu0
  %5576 = vst [vmem:[%s13] sm:$0xff] %v5568
  %5577 = vst [vmem:[%s13 + $0x8] sm:$0xff] %v5570
  %5578 = vst [vmem:[%s13 + $0x10] sm:$0xf] %v5572
  %5579 = vst [vmem:[%s13 + $0x18] sm:$0xf] %v5574
  // Predicated region
  $region46: #{ppnet_forward.1} parent=0 // pred_check
    _
  $region47: #{ppnet_forward.1} parent=0 // pred_check_branch
    %5581 = sbr.rel (0) target = $region49
  $region48: #{ppnet_forward.1} parent=0 // pred_region
    _
  $region49: #{ppnet_forward.1} parent=0 // pred_fallthru
    _
  // Predicated region
  $region50: #{ppnet_forward.1} parent=0 // pred_check
    _
  $region51: #{ppnet_forward.1} parent=0 // pred_check_branch
    %5583 = sbr.rel (0) target = $region53
  $region52: #{ppnet_forward.1} parent=0 // pred_region
    _
  $region53: #{ppnet_forward.1} parent=0 // pred_fallthru
    _
  // Predicated region
  $region54: #{ppnet_forward.1} parent=0 // pred_check
    _
  $region55: #{ppnet_forward.1} parent=0 // pred_check_branch
    %5585 = sbr.rel (0) target = $region57
  $region56: #{ppnet_forward.1} parent=0 // pred_region
    _
  $region57: #{ppnet_forward.1} parent=0 // pred_fallthru
    _
  // Predicated region
  $region58: #{ppnet_forward.1} parent=0 // pred_check
    _
  $region59: #{ppnet_forward.1} parent=0 // pred_check_branch
    %5587 = sbr.rel (0) target = $region61
  $region60: #{ppnet_forward.1} parent=0 // pred_region
    _
  $region61: #{ppnet_forward.1} parent=0 // pred_fallthru
    _
  // Predicated region
  $region62: #{ppnet_forward.1} parent=0 // pred_check
    _
  $region63: #{ppnet_forward.1} parent=0 // pred_check_branch
    %5589 = sbr.rel (0) target = $region65
  $region64: #{ppnet_forward.1} parent=0 // pred_region
    _
  $region65: #{ppnet_forward.1} parent=0 // pred_fallthru
    _
  // Predicated region
  $region66: #{ppnet_forward.1} parent=0 // pred_check
    _
  $region67: #{ppnet_forward.1} parent=0 // pred_check_branch
    %5591 = sbr.rel (0) target = $region69
  $region68: #{ppnet_forward.1} parent=0 // pred_region
    _
  $region69: #{ppnet_forward.1} parent=0 // pred_fallthru
    _

</llo_original>
